<compile_context>
chip_gen: v6e
topology: v6e:2x2x1
jax: 0.10.0
libtpu: 0.0.40
codegen_flags: <defaults>
</compile_context>

<pallas_src>
import functools

import jax
import jax.numpy as jnp
from jax.experimental import pallas as pl
from jax.experimental.pallas import tpu as pltpu


# ------------------------------ fused kernel ---------------------------------

def _fused_forward_kernel(*refs, num_conv, num_dense, batch, conv_dims):
    """Whole forward pass in one VMEM-resident kernel.

    refs layout:
      inputs : a0, (G_l, bias_row_l) x num_conv, (dw_i, db_i) x num_dense,
               head_w, head_b, head_scale
      outputs: out (batch, P)
      scratch: zero-padded activation buffers for conv layers 1..num_conv-1
    conv_dims[l] = (Hp_in, Ho, Wo, Cout) for conv layer l (static Python ints).
    """
    idx = 0
    a0_ref = refs[idx]; idx += 1
    conv_refs = []
    for _ in range(num_conv):
        conv_refs.append((refs[idx], refs[idx + 1])); idx += 2
    dense_refs = []
    for _ in range(num_dense):
        dense_refs.append((refs[idx], refs[idx + 1])); idx += 2
    hw_ref, hb_ref, hsc_ref = refs[idx], refs[idx + 1], refs[idx + 2]; idx += 3
    out_ref = refs[idx]; idx += 1
    pad_scratches = refs[idx:idx + num_conv - 1]

    # Zero the padded scratches once; their zero border implements 'same' conv
    # padding for every subsequent layer (interiors are overwritten per image).
    for s in pad_scratches:
        s[...] = jnp.zeros(s.shape, s.dtype)

    for n in range(batch):                     # static unroll, batch is tiny
        src = a0_ref
        pooled = None
        # ---------------- conv encoder ----------------
        for l in range(num_conv):
            hp_in, ho, wo, cout = conv_dims[l]
            w_int = wo * cout
            g_ref, brow_ref = conv_refs[l]
            base = n * hp_in
            # 4 strided row-slabs of this image's padded block: rows {2*r + s}.
            slabs = [src[pl.ds(base + s, ho, stride=2), :] for s in range(4)]
            brow = brow_ref[...]
            pooled = None
            for pi in range(2):                # pool-window row position
                for pj in range(2):            # pool-window col position
                    acc = jnp.zeros((ho, w_int), jnp.float32)
                    for di in range(3):        # conv kernel row taps
                        acc = acc + jnp.dot(
                            slabs[pi + di], g_ref[di * 2 + pj],
                            preferred_element_type=jnp.float32)
                    y = jnp.maximum(acc + brow, 0.0)       # bias + ReLU
                    pooled = y if pooled is None else jnp.maximum(pooled, y)
            if l + 1 < num_conv:
                hp_next = ho + 2
                dst = pad_scratches[l]
                dst[n * hp_next + 1:n * hp_next + 1 + ho,
                    cout:cout + w_int] = pooled
                src = dst

        # ---------------- dense stack ----------------
        # pooled: (H_last, W_last*C_last); each row is one K-block of the
        # flattened (h, w, c) feature vector -> accumulate dense-0 block-wise.
        h_last = conv_dims[-1][1]
        blk = conv_dims[-1][2] * conv_dims[-1][3]
        dw0_ref, db0_ref = dense_refs[0]
        h = db0_ref[...]
        for r in range(h_last):
            h = h + jnp.dot(pooled[r:r + 1, :],
                            dw0_ref[r * blk:(r + 1) * blk, :],
                            preferred_element_type=jnp.float32)
        h = jnp.maximum(h, 0.0)
        for dw_ref, db_ref in dense_refs[1:]:
            h = jnp.maximum(
                jnp.dot(h, dw_ref[...], preferred_element_type=jnp.float32)
                + db_ref[...], 0.0)

        # ---------------- heads (rect + circle, concatenated) ----------------
        z = jnp.dot(h, hw_ref[...], preferred_element_type=jnp.float32) + hb_ref[...]
        sig = 1.0 / (1.0 + jnp.exp(-z))
        out_ref[n:n + 1, :] = (sig * hsc_ref[...]).astype(out_ref.dtype)


# ---------------------------------- model -------------------------------------

class PallasModel:
    """JAX/Pallas port of the PyTorch `Model` (deterministic synthetic params)."""

    def __init__(self, img_size, conv_channels, dense_layers,
                 num_recs, num_circs, key):
        w_img, h_img = img_size
        H, W = int(h_img), int(w_img)

        self.conv_params = []   # (G6, bias_row) per conv block
        self.conv_dims = []     # (Hp_in, Ho, Wo, Cout) per conv block
        for cin, cout in zip(conv_channels[:-1], conv_channels[1:]):
            # TODO(synk): odd spatial dims (ceil_mode pooling edge) unsupported
            # in the fused kernel path; this config keeps every dim even.
            assert H % 2 == 0 and W % 2 == 0
            key, k1, k2 = jax.random.split(key, 3)
            wl = jax.random.normal(k1, (3, 3, cin, cout), jnp.float32) * 0.1
            bl = jax.random.normal(k2, (cout,), jnp.float32) * 0.1
            Ho, Wo, Wp = H // 2, W // 2, W + 2
            # Banded block-Toeplitz matrices: G[di, pj] maps a padded input row
            # (jp, ci) directly to pooled-grid conv outputs (jo, co); the dj tap
            # sum and the horizontal pool-position selection are baked in.
            jo = jnp.arange(Wo)
            g_list = []
            for di in range(3):
                for pj in range(2):
                    g = jnp.zeros((Wp, cin, Wo, cout), jnp.float32)
                    for dj in range(3):
                        g = g.at[2 * jo + pj + dj, :, jo, :].set(wl[di, dj])
                    g_list.append(g.reshape(Wp * cin, Wo * cout))
            G = jnp.stack(g_list, axis=0)                  # (6, Wp*cin, Wo*cout)
            brow = jnp.tile(bl, Wo).reshape(1, Wo * cout)  # bias per (jo, co)
            self.conv_params.append((G, brow))
            self.conv_dims.append((H + 2, Ho, Wo, cout))
            H, W = Ho, Wo

        c_last = conv_channels[-1]
        hw_last = H * W
        enc_feat_dim = hw_last * c_last

        self.dense_params = []
        fin = enc_feat_dim
        for li, fout in enumerate(dense_layers):
            key, k1, k2 = jax.random.split(key, 3)
            dw = jax.random.normal(k1, (fin, fout), jnp.float32) / jnp.sqrt(float(fin))
            db = jax.random.normal(k2, (fout,), jnp.float32) * 0.05
            if li == 0:
                # Bake the torch NCHW flatten (c,h,w) -> kernel's (h,w,c) pixel-
                # major ordering into the first dense weight's rows.
                hw_idx = jnp.arange(hw_last)
                c_idx = jnp.arange(c_last)
                perm = (c_idx[None, :] * hw_last + hw_idx[:, None]).reshape(-1)
                dw = dw[perm, :]
            self.dense_params.append((dw, db.reshape(1, fout)))
            fin = fout

        hidden = dense_layers[-1]
        self.num_recs, self.num_circs = num_recs, num_circs
        head_ws, head_bs, head_scales = [], [], []
        key, k1, k2, k3, k4 = jax.random.split(key, 5)
        if num_recs > 0:
            head_ws.append(jax.random.normal(k1, (hidden, num_recs * 6), jnp.float32) * 0.1)
            head_bs.append(jax.random.normal(k2, (num_recs * 6,), jnp.float32) * 0.1)
            s = jnp.ones((num_recs, 6), jnp.float32).at[:, 5].set(360.0)
            head_scales.append(s.reshape(-1))              # theta columns * 360
        if num_circs > 0:
            head_ws.append(jax.random.normal(k3, (hidden, num_circs * 4), jnp.float32) * 0.1)
            head_bs.append(jax.random.normal(k4, (num_circs * 4,), jnp.float32) * 0.1)
            head_scales.append(jnp.ones((num_circs * 4,), jnp.float32))
        self.head_w = jnp.concatenate(head_ws, axis=1)
        self.head_b = jnp.concatenate(head_bs).reshape(1, -1)
        self.head_scale = jnp.concatenate(head_scales).reshape(1, -1)

    def __call__(self, x_nchw):
        N, C, H, W = x_nchw.shape
        # The only wrapper-side glue: padded NHWC input laid out as 2-D
        # (rows = (n, i_pad), cols = (j_pad, c)); fed straight to the kernel.
        x = jnp.transpose(x_nchw, (0, 2, 3, 1))
        x = jnp.pad(x, ((0, 0), (1, 1), (1, 1), (0, 0)))
        a0 = x.reshape(N * (H + 2), (W + 2) * C)

        args = [a0]
        for G, brow in self.conv_params:
            args += [G, brow]
        for dw, db in self.dense_params:
            args += [dw, db]
        args += [self.head_w, self.head_b, self.head_scale]

        P = self.head_w.shape[1]
        scratch_shapes = []
        for l in range(len(self.conv_dims) - 1):
            _, ho, wo, cout = self.conv_dims[l]
            scratch_shapes.append(
                pltpu.VMEM((N * (ho + 2), (wo + 2) * cout), jnp.float32))

        kernel = functools.partial(
            _fused_forward_kernel,
            num_conv=len(self.conv_params),
            num_dense=len(self.dense_params),
            batch=N,
            conv_dims=tuple(self.conv_dims),
        )
        heads = pl.pallas_call(
            kernel,
            out_shape=jax.ShapeDtypeStruct((N, P), jnp.float32),
            in_specs=[pl.BlockSpec(memory_space=pltpu.MemorySpace.VMEM)] * len(args),
            out_specs=pl.BlockSpec(memory_space=pltpu.MemorySpace.VMEM),
            scratch_shapes=scratch_shapes,
        )(*args)

        output = {}
        off = 0
        if self.num_recs > 0:
            rp = heads[:, off:off + self.num_recs * 6].reshape(-1, self.num_recs, 6)
            off += self.num_recs * 6
            r = rp[..., :4].reshape(-1, self.num_recs, 2, 2)
            p_r = rp[..., 4]
            theta = rp[..., 5]                              # already sigmoid*360
            output["Rectangle"] = (r, p_r, theta)
        if self.num_circs > 0:
            cp = heads[:, off:off + self.num_circs * 4].reshape(-1, self.num_circs, 4)
            output["Circle"] = (cp[..., :3], cp[..., 3])
        return output


# ----------------------------------- main --------------------------------------

if __name__ == "__main__":
    key = jax.random.PRNGKey(0)
    x = jax.random.normal(key, (2, 4, 16, 16), jnp.float32)   # NCHW, like PyTorch

    model = PallasModel(
        img_size=(16, 16),
        conv_channels=(4, 8, 16),
        dense_layers=(64, 32),
        num_recs=3,
        num_circs=2,
        key=jax.random.PRNGKey(42),
    )

    forward = jax.jit(model.__call__)
    out = forward(x)
    out = jax.block_until_ready(out)

    r, p_r, theta = out["Rectangle"]
    c, p_c = out["Circle"]
    assert r.shape == (2, 3, 2, 2) and p_r.shape == (2, 3) and theta.shape == (2, 3)
    assert c.shape == (2, 2, 3) and p_c.shape == (2, 2)
    assert bool(jnp.all((r >= 0) & (r <= 1)))
    assert bool(jnp.all((p_r >= 0) & (p_r <= 1)))
    assert bool(jnp.all((c >= 0) & (c <= 1)))
    assert bool(jnp.all((theta >= 0) & (theta <= 360)))
    print("KERNEL_OK")
</pallas_src>

<mosaic_0001>
module attributes {stable_mosaic.version = 11 : i64} {
  func.func @_fused_forward_kernel(%arg0: memref<36x72xf32, #tpu.memory_space<vmem>>, %arg1: memref<6x72x64xf32, #tpu.memory_space<vmem>>, %arg2: memref<1x64xf32, #tpu.memory_space<vmem>>, %arg3: memref<6x80x64xf32, #tpu.memory_space<vmem>>, %arg4: memref<1x64xf32, #tpu.memory_space<vmem>>, %arg5: memref<256x64xf32, #tpu.memory_space<vmem>>, %arg6: memref<1x64xf32, #tpu.memory_space<vmem>>, %arg7: memref<64x32xf32, #tpu.memory_space<vmem>>, %arg8: memref<1x32xf32, #tpu.memory_space<vmem>>, %arg9: memref<32x26xf32, #tpu.memory_space<vmem>>, %arg10: memref<1x26xf32, #tpu.memory_space<vmem>>, %arg11: memref<1x26xf32, #tpu.memory_space<vmem>>, %arg12: memref<2x26xf32, #tpu.memory_space<vmem>>, %arg13: memref<20x80xf32, #tpu.memory_space<vmem>>) attributes {dimension_semantics = [], scalar_prefetch = 0 : i64, scratch_operands = 1 : i64, tpu.core_type = #tpu.core_type<tc>} {
    %cst = arith.constant 0.000000e+00 : f32
    %0 = vector.broadcast %cst : f32 to vector<20x80xf32>
    %c0 = arith.constant 0 : index
    %c0_0 = arith.constant 0 : index
    %1 = vector.load %arg13[%c0, %c0_0] : memref<20x80xf32, #tpu.memory_space<vmem>>, vector<20x80xf32>
    tpu.vector_store %arg13[%c0, %c0_0], %0 {strides = array<i32>} : memref<20x80xf32, #tpu.memory_space<vmem>>, vector<20x80xf32>,
    %c0_1 = arith.constant 0 : index
    %c0_2 = arith.constant 0 : index
    %2 = tpu.strided_load %arg0[%c0_1, %c0_2] {strides = array<i32: 2, 1>} : memref<36x72xf32, #tpu.memory_space<vmem>>, vector<8x72xf32>
    %c1 = arith.constant 1 : index
    %c0_3 = arith.constant 0 : index
    %3 = tpu.strided_load %arg0[%c1, %c0_3] {strides = array<i32: 2, 1>} : memref<36x72xf32, #tpu.memory_space<vmem>>, vector<8x72xf32>
    %c2 = arith.constant 2 : index
    %c0_4 = arith.constant 0 : index
    %4 = tpu.strided_load %arg0[%c2, %c0_4] {strides = array<i32: 2, 1>} : memref<36x72xf32, #tpu.memory_space<vmem>>, vector<8x72xf32>
    %c3 = arith.constant 3 : index
    %c0_5 = arith.constant 0 : index
    %5 = tpu.strided_load %arg0[%c3, %c0_5] {strides = array<i32: 2, 1>} : memref<36x72xf32, #tpu.memory_space<vmem>>, vector<8x72xf32>
    %c0_6 = arith.constant 0 : index
    %c0_7 = arith.constant 0 : index
    %6 = vector.load %arg2[%c0_6, %c0_7] : memref<1x64xf32, #tpu.memory_space<vmem>>, vector<1x64xf32>
    %cst_8 = arith.constant 0.000000e+00 : f32
    %7 = vector.broadcast %cst_8 : f32 to vector<8x64xf32>
    %c0_9 = arith.constant 0 : index
    %c0_10 = arith.constant 0 : index
    %c0_11 = arith.constant 0 : index
    %8 = vector.load %arg1[%c0_9, %c0_10, %c0_11] : memref<6x72x64xf32, #tpu.memory_space<vmem>>, vector<1x72x64xf32>
    %9 = vector.shape_cast %8 : vector<1x72x64xf32> to vector<72x64xf32>
    %cst_12 = arith.constant dense<0.000000e+00> : vector<8x64xf32>
    %10 = tpu.matmul %2, %9, %cst_12 {dimension_numbers = #tpu.dot_dimension_numbers<[1], [0], [0], [1], [0, 0, 1, 1], [], []>} : vector<8x72xf32>, vector<72x64xf32>, vector<8x64xf32> -> vector<8x64xf32>
    %11 = arith.addf %7, %10 : vector<8x64xf32>
    %c2_13 = arith.constant 2 : index
    %c0_14 = arith.constant 0 : index
    %c0_15 = arith.constant 0 : index
    %12 = vector.load %arg1[%c2_13, %c0_14, %c0_15] : memref<6x72x64xf32, #tpu.memory_space<vmem>>, vector<1x72x64xf32>
    %13 = vector.shape_cast %12 : vector<1x72x64xf32> to vector<72x64xf32>
    %cst_16 = arith.constant dense<0.000000e+00> : vector<8x64xf32>
    %14 = tpu.matmul %3, %13, %cst_16 {dimension_numbers = #tpu.dot_dimension_numbers<[1], [0], [0], [1], [0, 0, 1, 1], [], []>} : vector<8x72xf32>, vector<72x64xf32>, vector<8x64xf32> -> vector<8x64xf32>
    %15 = arith.addf %11, %14 : vector<8x64xf32>
    %c4 = arith.constant 4 : index
    %c0_17 = arith.constant 0 : index
    %c0_18 = arith.constant 0 : index
    %16 = vector.load %arg1[%c4, %c0_17, %c0_18] : memref<6x72x64xf32, #tpu.memory_space<vmem>>, vector<1x72x64xf32>
    %17 = vector.shape_cast %16 : vector<1x72x64xf32> to vector<72x64xf32>
    %cst_19 = arith.constant dense<0.000000e+00> : vector<8x64xf32>
    %18 = tpu.matmul %4, %17, %cst_19 {dimension_numbers = #tpu.dot_dimension_numbers<[1], [0], [0], [1], [0, 0, 1, 1], [], []>} : vector<8x72xf32>, vector<72x64xf32>, vector<8x64xf32> -> vector<8x64xf32>
    %19 = arith.addf %15, %18 : vector<8x64xf32>
    %20 = vector.broadcast %6 : vector<1x64xf32> to vector<8x64xf32>
    %21 = arith.addf %19, %20 : vector<8x64xf32>
    %cst_20 = arith.constant 0.000000e+00 : f32
    %22 = vector.broadcast %cst_20 : f32 to vector<8x64xf32>
    %23 = arith.maximumf %21, %22 : vector<8x64xf32>
    %cst_21 = arith.constant 0.000000e+00 : f32
    %24 = vector.broadcast %cst_21 : f32 to vector<8x64xf32>
    %c1_22 = arith.constant 1 : index
    %c0_23 = arith.constant 0 : index
    %c0_24 = arith.constant 0 : index
    %25 = vector.load %arg1[%c1_22, %c0_23, %c0_24] : memref<6x72x64xf32, #tpu.memory_space<vmem>>, vector<1x72x64xf32>
    %26 = vector.shape_cast %25 : vector<1x72x64xf32> to vector<72x64xf32>
    %cst_25 = arith.constant dense<0.000000e+00> : vector<8x64xf32>
    %27 = tpu.matmul %2, %26, %cst_25 {dimension_numbers = #tpu.dot_dimension_numbers<[1], [0], [0], [1], [0, 0, 1, 1], [], []>} : vector<8x72xf32>, vector<72x64xf32>, vector<8x64xf32> -> vector<8x64xf32>
    %28 = arith.addf %24, %27 : vector<8x64xf32>
    %c3_26 = arith.constant 3 : index
    %c0_27 = arith.constant 0 : index
    %c0_28 = arith.constant 0 : index
    %29 = vector.load %arg1[%c3_26, %c0_27, %c0_28] : memref<6x72x64xf32, #tpu.memory_space<vmem>>, vector<1x72x64xf32>
    %30 = vector.shape_cast %29 : vector<1x72x64xf32> to vector<72x64xf32>
    %cst_29 = arith.constant dense<0.000000e+00> : vector<8x64xf32>
    %31 = tpu.matmul %3, %30, %cst_29 {dimension_numbers = #tpu.dot_dimension_numbers<[1], [0], [0], [1], [0, 0, 1, 1], [], []>} : vector<8x72xf32>, vector<72x64xf32>, vector<8x64xf32> -> vector<8x64xf32>
    %32 = arith.addf %28, %31 : vector<8x64xf32>
    %c5 = arith.constant 5 : index
    %c0_30 = arith.constant 0 : index
    %c0_31 = arith.constant 0 : index
    %33 = vector.load %arg1[%c5, %c0_30, %c0_31] : memref<6x72x64xf32, #tpu.memory_space<vmem>>, vector<1x72x64xf32>
    %34 = vector.shape_cast %33 : vector<1x72x64xf32> to vector<72x64xf32>
    %cst_32 = arith.constant dense<0.000000e+00> : vector<8x64xf32>
    %35 = tpu.matmul %4, %34, %cst_32 {dimension_numbers = #tpu.dot_dimension_numbers<[1], [0], [0], [1], [0, 0, 1, 1], [], []>} : vector<8x72xf32>, vector<72x64xf32>, vector<8x64xf32> -> vector<8x64xf32>
    %36 = arith.addf %32, %35 : vector<8x64xf32>
    %37 = vector.broadcast %6 : vector<1x64xf32> to vector<8x64xf32>
    %38 = arith.addf %36, %37 : vector<8x64xf32>
    %cst_33 = arith.constant 0.000000e+00 : f32
    %39 = vector.broadcast %cst_33 : f32 to vector<8x64xf32>
    %40 = arith.maximumf %38, %39 : vector<8x64xf32>
    %41 = arith.maximumf %23, %40 : vector<8x64xf32>
    %cst_34 = arith.constant 0.000000e+00 : f32
    %42 = vector.broadcast %cst_34 : f32 to vector<8x64xf32>
    %c0_35 = arith.constant 0 : index
    %c0_36 = arith.constant 0 : index
    %c0_37 = arith.constant 0 : index
    %43 = vector.load %arg1[%c0_35, %c0_36, %c0_37] : memref<6x72x64xf32, #tpu.memory_space<vmem>>, vector<1x72x64xf32>
    %44 = vector.shape_cast %43 : vector<1x72x64xf32> to vector<72x64xf32>
    %cst_38 = arith.constant dense<0.000000e+00> : vector<8x64xf32>
    %45 = tpu.matmul %3, %44, %cst_38 {dimension_numbers = #tpu.dot_dimension_numbers<[1], [0], [0], [1], [0, 0, 1, 1], [], []>} : vector<8x72xf32>, vector<72x64xf32>, vector<8x64xf32> -> vector<8x64xf32>
    %46 = arith.addf %42, %45 : vector<8x64xf32>
    %c2_39 = arith.constant 2 : index
    %c0_40 = arith.constant 0 : index
    %c0_41 = arith.constant 0 : index
    %47 = vector.load %arg1[%c2_39, %c0_40, %c0_41] : memref<6x72x64xf32, #tpu.memory_space<vmem>>, vector<1x72x64xf32>
    %48 = vector.shape_cast %47 : vector<1x72x64xf32> to vector<72x64xf32>
    %cst_42 = arith.constant dense<0.000000e+00> : vector<8x64xf32>
    %49 = tpu.matmul %4, %48, %cst_42 {dimension_numbers = #tpu.dot_dimension_numbers<[1], [0], [0], [1], [0, 0, 1, 1], [], []>} : vector<8x72xf32>, vector<72x64xf32>, vector<8x64xf32> -> vector<8x64xf32>
    %50 = arith.addf %46, %49 : vector<8x64xf32>
    %c4_43 = arith.constant 4 : index
    %c0_44 = arith.constant 0 : index
    %c0_45 = arith.constant 0 : index
    %51 = vector.load %arg1[%c4_43, %c0_44, %c0_45] : memref<6x72x64xf32, #tpu.memory_space<vmem>>, vector<1x72x64xf32>
    %52 = vector.shape_cast %51 : vector<1x72x64xf32> to vector<72x64xf32>
    %cst_46 = arith.constant dense<0.000000e+00> : vector<8x64xf32>
    %53 = tpu.matmul %5, %52, %cst_46 {dimension_numbers = #tpu.dot_dimension_numbers<[1], [0], [0], [1], [0, 0, 1, 1], [], []>} : vector<8x72xf32>, vector<72x64xf32>, vector<8x64xf32> -> vector<8x64xf32>
    %54 = arith.addf %50, %53 : vector<8x64xf32>
    %55 = vector.broadcast %6 : vector<1x64xf32> to vector<8x64xf32>
    %56 = arith.addf %54, %55 : vector<8x64xf32>
    %cst_47 = arith.constant 0.000000e+00 : f32
    %57 = vector.broadcast %cst_47 : f32 to vector<8x64xf32>
    %58 = arith.maximumf %56, %57 : vector<8x64xf32>
    %59 = arith.maximumf %41, %58 : vector<8x64xf32>
    %cst_48 = arith.constant 0.000000e+00 : f32
    %60 = vector.broadcast %cst_48 : f32 to vector<8x64xf32>
    %c1_49 = arith.constant 1 : index
    %c0_50 = arith.constant 0 : index
    %c0_51 = arith.constant 0 : index
    %61 = vector.load %arg1[%c1_49, %c0_50, %c0_51] : memref<6x72x64xf32, #tpu.memory_space<vmem>>, vector<1x72x64xf32>
    %62 = vector.shape_cast %61 : vector<1x72x64xf32> to vector<72x64xf32>
    %cst_52 = arith.constant dense<0.000000e+00> : vector<8x64xf32>
    %63 = tpu.matmul %3, %62, %cst_52 {dimension_numbers = #tpu.dot_dimension_numbers<[1], [0], [0], [1], [0, 0, 1, 1], [], []>} : vector<8x72xf32>, vector<72x64xf32>, vector<8x64xf32> -> vector<8x64xf32>
    %64 = arith.addf %60, %63 : vector<8x64xf32>
    %c3_53 = arith.constant 3 : index
    %c0_54 = arith.constant 0 : index
    %c0_55 = arith.constant 0 : index
    %65 = vector.load %arg1[%c3_53, %c0_54, %c0_55] : memref<6x72x64xf32, #tpu.memory_space<vmem>>, vector<1x72x64xf32>
    %66 = vector.shape_cast %65 : vector<1x72x64xf32> to vector<72x64xf32>
    %cst_56 = arith.constant dense<0.000000e+00> : vector<8x64xf32>
    %67 = tpu.matmul %4, %66, %cst_56 {dimension_numbers = #tpu.dot_dimension_numbers<[1], [0], [0], [1], [0, 0, 1, 1], [], []>} : vector<8x72xf32>, vector<72x64xf32>, vector<8x64xf32> -> vector<8x64xf32>
    %68 = arith.addf %64, %67 : vector<8x64xf32>
    %c5_57 = arith.constant 5 : index
    %c0_58 = arith.constant 0 : index
    %c0_59 = arith.constant 0 : index
    %69 = vector.load %arg1[%c5_57, %c0_58, %c0_59] : memref<6x72x64xf32, #tpu.memory_space<vmem>>, vector<1x72x64xf32>
    %70 = vector.shape_cast %69 : vector<1x72x64xf32> to vector<72x64xf32>
    %cst_60 = arith.constant dense<0.000000e+00> : vector<8x64xf32>
    %71 = tpu.matmul %5, %70, %cst_60 {dimension_numbers = #tpu.dot_dimension_numbers<[1], [0], [0], [1], [0, 0, 1, 1], [], []>} : vector<8x72xf32>, vector<72x64xf32>, vector<8x64xf32> -> vector<8x64xf32>
    %72 = arith.addf %68, %71 : vector<8x64xf32>
    %73 = vector.broadcast %6 : vector<1x64xf32> to vector<8x64xf32>
    %74 = arith.addf %72, %73 : vector<8x64xf32>
    %cst_61 = arith.constant 0.000000e+00 : f32
    %75 = vector.broadcast %cst_61 : f32 to vector<8x64xf32>
    %76 = arith.maximumf %74, %75 : vector<8x64xf32>
    %77 = arith.maximumf %59, %76 : vector<8x64xf32>
    %c1_62 = arith.constant 1 : index
    %c8 = arith.constant 8 : index
    %78 = vector.load %arg13[%c1_62, %c8] : memref<20x80xf32, #tpu.memory_space<vmem>>, vector<8x64xf32>
    tpu.vector_store %arg13[%c1_62, %c8], %77 {strides = array<i32>} : memref<20x80xf32, #tpu.memory_space<vmem>>, vector<8x64xf32>,
    %c0_63 = arith.constant 0 : index
    %c0_64 = arith.constant 0 : index
    %79 = tpu.strided_load %arg13[%c0_63, %c0_64] {strides = array<i32: 2, 1>} : memref<20x80xf32, #tpu.memory_space<vmem>>, vector<4x80xf32>
    %c1_65 = arith.constant 1 : index
    %c0_66 = arith.constant 0 : index
    %80 = tpu.strided_load %arg13[%c1_65, %c0_66] {strides = array<i32: 2, 1>} : memref<20x80xf32, #tpu.memory_space<vmem>>, vector<4x80xf32>
    %c2_67 = arith.constant 2 : index
    %c0_68 = arith.constant 0 : index
    %81 = tpu.strided_load %arg13[%c2_67, %c0_68] {strides = array<i32: 2, 1>} : memref<20x80xf32, #tpu.memory_space<vmem>>, vector<4x80xf32>
    %c3_69 = arith.constant 3 : index
    %c0_70 = arith.constant 0 : index
    %82 = tpu.strided_load %arg13[%c3_69, %c0_70] {strides = array<i32: 2, 1>} : memref<20x80xf32, #tpu.memory_space<vmem>>, vector<4x80xf32>
    %c0_71 = arith.constant 0 : index
    %c0_72 = arith.constant 0 : index
    %83 = vector.load %arg4[%c0_71, %c0_72] : memref<1x64xf32, #tpu.memory_space<vmem>>, vector<1x64xf32>
    %cst_73 = arith.constant 0.000000e+00 : f32
    %84 = vector.broadcast %cst_73 : f32 to vector<4x64xf32>
    %c0_74 = arith.constant 0 : index
    %c0_75 = arith.constant 0 : index
    %c0_76 = arith.constant 0 : index
    %85 = vector.load %arg3[%c0_74, %c0_75, %c0_76] : memref<6x80x64xf32, #tpu.memory_space<vmem>>, vector<1x80x64xf32>
    %86 = vector.shape_cast %85 : vector<1x80x64xf32> to vector<80x64xf32>
    %cst_77 = arith.constant dense<0.000000e+00> : vector<4x64xf32>
    %87 = tpu.matmul %79, %86, %cst_77 {dimension_numbers = #tpu.dot_dimension_numbers<[1], [0], [0], [1], [0, 0, 1, 1], [], []>} : vector<4x80xf32>, vector<80x64xf32>, vector<4x64xf32> -> vector<4x64xf32>
    %88 = arith.addf %84, %87 : vector<4x64xf32>
    %c2_78 = arith.constant 2 : index
    %c0_79 = arith.constant 0 : index
    %c0_80 = arith.constant 0 : index
    %89 = vector.load %arg3[%c2_78, %c0_79, %c0_80] : memref<6x80x64xf32, #tpu.memory_space<vmem>>, vector<1x80x64xf32>
    %90 = vector.shape_cast %89 : vector<1x80x64xf32> to vector<80x64xf32>
    %cst_81 = arith.constant dense<0.000000e+00> : vector<4x64xf32>
    %91 = tpu.matmul %80, %90, %cst_81 {dimension_numbers = #tpu.dot_dimension_numbers<[1], [0], [0], [1], [0, 0, 1, 1], [], []>} : vector<4x80xf32>, vector<80x64xf32>, vector<4x64xf32> -> vector<4x64xf32>
    %92 = arith.addf %88, %91 : vector<4x64xf32>
    %c4_82 = arith.constant 4 : index
    %c0_83 = arith.constant 0 : index
    %c0_84 = arith.constant 0 : index
    %93 = vector.load %arg3[%c4_82, %c0_83, %c0_84] : memref<6x80x64xf32, #tpu.memory_space<vmem>>, vector<1x80x64xf32>
    %94 = vector.shape_cast %93 : vector<1x80x64xf32> to vector<80x64xf32>
    %cst_85 = arith.constant dense<0.000000e+00> : vector<4x64xf32>
    %95 = tpu.matmul %81, %94, %cst_85 {dimension_numbers = #tpu.dot_dimension_numbers<[1], [0], [0], [1], [0, 0, 1, 1], [], []>} : vector<4x80xf32>, vector<80x64xf32>, vector<4x64xf32> -> vector<4x64xf32>
    %96 = arith.addf %92, %95 : vector<4x64xf32>
    %97 = vector.broadcast %83 : vector<1x64xf32> to vector<4x64xf32>
    %98 = arith.addf %96, %97 : vector<4x64xf32>
    %cst_86 = arith.constant 0.000000e+00 : f32
    %99 = vector.broadcast %cst_86 : f32 to vector<4x64xf32>
    %100 = arith.maximumf %98, %99 : vector<4x64xf32>
    %cst_87 = arith.constant 0.000000e+00 : f32
    %101 = vector.broadcast %cst_87 : f32 to vector<4x64xf32>
    %c1_88 = arith.constant 1 : index
    %c0_89 = arith.constant 0 : index
    %c0_90 = arith.constant 0 : index
    %102 = vector.load %arg3[%c1_88, %c0_89, %c0_90] : memref<6x80x64xf32, #tpu.memory_space<vmem>>, vector<1x80x64xf32>
    %103 = vector.shape_cast %102 : vector<1x80x64xf32> to vector<80x64xf32>
    %cst_91 = arith.constant dense<0.000000e+00> : vector<4x64xf32>
    %104 = tpu.matmul %79, %103, %cst_91 {dimension_numbers = #tpu.dot_dimension_numbers<[1], [0], [0], [1], [0, 0, 1, 1], [], []>} : vector<4x80xf32>, vector<80x64xf32>, vector<4x64xf32> -> vector<4x64xf32>
    %105 = arith.addf %101, %104 : vector<4x64xf32>
    %c3_92 = arith.constant 3 : index
    %c0_93 = arith.constant 0 : index
    %c0_94 = arith.constant 0 : index
    %106 = vector.load %arg3[%c3_92, %c0_93, %c0_94] : memref<6x80x64xf32, #tpu.memory_space<vmem>>, vector<1x80x64xf32>
    %107 = vector.shape_cast %106 : vector<1x80x64xf32> to vector<80x64xf32>
    %cst_95 = arith.constant dense<0.000000e+00> : vector<4x64xf32>
    %108 = tpu.matmul %80, %107, %cst_95 {dimension_numbers = #tpu.dot_dimension_numbers<[1], [0], [0], [1], [0, 0, 1, 1], [], []>} : vector<4x80xf32>, vector<80x64xf32>, vector<4x64xf32> -> vector<4x64xf32>
    %109 = arith.addf %105, %108 : vector<4x64xf32>
    %c5_96 = arith.constant 5 : index
    %c0_97 = arith.constant 0 : index
    %c0_98 = arith.constant 0 : index
    %110 = vector.load %arg3[%c5_96, %c0_97, %c0_98] : memref<6x80x64xf32, #tpu.memory_space<vmem>>, vector<1x80x64xf32>
    %111 = vector.shape_cast %110 : vector<1x80x64xf32> to vector<80x64xf32>
    %cst_99 = arith.constant dense<0.000000e+00> : vector<4x64xf32>
    %112 = tpu.matmul %81, %111, %cst_99 {dimension_numbers = #tpu.dot_dimension_numbers<[1], [0], [0], [1], [0, 0, 1, 1], [], []>} : vector<4x80xf32>, vector<80x64xf32>, vector<4x64xf32> -> vector<4x64xf32>
    %113 = arith.addf %109, %112 : vector<4x64xf32>
    %114 = vector.broadcast %83 : vector<1x64xf32> to vector<4x64xf32>
    %115 = arith.addf %113, %114 : vector<4x64xf32>
    %cst_100 = arith.constant 0.000000e+00 : f32
    %116 = vector.broadcast %cst_100 : f32 to vector<4x64xf32>
    %117 = arith.maximumf %115, %116 : vector<4x64xf32>
    %118 = arith.maximumf %100, %117 : vector<4x64xf32>
    %cst_101 = arith.constant 0.000000e+00 : f32
    %119 = vector.broadcast %cst_101 : f32 to vector<4x64xf32>
    %c0_102 = arith.constant 0 : index
    %c0_103 = arith.constant 0 : index
    %c0_104 = arith.constant 0 : index
    %120 = vector.load %arg3[%c0_102, %c0_103, %c0_104] : memref<6x80x64xf32, #tpu.memory_space<vmem>>, vector<1x80x64xf32>
    %121 = vector.shape_cast %120 : vector<1x80x64xf32> to vector<80x64xf32>
    %cst_105 = arith.constant dense<0.000000e+00> : vector<4x64xf32>
    %122 = tpu.matmul %80, %121, %cst_105 {dimension_numbers = #tpu.dot_dimension_numbers<[1], [0], [0], [1], [0, 0, 1, 1], [], []>} : vector<4x80xf32>, vector<80x64xf32>, vector<4x64xf32> -> vector<4x64xf32>
    %123 = arith.addf %119, %122 : vector<4x64xf32>
    %c2_106 = arith.constant 2 : index
    %c0_107 = arith.constant 0 : index
    %c0_108 = arith.constant 0 : index
    %124 = vector.load %arg3[%c2_106, %c0_107, %c0_108] : memref<6x80x64xf32, #tpu.memory_space<vmem>>, vector<1x80x64xf32>
    %125 = vector.shape_cast %124 : vector<1x80x64xf32> to vector<80x64xf32>
    %cst_109 = arith.constant dense<0.000000e+00> : vector<4x64xf32>
    %126 = tpu.matmul %81, %125, %cst_109 {dimension_numbers = #tpu.dot_dimension_numbers<[1], [0], [0], [1], [0, 0, 1, 1], [], []>} : vector<4x80xf32>, vector<80x64xf32>, vector<4x64xf32> -> vector<4x64xf32>
    %127 = arith.addf %123, %126 : vector<4x64xf32>
    %c4_110 = arith.constant 4 : index
    %c0_111 = arith.constant 0 : index
    %c0_112 = arith.constant 0 : index
    %128 = vector.load %arg3[%c4_110, %c0_111, %c0_112] : memref<6x80x64xf32, #tpu.memory_space<vmem>>, vector<1x80x64xf32>
    %129 = vector.shape_cast %128 : vector<1x80x64xf32> to vector<80x64xf32>
    %cst_113 = arith.constant dense<0.000000e+00> : vector<4x64xf32>
    %130 = tpu.matmul %82, %129, %cst_113 {dimension_numbers = #tpu.dot_dimension_numbers<[1], [0], [0], [1], [0, 0, 1, 1], [], []>} : vector<4x80xf32>, vector<80x64xf32>, vector<4x64xf32> -> vector<4x64xf32>
    %131 = arith.addf %127, %130 : vector<4x64xf32>
    %132 = vector.broadcast %83 : vector<1x64xf32> to vector<4x64xf32>
    %133 = arith.addf %131, %132 : vector<4x64xf32>
    %cst_114 = arith.constant 0.000000e+00 : f32
    %134 = vector.broadcast %cst_114 : f32 to vector<4x64xf32>
    %135 = arith.maximumf %133, %134 : vector<4x64xf32>
    %136 = arith.maximumf %118, %135 : vector<4x64xf32>
    %cst_115 = arith.constant 0.000000e+00 : f32
    %137 = vector.broadcast %cst_115 : f32 to vector<4x64xf32>
    %c1_116 = arith.constant 1 : index
    %c0_117 = arith.constant 0 : index
    %c0_118 = arith.constant 0 : index
    %138 = vector.load %arg3[%c1_116, %c0_117, %c0_118] : memref<6x80x64xf32, #tpu.memory_space<vmem>>, vector<1x80x64xf32>
    %139 = vector.shape_cast %138 : vector<1x80x64xf32> to vector<80x64xf32>
    %cst_119 = arith.constant dense<0.000000e+00> : vector<4x64xf32>
    %140 = tpu.matmul %80, %139, %cst_119 {dimension_numbers = #tpu.dot_dimension_numbers<[1], [0], [0], [1], [0, 0, 1, 1], [], []>} : vector<4x80xf32>, vector<80x64xf32>, vector<4x64xf32> -> vector<4x64xf32>
    %141 = arith.addf %137, %140 : vector<4x64xf32>
    %c3_120 = arith.constant 3 : index
    %c0_121 = arith.constant 0 : index
    %c0_122 = arith.constant 0 : index
    %142 = vector.load %arg3[%c3_120, %c0_121, %c0_122] : memref<6x80x64xf32, #tpu.memory_space<vmem>>, vector<1x80x64xf32>
    %143 = vector.shape_cast %142 : vector<1x80x64xf32> to vector<80x64xf32>
    %cst_123 = arith.constant dense<0.000000e+00> : vector<4x64xf32>
    %144 = tpu.matmul %81, %143, %cst_123 {dimension_numbers = #tpu.dot_dimension_numbers<[1], [0], [0], [1], [0, 0, 1, 1], [], []>} : vector<4x80xf32>, vector<80x64xf32>, vector<4x64xf32> -> vector<4x64xf32>
    %145 = arith.addf %141, %144 : vector<4x64xf32>
    %c5_124 = arith.constant 5 : index
    %c0_125 = arith.constant 0 : index
    %c0_126 = arith.constant 0 : index
    %146 = vector.load %arg3[%c5_124, %c0_125, %c0_126] : memref<6x80x64xf32, #tpu.memory_space<vmem>>, vector<1x80x64xf32>
    %147 = vector.shape_cast %146 : vector<1x80x64xf32> to vector<80x64xf32>
    %cst_127 = arith.constant dense<0.000000e+00> : vector<4x64xf32>
    %148 = tpu.matmul %82, %147, %cst_127 {dimension_numbers = #tpu.dot_dimension_numbers<[1], [0], [0], [1], [0, 0, 1, 1], [], []>} : vector<4x80xf32>, vector<80x64xf32>, vector<4x64xf32> -> vector<4x64xf32>
    %149 = arith.addf %145, %148 : vector<4x64xf32>
    %150 = vector.broadcast %83 : vector<1x64xf32> to vector<4x64xf32>
    %151 = arith.addf %149, %150 : vector<4x64xf32>
    %cst_128 = arith.constant 0.000000e+00 : f32
    %152 = vector.broadcast %cst_128 : f32 to vector<4x64xf32>
    %153 = arith.maximumf %151, %152 : vector<4x64xf32>
    %154 = arith.maximumf %136, %153 : vector<4x64xf32>
    %c0_129 = arith.constant 0 : index
    %c0_130 = arith.constant 0 : index
    %155 = vector.load %arg6[%c0_129, %c0_130] : memref<1x64xf32, #tpu.memory_space<vmem>>, vector<1x64xf32>
    %156 = vector.extract_strided_slice %154 {offsets = [0, 0], sizes = [1, 64], strides = [1, 1]} : vector<4x64xf32> to vector<1x64xf32>
    %c0_131 = arith.constant 0 : index
    %c0_132 = arith.constant 0 : index
    %157 = vector.load %arg5[%c0_131, %c0_132] : memref<256x64xf32, #tpu.memory_space<vmem>>, vector<64x64xf32>
    %cst_133 = arith.constant dense<0.000000e+00> : vector<1x64xf32>
    %158 = tpu.matmul %156, %157, %cst_133 {dimension_numbers = #tpu.dot_dimension_numbers<[1], [0], [0], [1], [0, 0, 1, 1], [], []>} : vector<1x64xf32>, vector<64x64xf32>, vector<1x64xf32> -> vector<1x64xf32>
    %159 = arith.addf %155, %158 : vector<1x64xf32>
    %160 = vector.extract_strided_slice %154 {offsets = [1, 0], sizes = [1, 64], strides = [1, 1]} : vector<4x64xf32> to vector<1x64xf32>
    %c64 = arith.constant 64 : index
    %c0_134 = arith.constant 0 : index
    %161 = vector.load %arg5[%c64, %c0_134] : memref<256x64xf32, #tpu.memory_space<vmem>>, vector<64x64xf32>
    %cst_135 = arith.constant dense<0.000000e+00> : vector<1x64xf32>
    %162 = tpu.matmul %160, %161, %cst_135 {dimension_numbers = #tpu.dot_dimension_numbers<[1], [0], [0], [1], [0, 0, 1, 1], [], []>} : vector<1x64xf32>, vector<64x64xf32>, vector<1x64xf32> -> vector<1x64xf32>
    %163 = arith.addf %159, %162 : vector<1x64xf32>
    %164 = vector.extract_strided_slice %154 {offsets = [2, 0], sizes = [1, 64], strides = [1, 1]} : vector<4x64xf32> to vector<1x64xf32>
    %c128 = arith.constant 128 : index
    %c0_136 = arith.constant 0 : index
    %165 = vector.load %arg5[%c128, %c0_136] : memref<256x64xf32, #tpu.memory_space<vmem>>, vector<64x64xf32>
    %cst_137 = arith.constant dense<0.000000e+00> : vector<1x64xf32>
    %166 = tpu.matmul %164, %165, %cst_137 {dimension_numbers = #tpu.dot_dimension_numbers<[1], [0], [0], [1], [0, 0, 1, 1], [], []>} : vector<1x64xf32>, vector<64x64xf32>, vector<1x64xf32> -> vector<1x64xf32>
    %167 = arith.addf %163, %166 : vector<1x64xf32>
    %168 = vector.extract_strided_slice %154 {offsets = [3, 0], sizes = [1, 64], strides = [1, 1]} : vector<4x64xf32> to vector<1x64xf32>
    %c192 = arith.constant 192 : index
    %c0_138 = arith.constant 0 : index
    %169 = vector.load %arg5[%c192, %c0_138] : memref<256x64xf32, #tpu.memory_space<vmem>>, vector<64x64xf32>
    %cst_139 = arith.constant dense<0.000000e+00> : vector<1x64xf32>
    %170 = tpu.matmul %168, %169, %cst_139 {dimension_numbers = #tpu.dot_dimension_numbers<[1], [0], [0], [1], [0, 0, 1, 1], [], []>} : vector<1x64xf32>, vector<64x64xf32>, vector<1x64xf32> -> vector<1x64xf32>
    %171 = arith.addf %167, %170 : vector<1x64xf32>
    %cst_140 = arith.constant 0.000000e+00 : f32
    %172 = vector.broadcast %cst_140 : f32 to vector<1x64xf32>
    %173 = arith.maximumf %171, %172 : vector<1x64xf32>
    %c0_141 = arith.constant 0 : index
    %c0_142 = arith.constant 0 : index
    %174 = vector.load %arg7[%c0_141, %c0_142] : memref<64x32xf32, #tpu.memory_space<vmem>>, vector<64x32xf32>
    %cst_143 = arith.constant dense<0.000000e+00> : vector<1x32xf32>
    %175 = tpu.matmul %173, %174, %cst_143 {dimension_numbers = #tpu.dot_dimension_numbers<[1], [0], [0], [1], [0, 0, 1, 1], [], []>} : vector<1x64xf32>, vector<64x32xf32>, vector<1x32xf32> -> vector<1x32xf32>
    %c0_144 = arith.constant 0 : index
    %c0_145 = arith.constant 0 : index
    %176 = vector.load %arg8[%c0_144, %c0_145] : memref<1x32xf32, #tpu.memory_space<vmem>>, vector<1x32xf32>
    %177 = arith.addf %175, %176 : vector<1x32xf32>
    %cst_146 = arith.constant 0.000000e+00 : f32
    %178 = vector.broadcast %cst_146 : f32 to vector<1x32xf32>
    %179 = arith.maximumf %177, %178 : vector<1x32xf32>
    %c0_147 = arith.constant 0 : index
    %c0_148 = arith.constant 0 : index
    %180 = vector.load %arg9[%c0_147, %c0_148] : memref<32x26xf32, #tpu.memory_space<vmem>>, vector<32x26xf32>
    %cst_149 = arith.constant dense<0.000000e+00> : vector<1x26xf32>
    %181 = tpu.matmul %179, %180, %cst_149 {dimension_numbers = #tpu.dot_dimension_numbers<[1], [0], [0], [1], [0, 0, 1, 1], [], []>} : vector<1x32xf32>, vector<32x26xf32>, vector<1x26xf32> -> vector<1x26xf32>
    %c0_150 = arith.constant 0 : index
    %c0_151 = arith.constant 0 : index
    %182 = vector.load %arg10[%c0_150, %c0_151] : memref<1x26xf32, #tpu.memory_space<vmem>>, vector<1x26xf32>
    %183 = arith.addf %181, %182 : vector<1x26xf32>
    %cst_152 = arith.constant 0.000000e+00 : f32
    %184 = vector.broadcast %cst_152 : f32 to vector<1x26xf32>
    %185 = arith.subf %184, %183 : vector<1x26xf32>
    %186 = math.exp %185 : vector<1x26xf32>
    %cst_153 = arith.constant 1.000000e+00 : f32
    %187 = vector.broadcast %cst_153 : f32 to vector<1x26xf32>
    %188 = arith.addf %187, %186 : vector<1x26xf32>
    %cst_154 = arith.constant 1.000000e+00 : f32
    %189 = vector.broadcast %cst_154 : f32 to vector<1x26xf32>
    %190 = arith.divf %189, %188 : vector<1x26xf32>
    %c0_155 = arith.constant 0 : index
    %c0_156 = arith.constant 0 : index
    %191 = vector.load %arg11[%c0_155, %c0_156] : memref<1x26xf32, #tpu.memory_space<vmem>>, vector<1x26xf32>
    %192 = arith.mulf %190, %191 : vector<1x26xf32>
    %c0_157 = arith.constant 0 : index
    %c0_158 = arith.constant 0 : index
    %193 = vector.load %arg12[%c0_157, %c0_158] : memref<2x26xf32, #tpu.memory_space<vmem>>, vector<1x26xf32>
    tpu.vector_store %arg12[%c0_157, %c0_158], %192 {strides = array<i32>} : memref<2x26xf32, #tpu.memory_space<vmem>>, vector<1x26xf32>,
    %c18 = arith.constant 18 : index
    %c0_159 = arith.constant 0 : index
    %194 = tpu.strided_load %arg0[%c18, %c0_159] {strides = array<i32: 2, 1>} : memref<36x72xf32, #tpu.memory_space<vmem>>, vector<8x72xf32>
    %c19 = arith.constant 19 : index
    %c0_160 = arith.constant 0 : index
    %195 = tpu.strided_load %arg0[%c19, %c0_160] {strides = array<i32: 2, 1>} : memref<36x72xf32, #tpu.memory_space<vmem>>, vector<8x72xf32>
    %c20 = arith.constant 20 : index
    %c0_161 = arith.constant 0 : index
    %196 = tpu.strided_load %arg0[%c20, %c0_161] {strides = array<i32: 2, 1>} : memref<36x72xf32, #tpu.memory_space<vmem>>, vector<8x72xf32>
    %c21 = arith.constant 21 : index
    %c0_162 = arith.constant 0 : index
    %197 = tpu.strided_load %arg0[%c21, %c0_162] {strides = array<i32: 2, 1>} : memref<36x72xf32, #tpu.memory_space<vmem>>, vector<8x72xf32>
    %c0_163 = arith.constant 0 : index
    %c0_164 = arith.constant 0 : index
    %198 = vector.load %arg2[%c0_163, %c0_164] : memref<1x64xf32, #tpu.memory_space<vmem>>, vector<1x64xf32>
    %cst_165 = arith.constant 0.000000e+00 : f32
    %199 = vector.broadcast %cst_165 : f32 to vector<8x64xf32>
    %c0_166 = arith.constant 0 : index
    %c0_167 = arith.constant 0 : index
    %c0_168 = arith.constant 0 : index
    %200 = vector.load %arg1[%c0_166, %c0_167, %c0_168] : memref<6x72x64xf32, #tpu.memory_space<vmem>>, vector<1x72x64xf32>
    %201 = vector.shape_cast %200 : vector<1x72x64xf32> to vector<72x64xf32>
    %cst_169 = arith.constant dense<0.000000e+00> : vector<8x64xf32>
    %202 = tpu.matmul %194, %201, %cst_169 {dimension_numbers = #tpu.dot_dimension_numbers<[1], [0], [0], [1], [0, 0, 1, 1], [], []>} : vector<8x72xf32>, vector<72x64xf32>, vector<8x64xf32> -> vector<8x64xf32>
    %203 = arith.addf %199, %202 : vector<8x64xf32>
    %c2_170 = arith.constant 2 : index
    %c0_171 = arith.constant 0 : index
    %c0_172 = arith.constant 0 : index
    %204 = vector.load %arg1[%c2_170, %c0_171, %c0_172] : memref<6x72x64xf32, #tpu.memory_space<vmem>>, vector<1x72x64xf32>
    %205 = vector.shape_cast %204 : vector<1x72x64xf32> to vector<72x64xf32>
    %cst_173 = arith.constant dense<0.000000e+00> : vector<8x64xf32>
    %206 = tpu.matmul %195, %205, %cst_173 {dimension_numbers = #tpu.dot_dimension_numbers<[1], [0], [0], [1], [0, 0, 1, 1], [], []>} : vector<8x72xf32>, vector<72x64xf32>, vector<8x64xf32> -> vector<8x64xf32>
    %207 = arith.addf %203, %206 : vector<8x64xf32>
    %c4_174 = arith.constant 4 : index
    %c0_175 = arith.constant 0 : index
    %c0_176 = arith.constant 0 : index
    %208 = vector.load %arg1[%c4_174, %c0_175, %c0_176] : memref<6x72x64xf32, #tpu.memory_space<vmem>>, vector<1x72x64xf32>
    %209 = vector.shape_cast %208 : vector<1x72x64xf32> to vector<72x64xf32>
    %cst_177 = arith.constant dense<0.000000e+00> : vector<8x64xf32>
    %210 = tpu.matmul %196, %209, %cst_177 {dimension_numbers = #tpu.dot_dimension_numbers<[1], [0], [0], [1], [0, 0, 1, 1], [], []>} : vector<8x72xf32>, vector<72x64xf32>, vector<8x64xf32> -> vector<8x64xf32>
    %211 = arith.addf %207, %210 : vector<8x64xf32>
    %212 = vector.broadcast %198 : vector<1x64xf32> to vector<8x64xf32>
    %213 = arith.addf %211, %212 : vector<8x64xf32>
    %cst_178 = arith.constant 0.000000e+00 : f32
    %214 = vector.broadcast %cst_178 : f32 to vector<8x64xf32>
    %215 = arith.maximumf %213, %214 : vector<8x64xf32>
    %cst_179 = arith.constant 0.000000e+00 : f32
    %216 = vector.broadcast %cst_179 : f32 to vector<8x64xf32>
    %c1_180 = arith.constant 1 : index
    %c0_181 = arith.constant 0 : index
    %c0_182 = arith.constant 0 : index
    %217 = vector.load %arg1[%c1_180, %c0_181, %c0_182] : memref<6x72x64xf32, #tpu.memory_space<vmem>>, vector<1x72x64xf32>
    %218 = vector.shape_cast %217 : vector<1x72x64xf32> to vector<72x64xf32>
    %cst_183 = arith.constant dense<0.000000e+00> : vector<8x64xf32>
    %219 = tpu.matmul %194, %218, %cst_183 {dimension_numbers = #tpu.dot_dimension_numbers<[1], [0], [0], [1], [0, 0, 1, 1], [], []>} : vector<8x72xf32>, vector<72x64xf32>, vector<8x64xf32> -> vector<8x64xf32>
    %220 = arith.addf %216, %219 : vector<8x64xf32>
    %c3_184 = arith.constant 3 : index
    %c0_185 = arith.constant 0 : index
    %c0_186 = arith.constant 0 : index
    %221 = vector.load %arg1[%c3_184, %c0_185, %c0_186] : memref<6x72x64xf32, #tpu.memory_space<vmem>>, vector<1x72x64xf32>
    %222 = vector.shape_cast %221 : vector<1x72x64xf32> to vector<72x64xf32>
    %cst_187 = arith.constant dense<0.000000e+00> : vector<8x64xf32>
    %223 = tpu.matmul %195, %222, %cst_187 {dimension_numbers = #tpu.dot_dimension_numbers<[1], [0], [0], [1], [0, 0, 1, 1], [], []>} : vector<8x72xf32>, vector<72x64xf32>, vector<8x64xf32> -> vector<8x64xf32>
    %224 = arith.addf %220, %223 : vector<8x64xf32>
    %c5_188 = arith.constant 5 : index
    %c0_189 = arith.constant 0 : index
    %c0_190 = arith.constant 0 : index
    %225 = vector.load %arg1[%c5_188, %c0_189, %c0_190] : memref<6x72x64xf32, #tpu.memory_space<vmem>>, vector<1x72x64xf32>
    %226 = vector.shape_cast %225 : vector<1x72x64xf32> to vector<72x64xf32>
    %cst_191 = arith.constant dense<0.000000e+00> : vector<8x64xf32>
    %227 = tpu.matmul %196, %226, %cst_191 {dimension_numbers = #tpu.dot_dimension_numbers<[1], [0], [0], [1], [0, 0, 1, 1], [], []>} : vector<8x72xf32>, vector<72x64xf32>, vector<8x64xf32> -> vector<8x64xf32>
    %228 = arith.addf %224, %227 : vector<8x64xf32>
    %229 = vector.broadcast %198 : vector<1x64xf32> to vector<8x64xf32>
    %230 = arith.addf %228, %229 : vector<8x64xf32>
    %cst_192 = arith.constant 0.000000e+00 : f32
    %231 = vector.broadcast %cst_192 : f32 to vector<8x64xf32>
    %232 = arith.maximumf %230, %231 : vector<8x64xf32>
    %233 = arith.maximumf %215, %232 : vector<8x64xf32>
    %cst_193 = arith.constant 0.000000e+00 : f32
    %234 = vector.broadcast %cst_193 : f32 to vector<8x64xf32>
    %c0_194 = arith.constant 0 : index
    %c0_195 = arith.constant 0 : index
    %c0_196 = arith.constant 0 : index
    %235 = vector.load %arg1[%c0_194, %c0_195, %c0_196] : memref<6x72x64xf32, #tpu.memory_space<vmem>>, vector<1x72x64xf32>
    %236 = vector.shape_cast %235 : vector<1x72x64xf32> to vector<72x64xf32>
    %cst_197 = arith.constant dense<0.000000e+00> : vector<8x64xf32>
    %237 = tpu.matmul %195, %236, %cst_197 {dimension_numbers = #tpu.dot_dimension_numbers<[1], [0], [0], [1], [0, 0, 1, 1], [], []>} : vector<8x72xf32>, vector<72x64xf32>, vector<8x64xf32> -> vector<8x64xf32>
    %238 = arith.addf %234, %237 : vector<8x64xf32>
    %c2_198 = arith.constant 2 : index
    %c0_199 = arith.constant 0 : index
    %c0_200 = arith.constant 0 : index
    %239 = vector.load %arg1[%c2_198, %c0_199, %c0_200] : memref<6x72x64xf32, #tpu.memory_space<vmem>>, vector<1x72x64xf32>
    %240 = vector.shape_cast %239 : vector<1x72x64xf32> to vector<72x64xf32>
    %cst_201 = arith.constant dense<0.000000e+00> : vector<8x64xf32>
    %241 = tpu.matmul %196, %240, %cst_201 {dimension_numbers = #tpu.dot_dimension_numbers<[1], [0], [0], [1], [0, 0, 1, 1], [], []>} : vector<8x72xf32>, vector<72x64xf32>, vector<8x64xf32> -> vector<8x64xf32>
    %242 = arith.addf %238, %241 : vector<8x64xf32>
    %c4_202 = arith.constant 4 : index
    %c0_203 = arith.constant 0 : index
    %c0_204 = arith.constant 0 : index
    %243 = vector.load %arg1[%c4_202, %c0_203, %c0_204] : memref<6x72x64xf32, #tpu.memory_space<vmem>>, vector<1x72x64xf32>
    %244 = vector.shape_cast %243 : vector<1x72x64xf32> to vector<72x64xf32>
    %cst_205 = arith.constant dense<0.000000e+00> : vector<8x64xf32>
    %245 = tpu.matmul %197, %244, %cst_205 {dimension_numbers = #tpu.dot_dimension_numbers<[1], [0], [0], [1], [0, 0, 1, 1], [], []>} : vector<8x72xf32>, vector<72x64xf32>, vector<8x64xf32> -> vector<8x64xf32>
    %246 = arith.addf %242, %245 : vector<8x64xf32>
    %247 = vector.broadcast %198 : vector<1x64xf32> to vector<8x64xf32>
    %248 = arith.addf %246, %247 : vector<8x64xf32>
    %cst_206 = arith.constant 0.000000e+00 : f32
    %249 = vector.broadcast %cst_206 : f32 to vector<8x64xf32>
    %250 = arith.maximumf %248, %249 : vector<8x64xf32>
    %251 = arith.maximumf %233, %250 : vector<8x64xf32>
    %cst_207 = arith.constant 0.000000e+00 : f32
    %252 = vector.broadcast %cst_207 : f32 to vector<8x64xf32>
    %c1_208 = arith.constant 1 : index
    %c0_209 = arith.constant 0 : index
    %c0_210 = arith.constant 0 : index
    %253 = vector.load %arg1[%c1_208, %c0_209, %c0_210] : memref<6x72x64xf32, #tpu.memory_space<vmem>>, vector<1x72x64xf32>
    %254 = vector.shape_cast %253 : vector<1x72x64xf32> to vector<72x64xf32>
    %cst_211 = arith.constant dense<0.000000e+00> : vector<8x64xf32>
    %255 = tpu.matmul %195, %254, %cst_211 {dimension_numbers = #tpu.dot_dimension_numbers<[1], [0], [0], [1], [0, 0, 1, 1], [], []>} : vector<8x72xf32>, vector<72x64xf32>, vector<8x64xf32> -> vector<8x64xf32>
    %256 = arith.addf %252, %255 : vector<8x64xf32>
    %c3_212 = arith.constant 3 : index
    %c0_213 = arith.constant 0 : index
    %c0_214 = arith.constant 0 : index
    %257 = vector.load %arg1[%c3_212, %c0_213, %c0_214] : memref<6x72x64xf32, #tpu.memory_space<vmem>>, vector<1x72x64xf32>
    %258 = vector.shape_cast %257 : vector<1x72x64xf32> to vector<72x64xf32>
    %cst_215 = arith.constant dense<0.000000e+00> : vector<8x64xf32>
    %259 = tpu.matmul %196, %258, %cst_215 {dimension_numbers = #tpu.dot_dimension_numbers<[1], [0], [0], [1], [0, 0, 1, 1], [], []>} : vector<8x72xf32>, vector<72x64xf32>, vector<8x64xf32> -> vector<8x64xf32>
    %260 = arith.addf %256, %259 : vector<8x64xf32>
    %c5_216 = arith.constant 5 : index
    %c0_217 = arith.constant 0 : index
    %c0_218 = arith.constant 0 : index
    %261 = vector.load %arg1[%c5_216, %c0_217, %c0_218] : memref<6x72x64xf32, #tpu.memory_space<vmem>>, vector<1x72x64xf32>
    %262 = vector.shape_cast %261 : vector<1x72x64xf32> to vector<72x64xf32>
    %cst_219 = arith.constant dense<0.000000e+00> : vector<8x64xf32>
    %263 = tpu.matmul %197, %262, %cst_219 {dimension_numbers = #tpu.dot_dimension_numbers<[1], [0], [0], [1], [0, 0, 1, 1], [], []>} : vector<8x72xf32>, vector<72x64xf32>, vector<8x64xf32> -> vector<8x64xf32>
    %264 = arith.addf %260, %263 : vector<8x64xf32>
    %265 = vector.broadcast %198 : vector<1x64xf32> to vector<8x64xf32>
    %266 = arith.addf %264, %265 : vector<8x64xf32>
    %cst_220 = arith.constant 0.000000e+00 : f32
    %267 = vector.broadcast %cst_220 : f32 to vector<8x64xf32>
    %268 = arith.maximumf %266, %267 : vector<8x64xf32>
    %269 = arith.maximumf %251, %268 : vector<8x64xf32>
    %c11 = arith.constant 11 : index
    %c8_221 = arith.constant 8 : index
    %270 = vector.load %arg13[%c11, %c8_221] : memref<20x80xf32, #tpu.memory_space<vmem>>, vector<8x64xf32>
    tpu.vector_store %arg13[%c11, %c8_221], %269 {strides = array<i32>} : memref<20x80xf32, #tpu.memory_space<vmem>>, vector<8x64xf32>,
    %c10 = arith.constant 10 : index
    %c0_222 = arith.constant 0 : index
    %271 = tpu.strided_load %arg13[%c10, %c0_222] {strides = array<i32: 2, 1>} : memref<20x80xf32, #tpu.memory_space<vmem>>, vector<4x80xf32>
    %c11_223 = arith.constant 11 : index
    %c0_224 = arith.constant 0 : index
    %272 = tpu.strided_load %arg13[%c11_223, %c0_224] {strides = array<i32: 2, 1>} : memref<20x80xf32, #tpu.memory_space<vmem>>, vector<4x80xf32>
    %c12 = arith.constant 12 : index
    %c0_225 = arith.constant 0 : index
    %273 = tpu.strided_load %arg13[%c12, %c0_225] {strides = array<i32: 2, 1>} : memref<20x80xf32, #tpu.memory_space<vmem>>, vector<4x80xf32>
    %c13 = arith.constant 13 : index
    %c0_226 = arith.constant 0 : index
    %274 = tpu.strided_load %arg13[%c13, %c0_226] {strides = array<i32: 2, 1>} : memref<20x80xf32, #tpu.memory_space<vmem>>, vector<4x80xf32>
    %c0_227 = arith.constant 0 : index
    %c0_228 = arith.constant 0 : index
    %275 = vector.load %arg4[%c0_227, %c0_228] : memref<1x64xf32, #tpu.memory_space<vmem>>, vector<1x64xf32>
    %cst_229 = arith.constant 0.000000e+00 : f32
    %276 = vector.broadcast %cst_229 : f32 to vector<4x64xf32>
    %c0_230 = arith.constant 0 : index
    %c0_231 = arith.constant 0 : index
    %c0_232 = arith.constant 0 : index
    %277 = vector.load %arg3[%c0_230, %c0_231, %c0_232] : memref<6x80x64xf32, #tpu.memory_space<vmem>>, vector<1x80x64xf32>
    %278 = vector.shape_cast %277 : vector<1x80x64xf32> to vector<80x64xf32>
    %cst_233 = arith.constant dense<0.000000e+00> : vector<4x64xf32>
    %279 = tpu.matmul %271, %278, %cst_233 {dimension_numbers = #tpu.dot_dimension_numbers<[1], [0], [0], [1], [0, 0, 1, 1], [], []>} : vector<4x80xf32>, vector<80x64xf32>, vector<4x64xf32> -> vector<4x64xf32>
    %280 = arith.addf %276, %279 : vector<4x64xf32>
    %c2_234 = arith.constant 2 : index
    %c0_235 = arith.constant 0 : index
    %c0_236 = arith.constant 0 : index
    %281 = vector.load %arg3[%c2_234, %c0_235, %c0_236] : memref<6x80x64xf32, #tpu.memory_space<vmem>>, vector<1x80x64xf32>
    %282 = vector.shape_cast %281 : vector<1x80x64xf32> to vector<80x64xf32>
    %cst_237 = arith.constant dense<0.000000e+00> : vector<4x64xf32>
    %283 = tpu.matmul %272, %282, %cst_237 {dimension_numbers = #tpu.dot_dimension_numbers<[1], [0], [0], [1], [0, 0, 1, 1], [], []>} : vector<4x80xf32>, vector<80x64xf32>, vector<4x64xf32> -> vector<4x64xf32>
    %284 = arith.addf %280, %283 : vector<4x64xf32>
    %c4_238 = arith.constant 4 : index
    %c0_239 = arith.constant 0 : index
    %c0_240 = arith.constant 0 : index
    %285 = vector.load %arg3[%c4_238, %c0_239, %c0_240] : memref<6x80x64xf32, #tpu.memory_space<vmem>>, vector<1x80x64xf32>
    %286 = vector.shape_cast %285 : vector<1x80x64xf32> to vector<80x64xf32>
    %cst_241 = arith.constant dense<0.000000e+00> : vector<4x64xf32>
    %287 = tpu.matmul %273, %286, %cst_241 {dimension_numbers = #tpu.dot_dimension_numbers<[1], [0], [0], [1], [0, 0, 1, 1], [], []>} : vector<4x80xf32>, vector<80x64xf32>, vector<4x64xf32> -> vector<4x64xf32>
    %288 = arith.addf %284, %287 : vector<4x64xf32>
    %289 = vector.broadcast %275 : vector<1x64xf32> to vector<4x64xf32>
    %290 = arith.addf %288, %289 : vector<4x64xf32>
    %cst_242 = arith.constant 0.000000e+00 : f32
    %291 = vector.broadcast %cst_242 : f32 to vector<4x64xf32>
    %292 = arith.maximumf %290, %291 : vector<4x64xf32>
    %cst_243 = arith.constant 0.000000e+00 : f32
    %293 = vector.broadcast %cst_243 : f32 to vector<4x64xf32>
    %c1_244 = arith.constant 1 : index
    %c0_245 = arith.constant 0 : index
    %c0_246 = arith.constant 0 : index
    %294 = vector.load %arg3[%c1_244, %c0_245, %c0_246] : memref<6x80x64xf32, #tpu.memory_space<vmem>>, vector<1x80x64xf32>
    %295 = vector.shape_cast %294 : vector<1x80x64xf32> to vector<80x64xf32>
    %cst_247 = arith.constant dense<0.000000e+00> : vector<4x64xf32>
    %296 = tpu.matmul %271, %295, %cst_247 {dimension_numbers = #tpu.dot_dimension_numbers<[1], [0], [0], [1], [0, 0, 1, 1], [], []>} : vector<4x80xf32>, vector<80x64xf32>, vector<4x64xf32> -> vector<4x64xf32>
    %297 = arith.addf %293, %296 : vector<4x64xf32>
    %c3_248 = arith.constant 3 : index
    %c0_249 = arith.constant 0 : index
    %c0_250 = arith.constant 0 : index
    %298 = vector.load %arg3[%c3_248, %c0_249, %c0_250] : memref<6x80x64xf32, #tpu.memory_space<vmem>>, vector<1x80x64xf32>
    %299 = vector.shape_cast %298 : vector<1x80x64xf32> to vector<80x64xf32>
    %cst_251 = arith.constant dense<0.000000e+00> : vector<4x64xf32>
    %300 = tpu.matmul %272, %299, %cst_251 {dimension_numbers = #tpu.dot_dimension_numbers<[1], [0], [0], [1], [0, 0, 1, 1], [], []>} : vector<4x80xf32>, vector<80x64xf32>, vector<4x64xf32> -> vector<4x64xf32>
    %301 = arith.addf %297, %300 : vector<4x64xf32>
    %c5_252 = arith.constant 5 : index
    %c0_253 = arith.constant 0 : index
    %c0_254 = arith.constant 0 : index
    %302 = vector.load %arg3[%c5_252, %c0_253, %c0_254] : memref<6x80x64xf32, #tpu.memory_space<vmem>>, vector<1x80x64xf32>
    %303 = vector.shape_cast %302 : vector<1x80x64xf32> to vector<80x64xf32>
    %cst_255 = arith.constant dense<0.000000e+00> : vector<4x64xf32>
    %304 = tpu.matmul %273, %303, %cst_255 {dimension_numbers = #tpu.dot_dimension_numbers<[1], [0], [0], [1], [0, 0, 1, 1], [], []>} : vector<4x80xf32>, vector<80x64xf32>, vector<4x64xf32> -> vector<4x64xf32>
    %305 = arith.addf %301, %304 : vector<4x64xf32>
    %306 = vector.broadcast %275 : vector<1x64xf32> to vector<4x64xf32>
    %307 = arith.addf %305, %306 : vector<4x64xf32>
    %cst_256 = arith.constant 0.000000e+00 : f32
    %308 = vector.broadcast %cst_256 : f32 to vector<4x64xf32>
    %309 = arith.maximumf %307, %308 : vector<4x64xf32>
    %310 = arith.maximumf %292, %309 : vector<4x64xf32>
    %cst_257 = arith.constant 0.000000e+00 : f32
    %311 = vector.broadcast %cst_257 : f32 to vector<4x64xf32>
    %c0_258 = arith.constant 0 : index
    %c0_259 = arith.constant 0 : index
    %c0_260 = arith.constant 0 : index
    %312 = vector.load %arg3[%c0_258, %c0_259, %c0_260] : memref<6x80x64xf32, #tpu.memory_space<vmem>>, vector<1x80x64xf32>
    %313 = vector.shape_cast %312 : vector<1x80x64xf32> to vector<80x64xf32>
    %cst_261 = arith.constant dense<0.000000e+00> : vector<4x64xf32>
    %314 = tpu.matmul %272, %313, %cst_261 {dimension_numbers = #tpu.dot_dimension_numbers<[1], [0], [0], [1], [0, 0, 1, 1], [], []>} : vector<4x80xf32>, vector<80x64xf32>, vector<4x64xf32> -> vector<4x64xf32>
    %315 = arith.addf %311, %314 : vector<4x64xf32>
    %c2_262 = arith.constant 2 : index
    %c0_263 = arith.constant 0 : index
    %c0_264 = arith.constant 0 : index
    %316 = vector.load %arg3[%c2_262, %c0_263, %c0_264] : memref<6x80x64xf32, #tpu.memory_space<vmem>>, vector<1x80x64xf32>
    %317 = vector.shape_cast %316 : vector<1x80x64xf32> to vector<80x64xf32>
    %cst_265 = arith.constant dense<0.000000e+00> : vector<4x64xf32>
    %318 = tpu.matmul %273, %317, %cst_265 {dimension_numbers = #tpu.dot_dimension_numbers<[1], [0], [0], [1], [0, 0, 1, 1], [], []>} : vector<4x80xf32>, vector<80x64xf32>, vector<4x64xf32> -> vector<4x64xf32>
    %319 = arith.addf %315, %318 : vector<4x64xf32>
    %c4_266 = arith.constant 4 : index
    %c0_267 = arith.constant 0 : index
    %c0_268 = arith.constant 0 : index
    %320 = vector.load %arg3[%c4_266, %c0_267, %c0_268] : memref<6x80x64xf32, #tpu.memory_space<vmem>>, vector<1x80x64xf32>
    %321 = vector.shape_cast %320 : vector<1x80x64xf32> to vector<80x64xf32>
    %cst_269 = arith.constant dense<0.000000e+00> : vector<4x64xf32>
    %322 = tpu.matmul %274, %321, %cst_269 {dimension_numbers = #tpu.dot_dimension_numbers<[1], [0], [0], [1], [0, 0, 1, 1], [], []>} : vector<4x80xf32>, vector<80x64xf32>, vector<4x64xf32> -> vector<4x64xf32>
    %323 = arith.addf %319, %322 : vector<4x64xf32>
    %324 = vector.broadcast %275 : vector<1x64xf32> to vector<4x64xf32>
    %325 = arith.addf %323, %324 : vector<4x64xf32>
    %cst_270 = arith.constant 0.000000e+00 : f32
    %326 = vector.broadcast %cst_270 : f32 to vector<4x64xf32>
    %327 = arith.maximumf %325, %326 : vector<4x64xf32>
    %328 = arith.maximumf %310, %327 : vector<4x64xf32>
    %cst_271 = arith.constant 0.000000e+00 : f32
    %329 = vector.broadcast %cst_271 : f32 to vector<4x64xf32>
    %c1_272 = arith.constant 1 : index
    %c0_273 = arith.constant 0 : index
    %c0_274 = arith.constant 0 : index
    %330 = vector.load %arg3[%c1_272, %c0_273, %c0_274] : memref<6x80x64xf32, #tpu.memory_space<vmem>>, vector<1x80x64xf32>
    %331 = vector.shape_cast %330 : vector<1x80x64xf32> to vector<80x64xf32>
    %cst_275 = arith.constant dense<0.000000e+00> : vector<4x64xf32>
    %332 = tpu.matmul %272, %331, %cst_275 {dimension_numbers = #tpu.dot_dimension_numbers<[1], [0], [0], [1], [0, 0, 1, 1], [], []>} : vector<4x80xf32>, vector<80x64xf32>, vector<4x64xf32> -> vector<4x64xf32>
    %333 = arith.addf %329, %332 : vector<4x64xf32>
    %c3_276 = arith.constant 3 : index
    %c0_277 = arith.constant 0 : index
    %c0_278 = arith.constant 0 : index
    %334 = vector.load %arg3[%c3_276, %c0_277, %c0_278] : memref<6x80x64xf32, #tpu.memory_space<vmem>>, vector<1x80x64xf32>
    %335 = vector.shape_cast %334 : vector<1x80x64xf32> to vector<80x64xf32>
    %cst_279 = arith.constant dense<0.000000e+00> : vector<4x64xf32>
    %336 = tpu.matmul %273, %335, %cst_279 {dimension_numbers = #tpu.dot_dimension_numbers<[1], [0], [0], [1], [0, 0, 1, 1], [], []>} : vector<4x80xf32>, vector<80x64xf32>, vector<4x64xf32> -> vector<4x64xf32>
    %337 = arith.addf %333, %336 : vector<4x64xf32>
    %c5_280 = arith.constant 5 : index
    %c0_281 = arith.constant 0 : index
    %c0_282 = arith.constant 0 : index
    %338 = vector.load %arg3[%c5_280, %c0_281, %c0_282] : memref<6x80x64xf32, #tpu.memory_space<vmem>>, vector<1x80x64xf32>
    %339 = vector.shape_cast %338 : vector<1x80x64xf32> to vector<80x64xf32>
    %cst_283 = arith.constant dense<0.000000e+00> : vector<4x64xf32>
    %340 = tpu.matmul %274, %339, %cst_283 {dimension_numbers = #tpu.dot_dimension_numbers<[1], [0], [0], [1], [0, 0, 1, 1], [], []>} : vector<4x80xf32>, vector<80x64xf32>, vector<4x64xf32> -> vector<4x64xf32>
    %341 = arith.addf %337, %340 : vector<4x64xf32>
    %342 = vector.broadcast %275 : vector<1x64xf32> to vector<4x64xf32>
    %343 = arith.addf %341, %342 : vector<4x64xf32>
    %cst_284 = arith.constant 0.000000e+00 : f32
    %344 = vector.broadcast %cst_284 : f32 to vector<4x64xf32>
    %345 = arith.maximumf %343, %344 : vector<4x64xf32>
    %346 = arith.maximumf %328, %345 : vector<4x64xf32>
    %c0_285 = arith.constant 0 : index
    %c0_286 = arith.constant 0 : index
    %347 = vector.load %arg6[%c0_285, %c0_286] : memref<1x64xf32, #tpu.memory_space<vmem>>, vector<1x64xf32>
    %348 = vector.extract_strided_slice %346 {offsets = [0, 0], sizes = [1, 64], strides = [1, 1]} : vector<4x64xf32> to vector<1x64xf32>
    %c0_287 = arith.constant 0 : index
    %c0_288 = arith.constant 0 : index
    %349 = vector.load %arg5[%c0_287, %c0_288] : memref<256x64xf32, #tpu.memory_space<vmem>>, vector<64x64xf32>
    %cst_289 = arith.constant dense<0.000000e+00> : vector<1x64xf32>
    %350 = tpu.matmul %348, %349, %cst_289 {dimension_numbers = #tpu.dot_dimension_numbers<[1], [0], [0], [1], [0, 0, 1, 1], [], []>} : vector<1x64xf32>, vector<64x64xf32>, vector<1x64xf32> -> vector<1x64xf32>
    %351 = arith.addf %347, %350 : vector<1x64xf32>
    %352 = vector.extract_strided_slice %346 {offsets = [1, 0], sizes = [1, 64], strides = [1, 1]} : vector<4x64xf32> to vector<1x64xf32>
    %c64_290 = arith.constant 64 : index
    %c0_291 = arith.constant 0 : index
    %353 = vector.load %arg5[%c64_290, %c0_291] : memref<256x64xf32, #tpu.memory_space<vmem>>, vector<64x64xf32>
    %cst_292 = arith.constant dense<0.000000e+00> : vector<1x64xf32>
    %354 = tpu.matmul %352, %353, %cst_292 {dimension_numbers = #tpu.dot_dimension_numbers<[1], [0], [0], [1], [0, 0, 1, 1], [], []>} : vector<1x64xf32>, vector<64x64xf32>, vector<1x64xf32> -> vector<1x64xf32>
    %355 = arith.addf %351, %354 : vector<1x64xf32>
    %356 = vector.extract_strided_slice %346 {offsets = [2, 0], sizes = [1, 64], strides = [1, 1]} : vector<4x64xf32> to vector<1x64xf32>
    %c128_293 = arith.constant 128 : index
    %c0_294 = arith.constant 0 : index
    %357 = vector.load %arg5[%c128_293, %c0_294] : memref<256x64xf32, #tpu.memory_space<vmem>>, vector<64x64xf32>
    %cst_295 = arith.constant dense<0.000000e+00> : vector<1x64xf32>
    %358 = tpu.matmul %356, %357, %cst_295 {dimension_numbers = #tpu.dot_dimension_numbers<[1], [0], [0], [1], [0, 0, 1, 1], [], []>} : vector<1x64xf32>, vector<64x64xf32>, vector<1x64xf32> -> vector<1x64xf32>
    %359 = arith.addf %355, %358 : vector<1x64xf32>
    %360 = vector.extract_strided_slice %346 {offsets = [3, 0], sizes = [1, 64], strides = [1, 1]} : vector<4x64xf32> to vector<1x64xf32>
    %c192_296 = arith.constant 192 : index
    %c0_297 = arith.constant 0 : index
    %361 = vector.load %arg5[%c192_296, %c0_297] : memref<256x64xf32, #tpu.memory_space<vmem>>, vector<64x64xf32>
    %cst_298 = arith.constant dense<0.000000e+00> : vector<1x64xf32>
    %362 = tpu.matmul %360, %361, %cst_298 {dimension_numbers = #tpu.dot_dimension_numbers<[1], [0], [0], [1], [0, 0, 1, 1], [], []>} : vector<1x64xf32>, vector<64x64xf32>, vector<1x64xf32> -> vector<1x64xf32>
    %363 = arith.addf %359, %362 : vector<1x64xf32>
    %cst_299 = arith.constant 0.000000e+00 : f32
    %364 = vector.broadcast %cst_299 : f32 to vector<1x64xf32>
    %365 = arith.maximumf %363, %364 : vector<1x64xf32>
    %c0_300 = arith.constant 0 : index
    %c0_301 = arith.constant 0 : index
    %366 = vector.load %arg7[%c0_300, %c0_301] : memref<64x32xf32, #tpu.memory_space<vmem>>, vector<64x32xf32>
    %cst_302 = arith.constant dense<0.000000e+00> : vector<1x32xf32>
    %367 = tpu.matmul %365, %366, %cst_302 {dimension_numbers = #tpu.dot_dimension_numbers<[1], [0], [0], [1], [0, 0, 1, 1], [], []>} : vector<1x64xf32>, vector<64x32xf32>, vector<1x32xf32> -> vector<1x32xf32>
    %c0_303 = arith.constant 0 : index
    %c0_304 = arith.constant 0 : index
    %368 = vector.load %arg8[%c0_303, %c0_304] : memref<1x32xf32, #tpu.memory_space<vmem>>, vector<1x32xf32>
    %369 = arith.addf %367, %368 : vector<1x32xf32>
    %cst_305 = arith.constant 0.000000e+00 : f32
    %370 = vector.broadcast %cst_305 : f32 to vector<1x32xf32>
    %371 = arith.maximumf %369, %370 : vector<1x32xf32>
    %c0_306 = arith.constant 0 : index
    %c0_307 = arith.constant 0 : index
    %372 = vector.load %arg9[%c0_306, %c0_307] : memref<32x26xf32, #tpu.memory_space<vmem>>, vector<32x26xf32>
    %cst_308 = arith.constant dense<0.000000e+00> : vector<1x26xf32>
    %373 = tpu.matmul %371, %372, %cst_308 {dimension_numbers = #tpu.dot_dimension_numbers<[1], [0], [0], [1], [0, 0, 1, 1], [], []>} : vector<1x32xf32>, vector<32x26xf32>, vector<1x26xf32> -> vector<1x26xf32>
    %c0_309 = arith.constant 0 : index
    %c0_310 = arith.constant 0 : index
    %374 = vector.load %arg10[%c0_309, %c0_310] : memref<1x26xf32, #tpu.memory_space<vmem>>, vector<1x26xf32>
    %375 = arith.addf %373, %374 : vector<1x26xf32>
    %cst_311 = arith.constant 0.000000e+00 : f32
    %376 = vector.broadcast %cst_311 : f32 to vector<1x26xf32>
    %377 = arith.subf %376, %375 : vector<1x26xf32>
    %378 = math.exp %377 : vector<1x26xf32>
    %cst_312 = arith.constant 1.000000e+00 : f32
    %379 = vector.broadcast %cst_312 : f32 to vector<1x26xf32>
    %380 = arith.addf %379, %378 : vector<1x26xf32>
    %cst_313 = arith.constant 1.000000e+00 : f32
    %381 = vector.broadcast %cst_313 : f32 to vector<1x26xf32>
    %382 = arith.divf %381, %380 : vector<1x26xf32>
    %c0_314 = arith.constant 0 : index
    %c0_315 = arith.constant 0 : index
    %383 = vector.load %arg11[%c0_314, %c0_315] : memref<1x26xf32, #tpu.memory_space<vmem>>, vector<1x26xf32>
    %384 = arith.mulf %382, %383 : vector<1x26xf32>
    %c1_316 = arith.constant 1 : index
    %c0_317 = arith.constant 0 : index
    %385 = vector.load %arg12[%c1_316, %c0_317] : memref<2x26xf32, #tpu.memory_space<vmem>>, vector<1x26xf32>
    tpu.vector_store %arg12[%c1_316, %c0_317], %384 {strides = array<i32>} : memref<2x26xf32, #tpu.memory_space<vmem>>, vector<1x26xf32>,
    return
  }
}

</mosaic_0001>

<llo_original>
// kernel: a_call__.1
$region0: #{a_call__.1}
  #allocation0 [shape = 'u32[]', space=smem, size = 0x4, offset = 0x4, fixed_abs, tag = 'smem constant byte address 0x4 - core index']
  #allocation1 [shape = 'u32[144,128]{1,0:T(1,128)}', space=vmem, size = 0x12000, scoped, tag = 'internal scratch']
  #allocation2 [shape = 'f32[20,80]{1,0:T(8,128)}', space=vmem, size = 0x3000, scoped, tag = 'scratch operand']
  %s0 = inlined_call_operand.vmem [shape: f32[36,72], index: 0, kind: input, shape index: {}]
  %s1 = inlined_call_operand.hbm [shape: f32[6,72,64], index: 1, kind: input, shape index: {}]
  %s2 = inlined_call_operand.vmem [shape: f32[1,64], index: 2, kind: input, shape index: {}]
  %s3 = inlined_call_operand.vmem [shape: f32[6,80,64], index: 3, kind: input, shape index: {}]
  %s4 = inlined_call_operand.vmem [shape: f32[1,64], index: 4, kind: input, shape index: {}]
  %s5 = inlined_call_operand.vmem [shape: f32[256,64], index: 5, kind: input, shape index: {}]
  %s6 = inlined_call_operand.vmem [shape: f32[1,64], index: 6, kind: input, shape index: {}]
  %s7 = inlined_call_operand.vmem [shape: f32[64,32], index: 7, kind: input, shape index: {}]
  %s8 = inlined_call_operand.vmem [shape: f32[1,32], index: 8, kind: input, shape index: {}]
  %s9 = inlined_call_operand.vmem [shape: f32[32,26], index: 9, kind: input, shape index: {}]
  %s10 = inlined_call_operand.vmem [shape: f32[1,26], index: 10, kind: input, shape index: {}]
  %s11 = inlined_call_operand.vmem [shape: f32[1,26], index: 11, kind: input, shape index: {}]
  %s12 = inlined_call_operand.vmem [shape: f32[2,26], index: 12, kind: output, shape index: {}]
  %s13 = sld [smem:[#allocation0]]
  $region62: #{a_call__.1} parent=0
    _
  %s15 = ssub.s32 1, %s13
  %s16 = scalar_select 0, %s15, %s13
  $region1: #{a_call__.1} parent=0
    #allocation3 [shape = 'u8[221184]{0}', space=vmem, size = 0x36000, scoped, tag = 'input window, operand 1, single buffered']
    #allocation4 [shape = 's32[1]{0}', space=sflag, size = 0x4, scoped, tag = 'scoped memory for a_call__.1']
    %17 = vsyncpa [#allocation4], 0
    // Predicated region
    $region2: #{a_call__.1} parent=1 // pred_check
      _
    $region3: #{a_call__.1} parent=1 // pred_check_branch
      %19 = sbr.rel (0) target = $region5
    $region4: #{a_call__.1} parent=1 // pred_region
      _
    $region5: #{a_call__.1} parent=1 // pred_fallthru
      _
    // Predicated region
    $region6: #{a_call__.1} parent=1 // pred_check
      _
    $region7: #{a_call__.1} parent=1 // pred_check_branch
      %21 = sbr.rel (0) target = $region9
    $region8: #{a_call__.1} parent=1 // pred_region
      %s23 = ssub.s32 6912, 6912
      %24 = vsyncadd [#allocation4], %s23
      %s25 = sshll.u32 [#allocation3], 4
      %s26 = int_to_ptr.vmem [resolvable:$true] %s25
      %31 = dma.hbm_to_vmem [thread:$0]  %s1, 6912, %s26, [#allocation4], 128, 128, 8
    $region9: #{a_call__.1} parent=1 // pred_fallthru
      _
    // Predicated region
    $region10: #{a_call__.1} parent=1 // pred_check
      _
    $region11: #{a_call__.1} parent=1 // pred_check_branch
      %33 = sbr.rel (0) target = $region13
    $region12: #{a_call__.1} parent=1 // pred_region
      _
    $region13: #{a_call__.1} parent=1 // pred_fallthru
      _
    // Predicated region
    $region14: #{a_call__.1} parent=1 // pred_check
      _
    $region15: #{a_call__.1} parent=1 // pred_check_branch
      %35 = sbr.rel (0) target = $region17
    $region16: #{a_call__.1} parent=1 // pred_region
      _
    $region17: #{a_call__.1} parent=1 // pred_fallthru
      _
    // Predicated region
    $region18: #{a_call__.1} parent=1 // pred_check
      _
    $region19: #{a_call__.1} parent=1 // pred_check_branch
      %37 = sbr.rel (0) target = $region21
    $region20: #{a_call__.1} parent=1 // pred_region
      _
    $region21: #{a_call__.1} parent=1 // pred_fallthru
      _
    // Predicated region
    $region22: #{a_call__.1} parent=1 // pred_check
      _
    $region23: #{a_call__.1} parent=1 // pred_check_branch
      %39 = sbr.rel (0) target = $region25
    $region24: #{a_call__.1} parent=1 // pred_region
      _
    $region25: #{a_call__.1} parent=1 // pred_fallthru
      _
    // Predicated region
    $region26: #{a_call__.1} parent=1 // pred_check
      _
    $region27: #{a_call__.1} parent=1 // pred_check_branch
      %41 = sbr.rel (0) target = $region29
    $region28: #{a_call__.1} parent=1 // pred_region
      _
    $region29: #{a_call__.1} parent=1 // pred_fallthru
      _
    // Predicated region
    $region30: #{a_call__.1} parent=1 // pred_check
      _
    $region31: #{a_call__.1} parent=1 // pred_check_branch
      %43 = sbr.rel (0) target = $region33
    $region32: #{a_call__.1} parent=1 // pred_region
      _
    $region33: #{a_call__.1} parent=1 // pred_fallthru
      _
    // Predicated region
    $region34: #{a_call__.1} parent=1 // pred_check
      _
    $region35: #{a_call__.1} parent=1 // pred_check_branch
      %45 = sbr.rel (0) target = $region37
    $region36: #{a_call__.1} parent=1 // pred_region
      _
    $region37: #{a_call__.1} parent=1 // pred_fallthru
      _
    // Predicated region
    $region38: #{a_call__.1} parent=1 // pred_check
      _
    $region39: #{a_call__.1} parent=1 // pred_check_branch
      %47 = sbr.rel (0) target = $region41
    $region40: #{a_call__.1} parent=1 // pred_region
      _
    $region41: #{a_call__.1} parent=1 // pred_fallthru
      _
    // Predicated region
    $region42: #{a_call__.1} parent=1 // pred_check
      _
    $region43: #{a_call__.1} parent=1 // pred_check_branch
      %49 = sbr.rel (0) target = $region45
    $region44: #{a_call__.1} parent=1 // pred_region
      _
    $region45: #{a_call__.1} parent=1 // pred_fallthru
      _
    // Predicated region
    $region46: #{a_call__.1} parent=1 // pred_check
      _
    $region47: #{a_call__.1} parent=1 // pred_check_branch
      %51 = sbr.rel (0) target = $region49
    $region48: #{a_call__.1} parent=1 // pred_region
      _
    $region49: #{a_call__.1} parent=1 // pred_fallthru
      _
    // Predicated region
    $region50: #{a_call__.1} parent=1 // pred_check
      _
    $region51: #{a_call__.1} parent=1 // pred_check_branch
      %53 = sbr.rel (0) target = $region53
    $region52: #{a_call__.1} parent=1 // pred_region
      %54 = dma.done [#allocation4], 6912
    $region53: #{a_call__.1} parent=1 // pred_fallthru
      _
    %vm55 = vcmask 654336
    %56 = vst.msk [vmem:[#allocation2] sm:$0xff] %vm55, 0.0
    %57 = vst.msk [vmem:[#allocation2 + $0x8] sm:$0xff] %vm55, 0.0
    %vm58 = vcmask 650240
    %59 = vst.msk [vmem:[#allocation2 + $0x10] sm:$0xf] %vm58, 0.0
    %v60 = vld [vmem:[%s0] ss:$2 sm:$0xff]
    %s61 = scalar_lea.vmem %s0, 1
    %v62 = vld [vmem:[%s61] ss:$2 sm:$0xff]
    %s63 = scalar_lea.vmem %s0, 2
    %v64 = vld [vmem:[%s63] ss:$2 sm:$0xff]
    %s65 = scalar_lea.vmem %s0, 3
    %v66 = vld [vmem:[%s65] ss:$2 sm:$0xff]
    %v67 = vld [vmem:[%s2] sm:$0x1]
    %v68 = vld [vmem:[#allocation3] sm:$0xff]
    %v69 = vld [vmem:[#allocation3 + $0x8] sm:$0xff]
    %v70 = vld [vmem:[#allocation3 + $0x10] sm:$0xff]
    %v71 = vld [vmem:[#allocation3 + $0x18] sm:$0xff]
    %v72 = vld [vmem:[#allocation3 + $0x20] sm:$0xff]
    %v73 = vld [vmem:[#allocation3 + $0x28] sm:$0xff]
    %v74 = vld [vmem:[#allocation3 + $0x30] sm:$0xff]
    %v75 = vld [vmem:[#allocation3 + $0x38] sm:$0xff]
    %v76 = vld [vmem:[#allocation3 + $0x40] sm:$0xff]
    %s77 = scalar_lea.vmem [#allocation3], 144
    %v78 = vld [vmem:[%s77] sm:$0xff]
    %v79 = vld [vmem:[%s77 + $0x8] sm:$0xff]
    %v80 = vld [vmem:[%s77 + $0x10] sm:$0xff]
    %v81 = vld [vmem:[%s77 + $0x18] sm:$0xff]
    %v82 = vld [vmem:[%s77 + $0x20] sm:$0xff]
    %v83 = vld [vmem:[%s77 + $0x28] sm:$0xff]
    %v84 = vld [vmem:[%s77 + $0x30] sm:$0xff]
    %v85 = vld [vmem:[%s77 + $0x38] sm:$0xff]
    %v86 = vld [vmem:[%s77 + $0x40] sm:$0xff]
    %vm87 = vcmask 588800
    %v89 = vsel %vm87, %v62, 0
    %91 = vmatprep.subr.mxu0 0.0
    %92 = vmatpush1.msra.mxu0 0.0
    %93 = vmatprep.subr.mxu0 0.0
    %94 = vmatpush1.msra.mxu0 0.0
    %95 = vmatprep.subr.mxu0 0.0
    %96 = vmatpush1.msra.mxu0 0.0
    %97 = vmatprep.subr.mxu0 0.0
    %98 = vmatpush1.msra.mxu0 0.0
    %99 = vmatprep.subr.mxu0 0.0
    %100 = vmatpush1.msra.mxu0 0.0
    %101 = vmatprep.subr.mxu0 0.0
    %102 = vmatpush1.msra.mxu0 0.0
    %103 = vmatprep.subr.mxu0 0.0
    %104 = vmatpush1.msra.mxu0 0.0
    %105 = vmatprep.subr.mxu0 0.0
    %106 = vmatpush1.msra.mxu0 %v86
    %107 = vmatprep.subr.mxu0 0.0
    %108 = vmatpush1.msra.mxu0 %v85
    %109 = vmatprep.subr.mxu0 0.0
    %110 = vmatpush1.msra.mxu0 %v84
    %111 = vmatprep.subr.mxu0 0.0
    %112 = vmatpush1.msra.mxu0 %v83
    %113 = vmatprep.subr.mxu0 0.0
    %114 = vmatpush1.msra.mxu0 %v82
    %115 = vmatprep.subr.mxu0 0.0
    %116 = vmatpush1.msra.mxu0 %v81
    %117 = vmatprep.subr.mxu0 0.0
    %118 = vmatpush1.msra.mxu0 %v80
    %119 = vmatprep.subr.mxu0 0.0
    %120 = vmatpush1.msra.mxu0 %v79
    %121 = vmatprep.subr.mxu0 0.0
    %122 = vmatpush1.msra.mxu0 %v78
    %123 = vmatprep.subr.mxu0 0.0
    %124 = vmatpush2.msra.mxu0 0.0
    %125 = vmatprep.subr.mxu0 0.0
    %126 = vmatpush2.msra.mxu0 0.0
    %127 = vmatprep.subr.mxu0 0.0
    %128 = vmatpush2.msra.mxu0 0.0
    %129 = vmatprep.subr.mxu0 0.0
    %130 = vmatpush2.msra.mxu0 0.0
    %131 = vmatprep.subr.mxu0 0.0
    %132 = vmatpush2.msra.mxu0 0.0
    %133 = vmatprep.subr.mxu0 0.0
    %134 = vmatpush2.msra.mxu0 0.0
    %135 = vmatprep.subr.mxu0 0.0
    %136 = vmatpush2.msra.mxu0 0.0
    %137 = vmatprep.subr.mxu0 0.0
    %138 = vmatpush2.msra.mxu0 0.0
    %139 = vmatprep.subr.mxu0 0.0
    %140 = vmatpush2.msra.mxu0 0.0
    %141 = vmatprep.subr.mxu0 0.0
    %142 = vmatpush2.msra.mxu0 0.0
    %143 = vmatprep.subr.mxu0 0.0
    %144 = vmatpush2.msra.mxu0 0.0
    %145 = vmatprep.subr.mxu0 0.0
    %146 = vmatpush2.msra.mxu0 0.0
    %147 = vmatprep.subr.mxu0 0.0
    %148 = vmatpush2.msra.mxu0 0.0
    %149 = vmatprep.subr.mxu0 0.0
    %150 = vmatpush2.msra.mxu0 0.0
    %151 = vmatprep.subr.mxu0 0.0
    %152 = vmatpush2.msra.mxu0 0.0
    %153 = vmatprep.subr.mxu0 0.0
    %154 = vmatpush2.msra.mxu0 0.0
    %155 = vmatprep.mubr.f32.mxu0 0.0
    %156 = vmatmul.mubr.f32.gmra.mxu0 %v89
    %v157 = vpop.f32.mrf.mxu0
    %v158 = vadd.f32 0.0, %v157
    %v159 = vpop.f32.mrf.mxu0
    %160 = vdwg.mxu0
    %v162 = vsel %vm87, %v60, 0
    %164 = vmatprep.subr.mxu0 0.0
    %165 = vmatpush1.msra.mxu0 0.0
    %166 = vmatprep.subr.mxu0 0.0
    %167 = vmatpush1.msra.mxu0 0.0
    %168 = vmatprep.subr.mxu0 0.0
    %169 = vmatpush1.msra.mxu0 0.0
    %170 = vmatprep.subr.mxu0 0.0
    %171 = vmatpush1.msra.mxu0 0.0
    %172 = vmatprep.subr.mxu0 0.0
    %173 = vmatpush1.msra.mxu0 0.0
    %174 = vmatprep.subr.mxu0 0.0
    %175 = vmatpush1.msra.mxu0 0.0
    %176 = vmatprep.subr.mxu0 0.0
    %177 = vmatpush1.msra.mxu0 0.0
    %178 = vmatprep.subr.mxu0 0.0
    %179 = vmatpush1.msra.mxu0 %v76
    %180 = vmatprep.subr.mxu0 0.0
    %181 = vmatpush1.msra.mxu0 %v75
    %182 = vmatprep.subr.mxu0 0.0
    %183 = vmatpush1.msra.mxu0 %v74
    %184 = vmatprep.subr.mxu0 0.0
    %185 = vmatpush1.msra.mxu0 %v73
    %186 = vmatprep.subr.mxu0 0.0
    %187 = vmatpush1.msra.mxu0 %v72
    %188 = vmatprep.subr.mxu0 0.0
    %189 = vmatpush1.msra.mxu0 %v71
    %190 = vmatprep.subr.mxu0 0.0
    %191 = vmatpush1.msra.mxu0 %v70
    %192 = vmatprep.subr.mxu0 0.0
    %193 = vmatpush1.msra.mxu0 %v69
    %194 = vmatprep.subr.mxu0 0.0
    %195 = vmatpush1.msra.mxu0 %v68
    %196 = vmatprep.subr.mxu0 0.0
    %197 = vmatpush2.msra.mxu0 0.0
    %198 = vmatprep.subr.mxu0 0.0
    %199 = vmatpush2.msra.mxu0 0.0
    %200 = vmatprep.subr.mxu0 0.0
    %201 = vmatpush2.msra.mxu0 0.0
    %202 = vmatprep.subr.mxu0 0.0
    %203 = vmatpush2.msra.mxu0 0.0
    %204 = vmatprep.subr.mxu0 0.0
    %205 = vmatpush2.msra.mxu0 0.0
    %206 = vmatprep.subr.mxu0 0.0
    %207 = vmatpush2.msra.mxu0 0.0
    %208 = vmatprep.subr.mxu0 0.0
    %209 = vmatpush2.msra.mxu0 0.0
    %210 = vmatprep.subr.mxu0 0.0
    %211 = vmatpush2.msra.mxu0 0.0
    %212 = vmatprep.subr.mxu0 0.0
    %213 = vmatpush2.msra.mxu0 0.0
    %214 = vmatprep.subr.mxu0 0.0
    %215 = vmatpush2.msra.mxu0 0.0
    %216 = vmatprep.subr.mxu0 0.0
    %217 = vmatpush2.msra.mxu0 0.0
    %218 = vmatprep.subr.mxu0 0.0
    %219 = vmatpush2.msra.mxu0 0.0
    %220 = vmatprep.subr.mxu0 0.0
    %221 = vmatpush2.msra.mxu0 0.0
    %222 = vmatprep.subr.mxu0 0.0
    %223 = vmatpush2.msra.mxu0 0.0
    %224 = vmatprep.subr.mxu0 0.0
    %225 = vmatpush2.msra.mxu0 0.0
    %226 = vmatprep.subr.mxu0 0.0
    %227 = vmatpush2.msra.mxu0 0.0
    %228 = vmatprep.mubr.f32.mxu0 0.0
    %229 = vmatmul.mubr.f32.gmra.mxu0 %v162
    %v230 = vpop.f32.mrf.mxu0
    %v231 = vadd.f32 %v158, %v230
    %v232 = vpop.f32.mrf.mxu0
    %233 = vdwg.mxu0
    %s234 = scalar_lea.vmem [#allocation3], 288
    %v235 = vld [vmem:[%s234] sm:$0xff]
    %v236 = vld [vmem:[%s234 + $0x8] sm:$0xff]
    %v237 = vld [vmem:[%s234 + $0x10] sm:$0xff]
    %v238 = vld [vmem:[%s234 + $0x18] sm:$0xff]
    %v239 = vld [vmem:[%s234 + $0x20] sm:$0xff]
    %v240 = vld [vmem:[%s234 + $0x28] sm:$0xff]
    %v241 = vld [vmem:[%s234 + $0x30] sm:$0xff]
    %v242 = vld [vmem:[%s234 + $0x38] sm:$0xff]
    %v243 = vld [vmem:[%s234 + $0x40] sm:$0xff]
    %v245 = vsel %vm87, %v64, 0
    %247 = vmatprep.subr.mxu0 0.0
    %248 = vmatpush1.msra.mxu0 0.0
    %249 = vmatprep.subr.mxu0 0.0
    %250 = vmatpush1.msra.mxu0 0.0
    %251 = vmatprep.subr.mxu0 0.0
    %252 = vmatpush1.msra.mxu0 0.0
    %253 = vmatprep.subr.mxu0 0.0
    %254 = vmatpush1.msra.mxu0 0.0
    %255 = vmatprep.subr.mxu0 0.0
    %256 = vmatpush1.msra.mxu0 0.0
    %257 = vmatprep.subr.mxu0 0.0
    %258 = vmatpush1.msra.mxu0 0.0
    %259 = vmatprep.subr.mxu0 0.0
    %260 = vmatpush1.msra.mxu0 0.0
    %261 = vmatprep.subr.mxu0 0.0
    %262 = vmatpush1.msra.mxu0 %v243
    %263 = vmatprep.subr.mxu0 0.0
    %264 = vmatpush1.msra.mxu0 %v242
    %265 = vmatprep.subr.mxu0 0.0
    %266 = vmatpush1.msra.mxu0 %v241
    %267 = vmatprep.subr.mxu0 0.0
    %268 = vmatpush1.msra.mxu0 %v240
    %269 = vmatprep.subr.mxu0 0.0
    %270 = vmatpush1.msra.mxu0 %v239
    %271 = vmatprep.subr.mxu0 0.0
    %272 = vmatpush1.msra.mxu0 %v238
    %273 = vmatprep.subr.mxu0 0.0
    %274 = vmatpush1.msra.mxu0 %v237
    %275 = vmatprep.subr.mxu0 0.0
    %276 = vmatpush1.msra.mxu0 %v236
    %277 = vmatprep.subr.mxu0 0.0
    %278 = vmatpush1.msra.mxu0 %v235
    %279 = vmatprep.subr.mxu0 0.0
    %280 = vmatpush2.msra.mxu0 0.0
    %281 = vmatprep.subr.mxu0 0.0
    %282 = vmatpush2.msra.mxu0 0.0
    %283 = vmatprep.subr.mxu0 0.0
    %284 = vmatpush2.msra.mxu0 0.0
    %285 = vmatprep.subr.mxu0 0.0
    %286 = vmatpush2.msra.mxu0 0.0
    %287 = vmatprep.subr.mxu0 0.0
    %288 = vmatpush2.msra.mxu0 0.0
    %289 = vmatprep.subr.mxu0 0.0
    %290 = vmatpush2.msra.mxu0 0.0
    %291 = vmatprep.subr.mxu0 0.0
    %292 = vmatpush2.msra.mxu0 0.0
    %293 = vmatprep.subr.mxu0 0.0
    %294 = vmatpush2.msra.mxu0 0.0
    %295 = vmatprep.subr.mxu0 0.0
    %296 = vmatpush2.msra.mxu0 0.0
    %297 = vmatprep.subr.mxu0 0.0
    %298 = vmatpush2.msra.mxu0 0.0
    %299 = vmatprep.subr.mxu0 0.0
    %300 = vmatpush2.msra.mxu0 0.0
    %301 = vmatprep.subr.mxu0 0.0
    %302 = vmatpush2.msra.mxu0 0.0
    %303 = vmatprep.subr.mxu0 0.0
    %304 = vmatpush2.msra.mxu0 0.0
    %305 = vmatprep.subr.mxu0 0.0
    %306 = vmatpush2.msra.mxu0 0.0
    %307 = vmatprep.subr.mxu0 0.0
    %308 = vmatpush2.msra.mxu0 0.0
    %309 = vmatprep.subr.mxu0 0.0
    %310 = vmatpush2.msra.mxu0 0.0
    %311 = vmatprep.mubr.f32.mxu0 0.0
    %312 = vmatmul.mubr.f32.gmra.mxu0 %v245
    %v313 = vpop.f32.mrf.mxu0
    %v314 = vadd.f32 0.0, %v313
    %v315 = vpop.f32.mrf.mxu0
    %316 = vdwg.mxu0
    %v317 = vadd.f32 %v231, %v314
    %v319 = vlaneseq
    %v320 = vshrl.u32 %v319, 7
    %v321 = vsub.s32 0, %v320
    %v322 = vrot.slane %v67, %v321
    %v324 = vadd.f32 %v317, %v322
    %v325 = vmax.f32 %v324, 0.0
    %s326 = scalar_lea.vmem [#allocation3], 72
    %v327 = vld [vmem:[%s326] sm:$0xff]
    %v328 = vld [vmem:[%s326 + $0x8] sm:$0xff]
    %v329 = vld [vmem:[%s326 + $0x10] sm:$0xff]
    %v330 = vld [vmem:[%s326 + $0x18] sm:$0xff]
    %v331 = vld [vmem:[%s326 + $0x20] sm:$0xff]
    %v332 = vld [vmem:[%s326 + $0x28] sm:$0xff]
    %v333 = vld [vmem:[%s326 + $0x30] sm:$0xff]
    %v334 = vld [vmem:[%s326 + $0x38] sm:$0xff]
    %v335 = vld [vmem:[%s326 + $0x40] sm:$0xff]
    %s336 = scalar_lea.vmem [#allocation3], 216
    %v337 = vld [vmem:[%s336] sm:$0xff]
    %v338 = vld [vmem:[%s336 + $0x8] sm:$0xff]
    %v339 = vld [vmem:[%s336 + $0x10] sm:$0xff]
    %v340 = vld [vmem:[%s336 + $0x18] sm:$0xff]
    %v341 = vld [vmem:[%s336 + $0x20] sm:$0xff]
    %v342 = vld [vmem:[%s336 + $0x28] sm:$0xff]
    %v343 = vld [vmem:[%s336 + $0x30] sm:$0xff]
    %v344 = vld [vmem:[%s336 + $0x38] sm:$0xff]
    %v345 = vld [vmem:[%s336 + $0x40] sm:$0xff]
    %346 = vmatprep.subr.mxu0 0.0
    %347 = vmatpush1.msra.mxu0 0.0
    %348 = vmatprep.subr.mxu0 0.0
    %349 = vmatpush1.msra.mxu0 0.0
    %350 = vmatprep.subr.mxu0 0.0
    %351 = vmatpush1.msra.mxu0 0.0
    %352 = vmatprep.subr.mxu0 0.0
    %353 = vmatpush1.msra.mxu0 0.0
    %354 = vmatprep.subr.mxu0 0.0
    %355 = vmatpush1.msra.mxu0 0.0
    %356 = vmatprep.subr.mxu0 0.0
    %357 = vmatpush1.msra.mxu0 0.0
    %358 = vmatprep.subr.mxu0 0.0
    %359 = vmatpush1.msra.mxu0 0.0
    %360 = vmatprep.subr.mxu0 0.0
    %361 = vmatpush1.msra.mxu0 %v345
    %362 = vmatprep.subr.mxu0 0.0
    %363 = vmatpush1.msra.mxu0 %v344
    %364 = vmatprep.subr.mxu0 0.0
    %365 = vmatpush1.msra.mxu0 %v343
    %366 = vmatprep.subr.mxu0 0.0
    %367 = vmatpush1.msra.mxu0 %v342
    %368 = vmatprep.subr.mxu0 0.0
    %369 = vmatpush1.msra.mxu0 %v341
    %370 = vmatprep.subr.mxu0 0.0
    %371 = vmatpush1.msra.mxu0 %v340
    %372 = vmatprep.subr.mxu0 0.0
    %373 = vmatpush1.msra.mxu0 %v339
    %374 = vmatprep.subr.mxu0 0.0
    %375 = vmatpush1.msra.mxu0 %v338
    %376 = vmatprep.subr.mxu0 0.0
    %377 = vmatpush1.msra.mxu0 %v337
    %378 = vmatprep.subr.mxu0 0.0
    %379 = vmatpush2.msra.mxu0 0.0
    %380 = vmatprep.subr.mxu0 0.0
    %381 = vmatpush2.msra.mxu0 0.0
    %382 = vmatprep.subr.mxu0 0.0
    %383 = vmatpush2.msra.mxu0 0.0
    %384 = vmatprep.subr.mxu0 0.0
    %385 = vmatpush2.msra.mxu0 0.0
    %386 = vmatprep.subr.mxu0 0.0
    %387 = vmatpush2.msra.mxu0 0.0
    %388 = vmatprep.subr.mxu0 0.0
    %389 = vmatpush2.msra.mxu0 0.0
    %390 = vmatprep.subr.mxu0 0.0
    %391 = vmatpush2.msra.mxu0 0.0
    %392 = vmatprep.subr.mxu0 0.0
    %393 = vmatpush2.msra.mxu0 0.0
    %394 = vmatprep.subr.mxu0 0.0
    %395 = vmatpush2.msra.mxu0 0.0
    %396 = vmatprep.subr.mxu0 0.0
    %397 = vmatpush2.msra.mxu0 0.0
    %398 = vmatprep.subr.mxu0 0.0
    %399 = vmatpush2.msra.mxu0 0.0
    %400 = vmatprep.subr.mxu0 0.0
    %401 = vmatpush2.msra.mxu0 0.0
    %402 = vmatprep.subr.mxu0 0.0
    %403 = vmatpush2.msra.mxu0 0.0
    %404 = vmatprep.subr.mxu0 0.0
    %405 = vmatpush2.msra.mxu0 0.0
    %406 = vmatprep.subr.mxu0 0.0
    %407 = vmatpush2.msra.mxu0 0.0
    %408 = vmatprep.subr.mxu0 0.0
    %409 = vmatpush2.msra.mxu0 0.0
    %410 = vmatprep.mubr.f32.mxu0 0.0
    %411 = vmatmul.mubr.f32.gmra.mxu0 %v89
    %v412 = vpop.f32.mrf.mxu0
    %v413 = vadd.f32 0.0, %v412
    %v414 = vpop.f32.mrf.mxu0
    %415 = vdwg.mxu0
    %416 = vmatprep.subr.mxu0 0.0
    %417 = vmatpush1.msra.mxu0 0.0
    %418 = vmatprep.subr.mxu0 0.0
    %419 = vmatpush1.msra.mxu0 0.0
    %420 = vmatprep.subr.mxu0 0.0
    %421 = vmatpush1.msra.mxu0 0.0
    %422 = vmatprep.subr.mxu0 0.0
    %423 = vmatpush1.msra.mxu0 0.0
    %424 = vmatprep.subr.mxu0 0.0
    %425 = vmatpush1.msra.mxu0 0.0
    %426 = vmatprep.subr.mxu0 0.0
    %427 = vmatpush1.msra.mxu0 0.0
    %428 = vmatprep.subr.mxu0 0.0
    %429 = vmatpush1.msra.mxu0 0.0
    %430 = vmatprep.subr.mxu0 0.0
    %431 = vmatpush1.msra.mxu0 %v335
    %432 = vmatprep.subr.mxu0 0.0
    %433 = vmatpush1.msra.mxu0 %v334
    %434 = vmatprep.subr.mxu0 0.0
    %435 = vmatpush1.msra.mxu0 %v333
    %436 = vmatprep.subr.mxu0 0.0
    %437 = vmatpush1.msra.mxu0 %v332
    %438 = vmatprep.subr.mxu0 0.0
    %439 = vmatpush1.msra.mxu0 %v331
    %440 = vmatprep.subr.mxu0 0.0
    %441 = vmatpush1.msra.mxu0 %v330
    %442 = vmatprep.subr.mxu0 0.0
    %443 = vmatpush1.msra.mxu0 %v329
    %444 = vmatprep.subr.mxu0 0.0
    %445 = vmatpush1.msra.mxu0 %v328
    %446 = vmatprep.subr.mxu0 0.0
    %447 = vmatpush1.msra.mxu0 %v327
    %448 = vmatprep.subr.mxu0 0.0
    %449 = vmatpush2.msra.mxu0 0.0
    %450 = vmatprep.subr.mxu0 0.0
    %451 = vmatpush2.msra.mxu0 0.0
    %452 = vmatprep.subr.mxu0 0.0
    %453 = vmatpush2.msra.mxu0 0.0
    %454 = vmatprep.subr.mxu0 0.0
    %455 = vmatpush2.msra.mxu0 0.0
    %456 = vmatprep.subr.mxu0 0.0
    %457 = vmatpush2.msra.mxu0 0.0
    %458 = vmatprep.subr.mxu0 0.0
    %459 = vmatpush2.msra.mxu0 0.0
    %460 = vmatprep.subr.mxu0 0.0
    %461 = vmatpush2.msra.mxu0 0.0
    %462 = vmatprep.subr.mxu0 0.0
    %463 = vmatpush2.msra.mxu0 0.0
    %464 = vmatprep.subr.mxu0 0.0
    %465 = vmatpush2.msra.mxu0 0.0
    %466 = vmatprep.subr.mxu0 0.0
    %467 = vmatpush2.msra.mxu0 0.0
    %468 = vmatprep.subr.mxu0 0.0
    %469 = vmatpush2.msra.mxu0 0.0
    %470 = vmatprep.subr.mxu0 0.0
    %471 = vmatpush2.msra.mxu0 0.0
    %472 = vmatprep.subr.mxu0 0.0
    %473 = vmatpush2.msra.mxu0 0.0
    %474 = vmatprep.subr.mxu0 0.0
    %475 = vmatpush2.msra.mxu0 0.0
    %476 = vmatprep.subr.mxu0 0.0
    %477 = vmatpush2.msra.mxu0 0.0
    %478 = vmatprep.subr.mxu0 0.0
    %479 = vmatpush2.msra.mxu0 0.0
    %480 = vmatprep.mubr.f32.mxu0 0.0
    %481 = vmatmul.mubr.f32.gmra.mxu0 %v162
    %v482 = vpop.f32.mrf.mxu0
    %v483 = vadd.f32 %v413, %v482
    %v484 = vpop.f32.mrf.mxu0
    %485 = vdwg.mxu0
    %s486 = scalar_lea.vmem [#allocation3], 360
    %v487 = vld [vmem:[%s486] sm:$0xff]
    %v488 = vld [vmem:[%s486 + $0x8] sm:$0xff]
    %v489 = vld [vmem:[%s486 + $0x10] sm:$0xff]
    %v490 = vld [vmem:[%s486 + $0x18] sm:$0xff]
    %v491 = vld [vmem:[%s486 + $0x20] sm:$0xff]
    %v492 = vld [vmem:[%s486 + $0x28] sm:$0xff]
    %v493 = vld [vmem:[%s486 + $0x30] sm:$0xff]
    %v494 = vld [vmem:[%s486 + $0x38] sm:$0xff]
    %v495 = vld [vmem:[%s486 + $0x40] sm:$0xff]
    %496 = vmatprep.subr.mxu0 0.0
    %497 = vmatpush1.msra.mxu0 0.0
    %498 = vmatprep.subr.mxu0 0.0
    %499 = vmatpush1.msra.mxu0 0.0
    %500 = vmatprep.subr.mxu0 0.0
    %501 = vmatpush1.msra.mxu0 0.0
    %502 = vmatprep.subr.mxu0 0.0
    %503 = vmatpush1.msra.mxu0 0.0
    %504 = vmatprep.subr.mxu0 0.0
    %505 = vmatpush1.msra.mxu0 0.0
    %506 = vmatprep.subr.mxu0 0.0
    %507 = vmatpush1.msra.mxu0 0.0
    %508 = vmatprep.subr.mxu0 0.0
    %509 = vmatpush1.msra.mxu0 0.0
    %510 = vmatprep.subr.mxu0 0.0
    %511 = vmatpush1.msra.mxu0 %v495
    %512 = vmatprep.subr.mxu0 0.0
    %513 = vmatpush1.msra.mxu0 %v494
    %514 = vmatprep.subr.mxu0 0.0
    %515 = vmatpush1.msra.mxu0 %v493
    %516 = vmatprep.subr.mxu0 0.0
    %517 = vmatpush1.msra.mxu0 %v492
    %518 = vmatprep.subr.mxu0 0.0
    %519 = vmatpush1.msra.mxu0 %v491
    %520 = vmatprep.subr.mxu0 0.0
    %521 = vmatpush1.msra.mxu0 %v490
    %522 = vmatprep.subr.mxu0 0.0
    %523 = vmatpush1.msra.mxu0 %v489
    %524 = vmatprep.subr.mxu0 0.0
    %525 = vmatpush1.msra.mxu0 %v488
    %526 = vmatprep.subr.mxu0 0.0
    %527 = vmatpush1.msra.mxu0 %v487
    %528 = vmatprep.subr.mxu0 0.0
    %529 = vmatpush2.msra.mxu0 0.0
    %530 = vmatprep.subr.mxu0 0.0
    %531 = vmatpush2.msra.mxu0 0.0
    %532 = vmatprep.subr.mxu0 0.0
    %533 = vmatpush2.msra.mxu0 0.0
    %534 = vmatprep.subr.mxu0 0.0
    %535 = vmatpush2.msra.mxu0 0.0
    %536 = vmatprep.subr.mxu0 0.0
    %537 = vmatpush2.msra.mxu0 0.0
    %538 = vmatprep.subr.mxu0 0.0
    %539 = vmatpush2.msra.mxu0 0.0
    %540 = vmatprep.subr.mxu0 0.0
    %541 = vmatpush2.msra.mxu0 0.0
    %542 = vmatprep.subr.mxu0 0.0
    %543 = vmatpush2.msra.mxu0 0.0
    %544 = vmatprep.subr.mxu0 0.0
    %545 = vmatpush2.msra.mxu0 0.0
    %546 = vmatprep.subr.mxu0 0.0
    %547 = vmatpush2.msra.mxu0 0.0
    %548 = vmatprep.subr.mxu0 0.0
    %549 = vmatpush2.msra.mxu0 0.0
    %550 = vmatprep.subr.mxu0 0.0
    %551 = vmatpush2.msra.mxu0 0.0
    %552 = vmatprep.subr.mxu0 0.0
    %553 = vmatpush2.msra.mxu0 0.0
    %554 = vmatprep.subr.mxu0 0.0
    %555 = vmatpush2.msra.mxu0 0.0
    %556 = vmatprep.subr.mxu0 0.0
    %557 = vmatpush2.msra.mxu0 0.0
    %558 = vmatprep.subr.mxu0 0.0
    %559 = vmatpush2.msra.mxu0 0.0
    %560 = vmatprep.mubr.f32.mxu0 0.0
    %561 = vmatmul.mubr.f32.gmra.mxu0 %v245
    %v562 = vpop.f32.mrf.mxu0
    %v563 = vadd.f32 0.0, %v562
    %v564 = vpop.f32.mrf.mxu0
    %565 = vdwg.mxu0
    %v566 = vadd.f32 %v483, %v563
    %v567 = vadd.f32 %v566, %v322
    %v568 = vmax.f32 %v567, 0.0
    %v569 = vmax.f32 %v325, %v568
    %570 = vmatprep.subr.mxu0 0.0
    %571 = vmatpush1.msra.mxu0 0.0
    %572 = vmatprep.subr.mxu0 0.0
    %573 = vmatpush1.msra.mxu0 0.0
    %574 = vmatprep.subr.mxu0 0.0
    %575 = vmatpush1.msra.mxu0 0.0
    %576 = vmatprep.subr.mxu0 0.0
    %577 = vmatpush1.msra.mxu0 0.0
    %578 = vmatprep.subr.mxu0 0.0
    %579 = vmatpush1.msra.mxu0 0.0
    %580 = vmatprep.subr.mxu0 0.0
    %581 = vmatpush1.msra.mxu0 0.0
    %582 = vmatprep.subr.mxu0 0.0
    %583 = vmatpush1.msra.mxu0 0.0
    %584 = vmatprep.subr.mxu0 0.0
    %585 = vmatpush1.msra.mxu0 %v86
    %586 = vmatprep.subr.mxu0 0.0
    %587 = vmatpush1.msra.mxu0 %v85
    %588 = vmatprep.subr.mxu0 0.0
    %589 = vmatpush1.msra.mxu0 %v84
    %590 = vmatprep.subr.mxu0 0.0
    %591 = vmatpush1.msra.mxu0 %v83
    %592 = vmatprep.subr.mxu0 0.0
    %593 = vmatpush1.msra.mxu0 %v82
    %594 = vmatprep.subr.mxu0 0.0
    %595 = vmatpush1.msra.mxu0 %v81
    %596 = vmatprep.subr.mxu0 0.0
    %597 = vmatpush1.msra.mxu0 %v80
    %598 = vmatprep.subr.mxu0 0.0
    %599 = vmatpush1.msra.mxu0 %v79
    %600 = vmatprep.subr.mxu0 0.0
    %601 = vmatpush1.msra.mxu0 %v78
    %602 = vmatprep.subr.mxu0 0.0
    %603 = vmatpush2.msra.mxu0 0.0
    %604 = vmatprep.subr.mxu0 0.0
    %605 = vmatpush2.msra.mxu0 0.0
    %606 = vmatprep.subr.mxu0 0.0
    %607 = vmatpush2.msra.mxu0 0.0
    %608 = vmatprep.subr.mxu0 0.0
    %609 = vmatpush2.msra.mxu0 0.0
    %610 = vmatprep.subr.mxu0 0.0
    %611 = vmatpush2.msra.mxu0 0.0
    %612 = vmatprep.subr.mxu0 0.0
    %613 = vmatpush2.msra.mxu0 0.0
    %614 = vmatprep.subr.mxu0 0.0
    %615 = vmatpush2.msra.mxu0 0.0
    %616 = vmatprep.subr.mxu0 0.0
    %617 = vmatpush2.msra.mxu0 0.0
    %618 = vmatprep.subr.mxu0 0.0
    %619 = vmatpush2.msra.mxu0 0.0
    %620 = vmatprep.subr.mxu0 0.0
    %621 = vmatpush2.msra.mxu0 0.0
    %622 = vmatprep.subr.mxu0 0.0
    %623 = vmatpush2.msra.mxu0 0.0
    %624 = vmatprep.subr.mxu0 0.0
    %625 = vmatpush2.msra.mxu0 0.0
    %626 = vmatprep.subr.mxu0 0.0
    %627 = vmatpush2.msra.mxu0 0.0
    %628 = vmatprep.subr.mxu0 0.0
    %629 = vmatpush2.msra.mxu0 0.0
    %630 = vmatprep.subr.mxu0 0.0
    %631 = vmatpush2.msra.mxu0 0.0
    %632 = vmatprep.subr.mxu0 0.0
    %633 = vmatpush2.msra.mxu0 0.0
    %634 = vmatprep.mubr.f32.mxu0 0.0
    %635 = vmatmul.mubr.f32.gmra.mxu0 %v245
    %v636 = vpop.f32.mrf.mxu0
    %v637 = vadd.f32 0.0, %v636
    %v638 = vpop.f32.mrf.mxu0
    %639 = vdwg.mxu0
    %640 = vmatprep.subr.mxu0 0.0
    %641 = vmatpush1.msra.mxu0 0.0
    %642 = vmatprep.subr.mxu0 0.0
    %643 = vmatpush1.msra.mxu0 0.0
    %644 = vmatprep.subr.mxu0 0.0
    %645 = vmatpush1.msra.mxu0 0.0
    %646 = vmatprep.subr.mxu0 0.0
    %647 = vmatpush1.msra.mxu0 0.0
    %648 = vmatprep.subr.mxu0 0.0
    %649 = vmatpush1.msra.mxu0 0.0
    %650 = vmatprep.subr.mxu0 0.0
    %651 = vmatpush1.msra.mxu0 0.0
    %652 = vmatprep.subr.mxu0 0.0
    %653 = vmatpush1.msra.mxu0 0.0
    %654 = vmatprep.subr.mxu0 0.0
    %655 = vmatpush1.msra.mxu0 %v76
    %656 = vmatprep.subr.mxu0 0.0
    %657 = vmatpush1.msra.mxu0 %v75
    %658 = vmatprep.subr.mxu0 0.0
    %659 = vmatpush1.msra.mxu0 %v74
    %660 = vmatprep.subr.mxu0 0.0
    %661 = vmatpush1.msra.mxu0 %v73
    %662 = vmatprep.subr.mxu0 0.0
    %663 = vmatpush1.msra.mxu0 %v72
    %664 = vmatprep.subr.mxu0 0.0
    %665 = vmatpush1.msra.mxu0 %v71
    %666 = vmatprep.subr.mxu0 0.0
    %667 = vmatpush1.msra.mxu0 %v70
    %668 = vmatprep.subr.mxu0 0.0
    %669 = vmatpush1.msra.mxu0 %v69
    %670 = vmatprep.subr.mxu0 0.0
    %671 = vmatpush1.msra.mxu0 %v68
    %672 = vmatprep.subr.mxu0 0.0
    %673 = vmatpush2.msra.mxu0 0.0
    %674 = vmatprep.subr.mxu0 0.0
    %675 = vmatpush2.msra.mxu0 0.0
    %676 = vmatprep.subr.mxu0 0.0
    %677 = vmatpush2.msra.mxu0 0.0
    %678 = vmatprep.subr.mxu0 0.0
    %679 = vmatpush2.msra.mxu0 0.0
    %680 = vmatprep.subr.mxu0 0.0
    %681 = vmatpush2.msra.mxu0 0.0
    %682 = vmatprep.subr.mxu0 0.0
    %683 = vmatpush2.msra.mxu0 0.0
    %684 = vmatprep.subr.mxu0 0.0
    %685 = vmatpush2.msra.mxu0 0.0
    %686 = vmatprep.subr.mxu0 0.0
    %687 = vmatpush2.msra.mxu0 0.0
    %688 = vmatprep.subr.mxu0 0.0
    %689 = vmatpush2.msra.mxu0 0.0
    %690 = vmatprep.subr.mxu0 0.0
    %691 = vmatpush2.msra.mxu0 0.0
    %692 = vmatprep.subr.mxu0 0.0
    %693 = vmatpush2.msra.mxu0 0.0
    %694 = vmatprep.subr.mxu0 0.0
    %695 = vmatpush2.msra.mxu0 0.0
    %696 = vmatprep.subr.mxu0 0.0
    %697 = vmatpush2.msra.mxu0 0.0
    %698 = vmatprep.subr.mxu0 0.0
    %699 = vmatpush2.msra.mxu0 0.0
    %700 = vmatprep.subr.mxu0 0.0
    %701 = vmatpush2.msra.mxu0 0.0
    %702 = vmatprep.subr.mxu0 0.0
    %703 = vmatpush2.msra.mxu0 0.0
    %704 = vmatprep.mubr.f32.mxu0 0.0
    %705 = vmatmul.mubr.f32.gmra.mxu0 %v89
    %v706 = vpop.f32.mrf.mxu0
    %v707 = vadd.f32 %v637, %v706
    %v708 = vpop.f32.mrf.mxu0
    %709 = vdwg.mxu0
    %v711 = vsel %vm87, %v66, 0
    %713 = vmatprep.subr.mxu0 0.0
    %714 = vmatpush1.msra.mxu0 0.0
    %715 = vmatprep.subr.mxu0 0.0
    %716 = vmatpush1.msra.mxu0 0.0
    %717 = vmatprep.subr.mxu0 0.0
    %718 = vmatpush1.msra.mxu0 0.0
    %719 = vmatprep.subr.mxu0 0.0
    %720 = vmatpush1.msra.mxu0 0.0
    %721 = vmatprep.subr.mxu0 0.0
    %722 = vmatpush1.msra.mxu0 0.0
    %723 = vmatprep.subr.mxu0 0.0
    %724 = vmatpush1.msra.mxu0 0.0
    %725 = vmatprep.subr.mxu0 0.0
    %726 = vmatpush1.msra.mxu0 0.0
    %727 = vmatprep.subr.mxu0 0.0
    %728 = vmatpush1.msra.mxu0 %v243
    %729 = vmatprep.subr.mxu0 0.0
    %730 = vmatpush1.msra.mxu0 %v242
    %731 = vmatprep.subr.mxu0 0.0
    %732 = vmatpush1.msra.mxu0 %v241
    %733 = vmatprep.subr.mxu0 0.0
    %734 = vmatpush1.msra.mxu0 %v240
    %735 = vmatprep.subr.mxu0 0.0
    %736 = vmatpush1.msra.mxu0 %v239
    %737 = vmatprep.subr.mxu0 0.0
    %738 = vmatpush1.msra.mxu0 %v238
    %739 = vmatprep.subr.mxu0 0.0
    %740 = vmatpush1.msra.mxu0 %v237
    %741 = vmatprep.subr.mxu0 0.0
    %742 = vmatpush1.msra.mxu0 %v236
    %743 = vmatprep.subr.mxu0 0.0
    %744 = vmatpush1.msra.mxu0 %v235
    %745 = vmatprep.subr.mxu0 0.0
    %746 = vmatpush2.msra.mxu0 0.0
    %747 = vmatprep.subr.mxu0 0.0
    %748 = vmatpush2.msra.mxu0 0.0
    %749 = vmatprep.subr.mxu0 0.0
    %750 = vmatpush2.msra.mxu0 0.0
    %751 = vmatprep.subr.mxu0 0.0
    %752 = vmatpush2.msra.mxu0 0.0
    %753 = vmatprep.subr.mxu0 0.0
    %754 = vmatpush2.msra.mxu0 0.0
    %755 = vmatprep.subr.mxu0 0.0
    %756 = vmatpush2.msra.mxu0 0.0
    %757 = vmatprep.subr.mxu0 0.0
    %758 = vmatpush2.msra.mxu0 0.0
    %759 = vmatprep.subr.mxu0 0.0
    %760 = vmatpush2.msra.mxu0 0.0
    %761 = vmatprep.subr.mxu0 0.0
    %762 = vmatpush2.msra.mxu0 0.0
    %763 = vmatprep.subr.mxu0 0.0
    %764 = vmatpush2.msra.mxu0 0.0
    %765 = vmatprep.subr.mxu0 0.0
    %766 = vmatpush2.msra.mxu0 0.0
    %767 = vmatprep.subr.mxu0 0.0
    %768 = vmatpush2.msra.mxu0 0.0
    %769 = vmatprep.subr.mxu0 0.0
    %770 = vmatpush2.msra.mxu0 0.0
    %771 = vmatprep.subr.mxu0 0.0
    %772 = vmatpush2.msra.mxu0 0.0
    %773 = vmatprep.subr.mxu0 0.0
    %774 = vmatpush2.msra.mxu0 0.0
    %775 = vmatprep.subr.mxu0 0.0
    %776 = vmatpush2.msra.mxu0 0.0
    %777 = vmatprep.mubr.f32.mxu0 0.0
    %778 = vmatmul.mubr.f32.gmra.mxu0 %v711
    %v779 = vpop.f32.mrf.mxu0
    %v780 = vadd.f32 0.0, %v779
    %v781 = vpop.f32.mrf.mxu0
    %782 = vdwg.mxu0
    %v783 = vadd.f32 %v707, %v780
    %v784 = vadd.f32 %v783, %v322
    %v785 = vmax.f32 %v784, 0.0
    %v786 = vmax.f32 %v569, %v785
    %787 = vmatprep.subr.mxu0 0.0
    %788 = vmatpush1.msra.mxu0 0.0
    %789 = vmatprep.subr.mxu0 0.0
    %790 = vmatpush1.msra.mxu0 0.0
    %791 = vmatprep.subr.mxu0 0.0
    %792 = vmatpush1.msra.mxu0 0.0
    %793 = vmatprep.subr.mxu0 0.0
    %794 = vmatpush1.msra.mxu0 0.0
    %795 = vmatprep.subr.mxu0 0.0
    %796 = vmatpush1.msra.mxu0 0.0
    %797 = vmatprep.subr.mxu0 0.0
    %798 = vmatpush1.msra.mxu0 0.0
    %799 = vmatprep.subr.mxu0 0.0
    %800 = vmatpush1.msra.mxu0 0.0
    %801 = vmatprep.subr.mxu0 0.0
    %802 = vmatpush1.msra.mxu0 %v345
    %803 = vmatprep.subr.mxu0 0.0
    %804 = vmatpush1.msra.mxu0 %v344
    %805 = vmatprep.subr.mxu0 0.0
    %806 = vmatpush1.msra.mxu0 %v343
    %807 = vmatprep.subr.mxu0 0.0
    %808 = vmatpush1.msra.mxu0 %v342
    %809 = vmatprep.subr.mxu0 0.0
    %810 = vmatpush1.msra.mxu0 %v341
    %811 = vmatprep.subr.mxu0 0.0
    %812 = vmatpush1.msra.mxu0 %v340
    %813 = vmatprep.subr.mxu0 0.0
    %814 = vmatpush1.msra.mxu0 %v339
    %815 = vmatprep.subr.mxu0 0.0
    %816 = vmatpush1.msra.mxu0 %v338
    %817 = vmatprep.subr.mxu0 0.0
    %818 = vmatpush1.msra.mxu0 %v337
    %819 = vmatprep.subr.mxu0 0.0
    %820 = vmatpush2.msra.mxu0 0.0
    %821 = vmatprep.subr.mxu0 0.0
    %822 = vmatpush2.msra.mxu0 0.0
    %823 = vmatprep.subr.mxu0 0.0
    %824 = vmatpush2.msra.mxu0 0.0
    %825 = vmatprep.subr.mxu0 0.0
    %826 = vmatpush2.msra.mxu0 0.0
    %827 = vmatprep.subr.mxu0 0.0
    %828 = vmatpush2.msra.mxu0 0.0
    %829 = vmatprep.subr.mxu0 0.0
    %830 = vmatpush2.msra.mxu0 0.0
    %831 = vmatprep.subr.mxu0 0.0
    %832 = vmatpush2.msra.mxu0 0.0
    %833 = vmatprep.subr.mxu0 0.0
    %834 = vmatpush2.msra.mxu0 0.0
    %835 = vmatprep.subr.mxu0 0.0
    %836 = vmatpush2.msra.mxu0 0.0
    %837 = vmatprep.subr.mxu0 0.0
    %838 = vmatpush2.msra.mxu0 0.0
    %839 = vmatprep.subr.mxu0 0.0
    %840 = vmatpush2.msra.mxu0 0.0
    %841 = vmatprep.subr.mxu0 0.0
    %842 = vmatpush2.msra.mxu0 0.0
    %843 = vmatprep.subr.mxu0 0.0
    %844 = vmatpush2.msra.mxu0 0.0
    %845 = vmatprep.subr.mxu0 0.0
    %846 = vmatpush2.msra.mxu0 0.0
    %847 = vmatprep.subr.mxu0 0.0
    %848 = vmatpush2.msra.mxu0 0.0
    %849 = vmatprep.subr.mxu0 0.0
    %850 = vmatpush2.msra.mxu0 0.0
    %851 = vmatprep.mubr.f32.mxu0 0.0
    %852 = vmatmul.mubr.f32.gmra.mxu0 %v245
    %v853 = vpop.f32.mrf.mxu0
    %v854 = vadd.f32 0.0, %v853
    %v855 = vpop.f32.mrf.mxu0
    %856 = vdwg.mxu0
    %857 = vmatprep.subr.mxu0 0.0
    %858 = vmatpush1.msra.mxu0 0.0
    %859 = vmatprep.subr.mxu0 0.0
    %860 = vmatpush1.msra.mxu0 0.0
    %861 = vmatprep.subr.mxu0 0.0
    %862 = vmatpush1.msra.mxu0 0.0
    %863 = vmatprep.subr.mxu0 0.0
    %864 = vmatpush1.msra.mxu0 0.0
    %865 = vmatprep.subr.mxu0 0.0
    %866 = vmatpush1.msra.mxu0 0.0
    %867 = vmatprep.subr.mxu0 0.0
    %868 = vmatpush1.msra.mxu0 0.0
    %869 = vmatprep.subr.mxu0 0.0
    %870 = vmatpush1.msra.mxu0 0.0
    %871 = vmatprep.subr.mxu0 0.0
    %872 = vmatpush1.msra.mxu0 %v335
    %873 = vmatprep.subr.mxu0 0.0
    %874 = vmatpush1.msra.mxu0 %v334
    %875 = vmatprep.subr.mxu0 0.0
    %876 = vmatpush1.msra.mxu0 %v333
    %877 = vmatprep.subr.mxu0 0.0
    %878 = vmatpush1.msra.mxu0 %v332
    %879 = vmatprep.subr.mxu0 0.0
    %880 = vmatpush1.msra.mxu0 %v331
    %881 = vmatprep.subr.mxu0 0.0
    %882 = vmatpush1.msra.mxu0 %v330
    %883 = vmatprep.subr.mxu0 0.0
    %884 = vmatpush1.msra.mxu0 %v329
    %885 = vmatprep.subr.mxu0 0.0
    %886 = vmatpush1.msra.mxu0 %v328
    %887 = vmatprep.subr.mxu0 0.0
    %888 = vmatpush1.msra.mxu0 %v327
    %889 = vmatprep.subr.mxu0 0.0
    %890 = vmatpush2.msra.mxu0 0.0
    %891 = vmatprep.subr.mxu0 0.0
    %892 = vmatpush2.msra.mxu0 0.0
    %893 = vmatprep.subr.mxu0 0.0
    %894 = vmatpush2.msra.mxu0 0.0
    %895 = vmatprep.subr.mxu0 0.0
    %896 = vmatpush2.msra.mxu0 0.0
    %897 = vmatprep.subr.mxu0 0.0
    %898 = vmatpush2.msra.mxu0 0.0
    %899 = vmatprep.subr.mxu0 0.0
    %900 = vmatpush2.msra.mxu0 0.0
    %901 = vmatprep.subr.mxu0 0.0
    %902 = vmatpush2.msra.mxu0 0.0
    %903 = vmatprep.subr.mxu0 0.0
    %904 = vmatpush2.msra.mxu0 0.0
    %905 = vmatprep.subr.mxu0 0.0
    %906 = vmatpush2.msra.mxu0 0.0
    %907 = vmatprep.subr.mxu0 0.0
    %908 = vmatpush2.msra.mxu0 0.0
    %909 = vmatprep.subr.mxu0 0.0
    %910 = vmatpush2.msra.mxu0 0.0
    %911 = vmatprep.subr.mxu0 0.0
    %912 = vmatpush2.msra.mxu0 0.0
    %913 = vmatprep.subr.mxu0 0.0
    %914 = vmatpush2.msra.mxu0 0.0
    %915 = vmatprep.subr.mxu0 0.0
    %916 = vmatpush2.msra.mxu0 0.0
    %917 = vmatprep.subr.mxu0 0.0
    %918 = vmatpush2.msra.mxu0 0.0
    %919 = vmatprep.subr.mxu0 0.0
    %920 = vmatpush2.msra.mxu0 0.0
    %921 = vmatprep.mubr.f32.mxu0 0.0
    %922 = vmatmul.mubr.f32.gmra.mxu0 %v89
    %v923 = vpop.f32.mrf.mxu0
    %v924 = vadd.f32 %v854, %v923
    %v925 = vpop.f32.mrf.mxu0
    %926 = vdwg.mxu0
    %927 = vmatprep.subr.mxu0 0.0
    %928 = vmatpush1.msra.mxu0 0.0
    %929 = vmatprep.subr.mxu0 0.0
    %930 = vmatpush1.msra.mxu0 0.0
    %931 = vmatprep.subr.mxu0 0.0
    %932 = vmatpush1.msra.mxu0 0.0
    %933 = vmatprep.subr.mxu0 0.0
    %934 = vmatpush1.msra.mxu0 0.0
    %935 = vmatprep.subr.mxu0 0.0
    %936 = vmatpush1.msra.mxu0 0.0
    %937 = vmatprep.subr.mxu0 0.0
    %938 = vmatpush1.msra.mxu0 0.0
    %939 = vmatprep.subr.mxu0 0.0
    %940 = vmatpush1.msra.mxu0 0.0
    %941 = vmatprep.subr.mxu0 0.0
    %942 = vmatpush1.msra.mxu0 %v495
    %943 = vmatprep.subr.mxu0 0.0
    %944 = vmatpush1.msra.mxu0 %v494
    %945 = vmatprep.subr.mxu0 0.0
    %946 = vmatpush1.msra.mxu0 %v493
    %947 = vmatprep.subr.mxu0 0.0
    %948 = vmatpush1.msra.mxu0 %v492
    %949 = vmatprep.subr.mxu0 0.0
    %950 = vmatpush1.msra.mxu0 %v491
    %951 = vmatprep.subr.mxu0 0.0
    %952 = vmatpush1.msra.mxu0 %v490
    %953 = vmatprep.subr.mxu0 0.0
    %954 = vmatpush1.msra.mxu0 %v489
    %955 = vmatprep.subr.mxu0 0.0
    %956 = vmatpush1.msra.mxu0 %v488
    %957 = vmatprep.subr.mxu0 0.0
    %958 = vmatpush1.msra.mxu0 %v487
    %959 = vmatprep.subr.mxu0 0.0
    %960 = vmatpush2.msra.mxu0 0.0
    %961 = vmatprep.subr.mxu0 0.0
    %962 = vmatpush2.msra.mxu0 0.0
    %963 = vmatprep.subr.mxu0 0.0
    %964 = vmatpush2.msra.mxu0 0.0
    %965 = vmatprep.subr.mxu0 0.0
    %966 = vmatpush2.msra.mxu0 0.0
    %967 = vmatprep.subr.mxu0 0.0
    %968 = vmatpush2.msra.mxu0 0.0
    %969 = vmatprep.subr.mxu0 0.0
    %970 = vmatpush2.msra.mxu0 0.0
    %971 = vmatprep.subr.mxu0 0.0
    %972 = vmatpush2.msra.mxu0 0.0
    %973 = vmatprep.subr.mxu0 0.0
    %974 = vmatpush2.msra.mxu0 0.0
    %975 = vmatprep.subr.mxu0 0.0
    %976 = vmatpush2.msra.mxu0 0.0
    %977 = vmatprep.subr.mxu0 0.0
    %978 = vmatpush2.msra.mxu0 0.0
    %979 = vmatprep.subr.mxu0 0.0
    %980 = vmatpush2.msra.mxu0 0.0
    %981 = vmatprep.subr.mxu0 0.0
    %982 = vmatpush2.msra.mxu0 0.0
    %983 = vmatprep.subr.mxu0 0.0
    %984 = vmatpush2.msra.mxu0 0.0
    %985 = vmatprep.subr.mxu0 0.0
    %986 = vmatpush2.msra.mxu0 0.0
    %987 = vmatprep.subr.mxu0 0.0
    %988 = vmatpush2.msra.mxu0 0.0
    %989 = vmatprep.subr.mxu0 0.0
    %990 = vmatpush2.msra.mxu0 0.0
    %991 = vmatprep.mubr.f32.mxu0 0.0
    %992 = vmatmul.mubr.f32.gmra.mxu0 %v711
    %v993 = vpop.f32.mrf.mxu0
    %v994 = vadd.f32 0.0, %v993
    %v995 = vpop.f32.mrf.mxu0
    %996 = vdwg.mxu0
    %v997 = vadd.f32 %v924, %v994
    %v998 = vadd.f32 %v997, %v322
    %v999 = vmax.f32 %v998, 0.0
    %v1000 = vmax.f32 %v786, %v999
    %1002 = vrot.lane.b32.xlu0 %v1000, 8
    %v1003 = vpop.permute.xlu0 %1002
    %vm1005 = vcmask 588864
    %1006 = vst.msk [vmem:[#allocation2 + $0x1] sm:$0xff] %vm1005, %v1003
    %v1007 = vld [vmem:[#allocation2] ss:$2 sm:$0xf]
    %s1008 = scalar_lea.vmem [#allocation2], 1
    %v1009 = vld [vmem:[%s1008] ss:$2 sm:$0xf]
    %s1010 = scalar_lea.vmem [#allocation2], 2
    %v1011 = vld [vmem:[%s1010] ss:$2 sm:$0xf]
    %s1012 = scalar_lea.vmem [#allocation2], 3
    %v1013 = vld [vmem:[%s1012] ss:$2 sm:$0xf]
    %v1014 = vld [vmem:[%s4] sm:$0x1]
    %v1015 = vld [vmem:[%s3] sm:$0xff]
    %v1016 = vld [vmem:[%s3 + $0x8] sm:$0xff]
    %v1017 = vld [vmem:[%s3 + $0x10] sm:$0xff]
    %v1018 = vld [vmem:[%s3 + $0x18] sm:$0xff]
    %v1019 = vld [vmem:[%s3 + $0x20] sm:$0xff]
    %v1020 = vld [vmem:[%s3 + $0x28] sm:$0xff]
    %v1021 = vld [vmem:[%s3 + $0x30] sm:$0xff]
    %v1022 = vld [vmem:[%s3 + $0x38] sm:$0xff]
    %v1023 = vld [vmem:[%s3 + $0x40] sm:$0xff]
    %v1024 = vld [vmem:[%s3 + $0x48] sm:$0xff]
    %s1025 = scalar_lea.vmem %s3, 160
    %v1026 = vld [vmem:[%s1025] sm:$0xff]
    %v1027 = vld [vmem:[%s1025 + $0x8] sm:$0xff]
    %v1028 = vld [vmem:[%s1025 + $0x10] sm:$0xff]
    %v1029 = vld [vmem:[%s1025 + $0x18] sm:$0xff]
    %v1030 = vld [vmem:[%s1025 + $0x20] sm:$0xff]
    %v1031 = vld [vmem:[%s1025 + $0x28] sm:$0xff]
    %v1032 = vld [vmem:[%s1025 + $0x30] sm:$0xff]
    %v1033 = vld [vmem:[%s1025 + $0x38] sm:$0xff]
    %v1034 = vld [vmem:[%s1025 + $0x40] sm:$0xff]
    %v1035 = vld [vmem:[%s1025 + $0x48] sm:$0xff]
    %v1037 = vsel %vm55, %v1009, 0
    %1039 = vmatprep.subr.mxu0 0.0
    %1040 = vmatpush1.msra.mxu0 0.0
    %1041 = vmatprep.subr.mxu0 0.0
    %1042 = vmatpush1.msra.mxu0 0.0
    %1043 = vmatprep.subr.mxu0 0.0
    %1044 = vmatpush1.msra.mxu0 0.0
    %1045 = vmatprep.subr.mxu0 0.0
    %1046 = vmatpush1.msra.mxu0 0.0
    %1047 = vmatprep.subr.mxu0 0.0
    %1048 = vmatpush1.msra.mxu0 0.0
    %1049 = vmatprep.subr.mxu0 0.0
    %1050 = vmatpush1.msra.mxu0 0.0
    %1051 = vmatprep.subr.mxu0 0.0
    %1052 = vmatpush1.msra.mxu0 %v1035
    %1053 = vmatprep.subr.mxu0 0.0
    %1054 = vmatpush1.msra.mxu0 %v1034
    %1055 = vmatprep.subr.mxu0 0.0
    %1056 = vmatpush1.msra.mxu0 %v1033
    %1057 = vmatprep.subr.mxu0 0.0
    %1058 = vmatpush1.msra.mxu0 %v1032
    %1059 = vmatprep.subr.mxu0 0.0
    %1060 = vmatpush1.msra.mxu0 %v1031
    %1061 = vmatprep.subr.mxu0 0.0
    %1062 = vmatpush1.msra.mxu0 %v1030
    %1063 = vmatprep.subr.mxu0 0.0
    %1064 = vmatpush1.msra.mxu0 %v1029
    %1065 = vmatprep.subr.mxu0 0.0
    %1066 = vmatpush1.msra.mxu0 %v1028
    %1067 = vmatprep.subr.mxu0 0.0
    %1068 = vmatpush1.msra.mxu0 %v1027
    %1069 = vmatprep.subr.mxu0 0.0
    %1070 = vmatpush1.msra.mxu0 %v1026
    %1071 = vmatprep.subr.mxu0 0.0
    %1072 = vmatpush2.msra.mxu0 0.0
    %1073 = vmatprep.subr.mxu0 0.0
    %1074 = vmatpush2.msra.mxu0 0.0
    %1075 = vmatprep.subr.mxu0 0.0
    %1076 = vmatpush2.msra.mxu0 0.0
    %1077 = vmatprep.subr.mxu0 0.0
    %1078 = vmatpush2.msra.mxu0 0.0
    %1079 = vmatprep.subr.mxu0 0.0
    %1080 = vmatpush2.msra.mxu0 0.0
    %1081 = vmatprep.subr.mxu0 0.0
    %1082 = vmatpush2.msra.mxu0 0.0
    %1083 = vmatprep.subr.mxu0 0.0
    %1084 = vmatpush2.msra.mxu0 0.0
    %1085 = vmatprep.subr.mxu0 0.0
    %1086 = vmatpush2.msra.mxu0 0.0
    %1087 = vmatprep.subr.mxu0 0.0
    %1088 = vmatpush2.msra.mxu0 0.0
    %1089 = vmatprep.subr.mxu0 0.0
    %1090 = vmatpush2.msra.mxu0 0.0
    %1091 = vmatprep.subr.mxu0 0.0
    %1092 = vmatpush2.msra.mxu0 0.0
    %1093 = vmatprep.subr.mxu0 0.0
    %1094 = vmatpush2.msra.mxu0 0.0
    %1095 = vmatprep.subr.mxu0 0.0
    %1096 = vmatpush2.msra.mxu0 0.0
    %1097 = vmatprep.subr.mxu0 0.0
    %1098 = vmatpush2.msra.mxu0 0.0
    %1099 = vmatprep.subr.mxu0 0.0
    %1100 = vmatpush2.msra.mxu0 0.0
    %1101 = vmatprep.subr.mxu0 0.0
    %1102 = vmatpush2.msra.mxu0 0.0
    %1103 = vmatprep.mubr.f32.mxu0 0.0
    %1104 = vmatmul.mubr.f32.gmra.mxu0 %v1037
    %v1105 = vpop.f32.mrf.mxu0
    %v1106 = vadd.f32 0.0, %v1105
    %v1107 = vpop.f32.mrf.mxu0
    %1108 = vdwg.mxu0
    %v1110 = vsel %vm55, %v1007, 0
    %1112 = vmatprep.subr.mxu0 0.0
    %1113 = vmatpush1.msra.mxu0 0.0
    %1114 = vmatprep.subr.mxu0 0.0
    %1115 = vmatpush1.msra.mxu0 0.0
    %1116 = vmatprep.subr.mxu0 0.0
    %1117 = vmatpush1.msra.mxu0 0.0
    %1118 = vmatprep.subr.mxu0 0.0
    %1119 = vmatpush1.msra.mxu0 0.0
    %1120 = vmatprep.subr.mxu0 0.0
    %1121 = vmatpush1.msra.mxu0 0.0
    %1122 = vmatprep.subr.mxu0 0.0
    %1123 = vmatpush1.msra.mxu0 0.0
    %1124 = vmatprep.subr.mxu0 0.0
    %1125 = vmatpush1.msra.mxu0 %v1024
    %1126 = vmatprep.subr.mxu0 0.0
    %1127 = vmatpush1.msra.mxu0 %v1023
    %1128 = vmatprep.subr.mxu0 0.0
    %1129 = vmatpush1.msra.mxu0 %v1022
    %1130 = vmatprep.subr.mxu0 0.0
    %1131 = vmatpush1.msra.mxu0 %v1021
    %1132 = vmatprep.subr.mxu0 0.0
    %1133 = vmatpush1.msra.mxu0 %v1020
    %1134 = vmatprep.subr.mxu0 0.0
    %1135 = vmatpush1.msra.mxu0 %v1019
    %1136 = vmatprep.subr.mxu0 0.0
    %1137 = vmatpush1.msra.mxu0 %v1018
    %1138 = vmatprep.subr.mxu0 0.0
    %1139 = vmatpush1.msra.mxu0 %v1017
    %1140 = vmatprep.subr.mxu0 0.0
    %1141 = vmatpush1.msra.mxu0 %v1016
    %1142 = vmatprep.subr.mxu0 0.0
    %1143 = vmatpush1.msra.mxu0 %v1015
    %1144 = vmatprep.subr.mxu0 0.0
    %1145 = vmatpush2.msra.mxu0 0.0
    %1146 = vmatprep.subr.mxu0 0.0
    %1147 = vmatpush2.msra.mxu0 0.0
    %1148 = vmatprep.subr.mxu0 0.0
    %1149 = vmatpush2.msra.mxu0 0.0
    %1150 = vmatprep.subr.mxu0 0.0
    %1151 = vmatpush2.msra.mxu0 0.0
    %1152 = vmatprep.subr.mxu0 0.0
    %1153 = vmatpush2.msra.mxu0 0.0
    %1154 = vmatprep.subr.mxu0 0.0
    %1155 = vmatpush2.msra.mxu0 0.0
    %1156 = vmatprep.subr.mxu0 0.0
    %1157 = vmatpush2.msra.mxu0 0.0
    %1158 = vmatprep.subr.mxu0 0.0
    %1159 = vmatpush2.msra.mxu0 0.0
    %1160 = vmatprep.subr.mxu0 0.0
    %1161 = vmatpush2.msra.mxu0 0.0
    %1162 = vmatprep.subr.mxu0 0.0
    %1163 = vmatpush2.msra.mxu0 0.0
    %1164 = vmatprep.subr.mxu0 0.0
    %1165 = vmatpush2.msra.mxu0 0.0
    %1166 = vmatprep.subr.mxu0 0.0
    %1167 = vmatpush2.msra.mxu0 0.0
    %1168 = vmatprep.subr.mxu0 0.0
    %1169 = vmatpush2.msra.mxu0 0.0
    %1170 = vmatprep.subr.mxu0 0.0
    %1171 = vmatpush2.msra.mxu0 0.0
    %1172 = vmatprep.subr.mxu0 0.0
    %1173 = vmatpush2.msra.mxu0 0.0
    %1174 = vmatprep.subr.mxu0 0.0
    %1175 = vmatpush2.msra.mxu0 0.0
    %1176 = vmatprep.mubr.f32.mxu0 0.0
    %1177 = vmatmul.mubr.f32.gmra.mxu0 %v1110
    %v1178 = vpop.f32.mrf.mxu0
    %v1179 = vadd.f32 %v1106, %v1178
    %v1180 = vpop.f32.mrf.mxu0
    %1181 = vdwg.mxu0
    %s1182 = scalar_lea.vmem %s3, 320
    %v1183 = vld [vmem:[%s1182] sm:$0xff]
    %v1184 = vld [vmem:[%s1182 + $0x8] sm:$0xff]
    %v1185 = vld [vmem:[%s1182 + $0x10] sm:$0xff]
    %v1186 = vld [vmem:[%s1182 + $0x18] sm:$0xff]
    %v1187 = vld [vmem:[%s1182 + $0x20] sm:$0xff]
    %v1188 = vld [vmem:[%s1182 + $0x28] sm:$0xff]
    %v1189 = vld [vmem:[%s1182 + $0x30] sm:$0xff]
    %v1190 = vld [vmem:[%s1182 + $0x38] sm:$0xff]
    %v1191 = vld [vmem:[%s1182 + $0x40] sm:$0xff]
    %v1192 = vld [vmem:[%s1182 + $0x48] sm:$0xff]
    %v1194 = vsel %vm55, %v1011, 0
    %1196 = vmatprep.subr.mxu0 0.0
    %1197 = vmatpush1.msra.mxu0 0.0
    %1198 = vmatprep.subr.mxu0 0.0
    %1199 = vmatpush1.msra.mxu0 0.0
    %1200 = vmatprep.subr.mxu0 0.0
    %1201 = vmatpush1.msra.mxu0 0.0
    %1202 = vmatprep.subr.mxu0 0.0
    %1203 = vmatpush1.msra.mxu0 0.0
    %1204 = vmatprep.subr.mxu0 0.0
    %1205 = vmatpush1.msra.mxu0 0.0
    %1206 = vmatprep.subr.mxu0 0.0
    %1207 = vmatpush1.msra.mxu0 0.0
    %1208 = vmatprep.subr.mxu0 0.0
    %1209 = vmatpush1.msra.mxu0 %v1192
    %1210 = vmatprep.subr.mxu0 0.0
    %1211 = vmatpush1.msra.mxu0 %v1191
    %1212 = vmatprep.subr.mxu0 0.0
    %1213 = vmatpush1.msra.mxu0 %v1190
    %1214 = vmatprep.subr.mxu0 0.0
    %1215 = vmatpush1.msra.mxu0 %v1189
    %1216 = vmatprep.subr.mxu0 0.0
    %1217 = vmatpush1.msra.mxu0 %v1188
    %1218 = vmatprep.subr.mxu0 0.0
    %1219 = vmatpush1.msra.mxu0 %v1187
    %1220 = vmatprep.subr.mxu0 0.0
    %1221 = vmatpush1.msra.mxu0 %v1186
    %1222 = vmatprep.subr.mxu0 0.0
    %1223 = vmatpush1.msra.mxu0 %v1185
    %1224 = vmatprep.subr.mxu0 0.0
    %1225 = vmatpush1.msra.mxu0 %v1184
    %1226 = vmatprep.subr.mxu0 0.0
    %1227 = vmatpush1.msra.mxu0 %v1183
    %1228 = vmatprep.subr.mxu0 0.0
    %1229 = vmatpush2.msra.mxu0 0.0
    %1230 = vmatprep.subr.mxu0 0.0
    %1231 = vmatpush2.msra.mxu0 0.0
    %1232 = vmatprep.subr.mxu0 0.0
    %1233 = vmatpush2.msra.mxu0 0.0
    %1234 = vmatprep.subr.mxu0 0.0
    %1235 = vmatpush2.msra.mxu0 0.0
    %1236 = vmatprep.subr.mxu0 0.0
    %1237 = vmatpush2.msra.mxu0 0.0
    %1238 = vmatprep.subr.mxu0 0.0
    %1239 = vmatpush2.msra.mxu0 0.0
    %1240 = vmatprep.subr.mxu0 0.0
    %1241 = vmatpush2.msra.mxu0 0.0
    %1242 = vmatprep.subr.mxu0 0.0
    %1243 = vmatpush2.msra.mxu0 0.0
    %1244 = vmatprep.subr.mxu0 0.0
    %1245 = vmatpush2.msra.mxu0 0.0
    %1246 = vmatprep.subr.mxu0 0.0
    %1247 = vmatpush2.msra.mxu0 0.0
    %1248 = vmatprep.subr.mxu0 0.0
    %1249 = vmatpush2.msra.mxu0 0.0
    %1250 = vmatprep.subr.mxu0 0.0
    %1251 = vmatpush2.msra.mxu0 0.0
    %1252 = vmatprep.subr.mxu0 0.0
    %1253 = vmatpush2.msra.mxu0 0.0
    %1254 = vmatprep.subr.mxu0 0.0
    %1255 = vmatpush2.msra.mxu0 0.0
    %1256 = vmatprep.subr.mxu0 0.0
    %1257 = vmatpush2.msra.mxu0 0.0
    %1258 = vmatprep.subr.mxu0 0.0
    %1259 = vmatpush2.msra.mxu0 0.0
    %1260 = vmatprep.mubr.f32.mxu0 0.0
    %1261 = vmatmul.mubr.f32.gmra.mxu0 %v1194
    %v1262 = vpop.f32.mrf.mxu0
    %v1263 = vadd.f32 0.0, %v1262
    %v1264 = vpop.f32.mrf.mxu0
    %1265 = vdwg.mxu0
    %v1266 = vadd.f32 %v1179, %v1263
    %v1268 = vlaneseq
    %v1269 = vshrl.u32 %v1268, 7
    %v1270 = vsub.s32 0, %v1269
    %v1271 = vrot.slane %v1014, %v1270
    %v1273 = vadd.f32 %v1266, %v1271
    %v1274 = vmax.f32 %v1273, 0.0
    %s1275 = scalar_lea.vmem %s3, 80
    %v1276 = vld [vmem:[%s1275] sm:$0xff]
    %v1277 = vld [vmem:[%s1275 + $0x8] sm:$0xff]
    %v1278 = vld [vmem:[%s1275 + $0x10] sm:$0xff]
    %v1279 = vld [vmem:[%s1275 + $0x18] sm:$0xff]
    %v1280 = vld [vmem:[%s1275 + $0x20] sm:$0xff]
    %v1281 = vld [vmem:[%s1275 + $0x28] sm:$0xff]
    %v1282 = vld [vmem:[%s1275 + $0x30] sm:$0xff]
    %v1283 = vld [vmem:[%s1275 + $0x38] sm:$0xff]
    %v1284 = vld [vmem:[%s1275 + $0x40] sm:$0xff]
    %v1285 = vld [vmem:[%s1275 + $0x48] sm:$0xff]
    %s1286 = scalar_lea.vmem %s3, 240
    %v1287 = vld [vmem:[%s1286] sm:$0xff]
    %v1288 = vld [vmem:[%s1286 + $0x8] sm:$0xff]
    %v1289 = vld [vmem:[%s1286 + $0x10] sm:$0xff]
    %v1290 = vld [vmem:[%s1286 + $0x18] sm:$0xff]
    %v1291 = vld [vmem:[%s1286 + $0x20] sm:$0xff]
    %v1292 = vld [vmem:[%s1286 + $0x28] sm:$0xff]
    %v1293 = vld [vmem:[%s1286 + $0x30] sm:$0xff]
    %v1294 = vld [vmem:[%s1286 + $0x38] sm:$0xff]
    %v1295 = vld [vmem:[%s1286 + $0x40] sm:$0xff]
    %v1296 = vld [vmem:[%s1286 + $0x48] sm:$0xff]
    %1297 = vmatprep.subr.mxu0 0.0
    %1298 = vmatpush1.msra.mxu0 0.0
    %1299 = vmatprep.subr.mxu0 0.0
    %1300 = vmatpush1.msra.mxu0 0.0
    %1301 = vmatprep.subr.mxu0 0.0
    %1302 = vmatpush1.msra.mxu0 0.0
    %1303 = vmatprep.subr.mxu0 0.0
    %1304 = vmatpush1.msra.mxu0 0.0
    %1305 = vmatprep.subr.mxu0 0.0
    %1306 = vmatpush1.msra.mxu0 0.0
    %1307 = vmatprep.subr.mxu0 0.0
    %1308 = vmatpush1.msra.mxu0 0.0
    %1309 = vmatprep.subr.mxu0 0.0
    %1310 = vmatpush1.msra.mxu0 %v1296
    %1311 = vmatprep.subr.mxu0 0.0
    %1312 = vmatpush1.msra.mxu0 %v1295
    %1313 = vmatprep.subr.mxu0 0.0
    %1314 = vmatpush1.msra.mxu0 %v1294
    %1315 = vmatprep.subr.mxu0 0.0
    %1316 = vmatpush1.msra.mxu0 %v1293
    %1317 = vmatprep.subr.mxu0 0.0
    %1318 = vmatpush1.msra.mxu0 %v1292
    %1319 = vmatprep.subr.mxu0 0.0
    %1320 = vmatpush1.msra.mxu0 %v1291
    %1321 = vmatprep.subr.mxu0 0.0
    %1322 = vmatpush1.msra.mxu0 %v1290
    %1323 = vmatprep.subr.mxu0 0.0
    %1324 = vmatpush1.msra.mxu0 %v1289
    %1325 = vmatprep.subr.mxu0 0.0
    %1326 = vmatpush1.msra.mxu0 %v1288
    %1327 = vmatprep.subr.mxu0 0.0
    %1328 = vmatpush1.msra.mxu0 %v1287
    %1329 = vmatprep.subr.mxu0 0.0
    %1330 = vmatpush2.msra.mxu0 0.0
    %1331 = vmatprep.subr.mxu0 0.0
    %1332 = vmatpush2.msra.mxu0 0.0
    %1333 = vmatprep.subr.mxu0 0.0
    %1334 = vmatpush2.msra.mxu0 0.0
    %1335 = vmatprep.subr.mxu0 0.0
    %1336 = vmatpush2.msra.mxu0 0.0
    %1337 = vmatprep.subr.mxu0 0.0
    %1338 = vmatpush2.msra.mxu0 0.0
    %1339 = vmatprep.subr.mxu0 0.0
    %1340 = vmatpush2.msra.mxu0 0.0
    %1341 = vmatprep.subr.mxu0 0.0
    %1342 = vmatpush2.msra.mxu0 0.0
    %1343 = vmatprep.subr.mxu0 0.0
    %1344 = vmatpush2.msra.mxu0 0.0
    %1345 = vmatprep.subr.mxu0 0.0
    %1346 = vmatpush2.msra.mxu0 0.0
    %1347 = vmatprep.subr.mxu0 0.0
    %1348 = vmatpush2.msra.mxu0 0.0
    %1349 = vmatprep.subr.mxu0 0.0
    %1350 = vmatpush2.msra.mxu0 0.0
    %1351 = vmatprep.subr.mxu0 0.0
    %1352 = vmatpush2.msra.mxu0 0.0
    %1353 = vmatprep.subr.mxu0 0.0
    %1354 = vmatpush2.msra.mxu0 0.0
    %1355 = vmatprep.subr.mxu0 0.0
    %1356 = vmatpush2.msra.mxu0 0.0
    %1357 = vmatprep.subr.mxu0 0.0
    %1358 = vmatpush2.msra.mxu0 0.0
    %1359 = vmatprep.subr.mxu0 0.0
    %1360 = vmatpush2.msra.mxu0 0.0
    %1361 = vmatprep.mubr.f32.mxu0 0.0
    %1362 = vmatmul.mubr.f32.gmra.mxu0 %v1037
    %v1363 = vpop.f32.mrf.mxu0
    %v1364 = vadd.f32 0.0, %v1363
    %v1365 = vpop.f32.mrf.mxu0
    %1366 = vdwg.mxu0
    %1367 = vmatprep.subr.mxu0 0.0
    %1368 = vmatpush1.msra.mxu0 0.0
    %1369 = vmatprep.subr.mxu0 0.0
    %1370 = vmatpush1.msra.mxu0 0.0
    %1371 = vmatprep.subr.mxu0 0.0
    %1372 = vmatpush1.msra.mxu0 0.0
    %1373 = vmatprep.subr.mxu0 0.0
    %1374 = vmatpush1.msra.mxu0 0.0
    %1375 = vmatprep.subr.mxu0 0.0
    %1376 = vmatpush1.msra.mxu0 0.0
    %1377 = vmatprep.subr.mxu0 0.0
    %1378 = vmatpush1.msra.mxu0 0.0
    %1379 = vmatprep.subr.mxu0 0.0
    %1380 = vmatpush1.msra.mxu0 %v1285
    %1381 = vmatprep.subr.mxu0 0.0
    %1382 = vmatpush1.msra.mxu0 %v1284
    %1383 = vmatprep.subr.mxu0 0.0
    %1384 = vmatpush1.msra.mxu0 %v1283
    %1385 = vmatprep.subr.mxu0 0.0
    %1386 = vmatpush1.msra.mxu0 %v1282
    %1387 = vmatprep.subr.mxu0 0.0
    %1388 = vmatpush1.msra.mxu0 %v1281
    %1389 = vmatprep.subr.mxu0 0.0
    %1390 = vmatpush1.msra.mxu0 %v1280
    %1391 = vmatprep.subr.mxu0 0.0
    %1392 = vmatpush1.msra.mxu0 %v1279
    %1393 = vmatprep.subr.mxu0 0.0
    %1394 = vmatpush1.msra.mxu0 %v1278
    %1395 = vmatprep.subr.mxu0 0.0
    %1396 = vmatpush1.msra.mxu0 %v1277
    %1397 = vmatprep.subr.mxu0 0.0
    %1398 = vmatpush1.msra.mxu0 %v1276
    %1399 = vmatprep.subr.mxu0 0.0
    %1400 = vmatpush2.msra.mxu0 0.0
    %1401 = vmatprep.subr.mxu0 0.0
    %1402 = vmatpush2.msra.mxu0 0.0
    %1403 = vmatprep.subr.mxu0 0.0
    %1404 = vmatpush2.msra.mxu0 0.0
    %1405 = vmatprep.subr.mxu0 0.0
    %1406 = vmatpush2.msra.mxu0 0.0
    %1407 = vmatprep.subr.mxu0 0.0
    %1408 = vmatpush2.msra.mxu0 0.0
    %1409 = vmatprep.subr.mxu0 0.0
    %1410 = vmatpush2.msra.mxu0 0.0
    %1411 = vmatprep.subr.mxu0 0.0
    %1412 = vmatpush2.msra.mxu0 0.0
    %1413 = vmatprep.subr.mxu0 0.0
    %1414 = vmatpush2.msra.mxu0 0.0
    %1415 = vmatprep.subr.mxu0 0.0
    %1416 = vmatpush2.msra.mxu0 0.0
    %1417 = vmatprep.subr.mxu0 0.0
    %1418 = vmatpush2.msra.mxu0 0.0
    %1419 = vmatprep.subr.mxu0 0.0
    %1420 = vmatpush2.msra.mxu0 0.0
    %1421 = vmatprep.subr.mxu0 0.0
    %1422 = vmatpush2.msra.mxu0 0.0
    %1423 = vmatprep.subr.mxu0 0.0
    %1424 = vmatpush2.msra.mxu0 0.0
    %1425 = vmatprep.subr.mxu0 0.0
    %1426 = vmatpush2.msra.mxu0 0.0
    %1427 = vmatprep.subr.mxu0 0.0
    %1428 = vmatpush2.msra.mxu0 0.0
    %1429 = vmatprep.subr.mxu0 0.0
    %1430 = vmatpush2.msra.mxu0 0.0
    %1431 = vmatprep.mubr.f32.mxu0 0.0
    %1432 = vmatmul.mubr.f32.gmra.mxu0 %v1110
    %v1433 = vpop.f32.mrf.mxu0
    %v1434 = vadd.f32 %v1364, %v1433
    %v1435 = vpop.f32.mrf.mxu0
    %1436 = vdwg.mxu0
    %s1437 = scalar_lea.vmem %s3, 400
    %v1438 = vld [vmem:[%s1437] sm:$0xff]
    %v1439 = vld [vmem:[%s1437 + $0x8] sm:$0xff]
    %v1440 = vld [vmem:[%s1437 + $0x10] sm:$0xff]
    %v1441 = vld [vmem:[%s1437 + $0x18] sm:$0xff]
    %v1442 = vld [vmem:[%s1437 + $0x20] sm:$0xff]
    %v1443 = vld [vmem:[%s1437 + $0x28] sm:$0xff]
    %v1444 = vld [vmem:[%s1437 + $0x30] sm:$0xff]
    %v1445 = vld [vmem:[%s1437 + $0x38] sm:$0xff]
    %v1446 = vld [vmem:[%s1437 + $0x40] sm:$0xff]
    %v1447 = vld [vmem:[%s1437 + $0x48] sm:$0xff]
    %1448 = vmatprep.subr.mxu0 0.0
    %1449 = vmatpush1.msra.mxu0 0.0
    %1450 = vmatprep.subr.mxu0 0.0
    %1451 = vmatpush1.msra.mxu0 0.0
    %1452 = vmatprep.subr.mxu0 0.0
    %1453 = vmatpush1.msra.mxu0 0.0
    %1454 = vmatprep.subr.mxu0 0.0
    %1455 = vmatpush1.msra.mxu0 0.0
    %1456 = vmatprep.subr.mxu0 0.0
    %1457 = vmatpush1.msra.mxu0 0.0
    %1458 = vmatprep.subr.mxu0 0.0
    %1459 = vmatpush1.msra.mxu0 0.0
    %1460 = vmatprep.subr.mxu0 0.0
    %1461 = vmatpush1.msra.mxu0 %v1447
    %1462 = vmatprep.subr.mxu0 0.0
    %1463 = vmatpush1.msra.mxu0 %v1446
    %1464 = vmatprep.subr.mxu0 0.0
    %1465 = vmatpush1.msra.mxu0 %v1445
    %1466 = vmatprep.subr.mxu0 0.0
    %1467 = vmatpush1.msra.mxu0 %v1444
    %1468 = vmatprep.subr.mxu0 0.0
    %1469 = vmatpush1.msra.mxu0 %v1443
    %1470 = vmatprep.subr.mxu0 0.0
    %1471 = vmatpush1.msra.mxu0 %v1442
    %1472 = vmatprep.subr.mxu0 0.0
    %1473 = vmatpush1.msra.mxu0 %v1441
    %1474 = vmatprep.subr.mxu0 0.0
    %1475 = vmatpush1.msra.mxu0 %v1440
    %1476 = vmatprep.subr.mxu0 0.0
    %1477 = vmatpush1.msra.mxu0 %v1439
    %1478 = vmatprep.subr.mxu0 0.0
    %1479 = vmatpush1.msra.mxu0 %v1438
    %1480 = vmatprep.subr.mxu0 0.0
    %1481 = vmatpush2.msra.mxu0 0.0
    %1482 = vmatprep.subr.mxu0 0.0
    %1483 = vmatpush2.msra.mxu0 0.0
    %1484 = vmatprep.subr.mxu0 0.0
    %1485 = vmatpush2.msra.mxu0 0.0
    %1486 = vmatprep.subr.mxu0 0.0
    %1487 = vmatpush2.msra.mxu0 0.0
    %1488 = vmatprep.subr.mxu0 0.0
    %1489 = vmatpush2.msra.mxu0 0.0
    %1490 = vmatprep.subr.mxu0 0.0
    %1491 = vmatpush2.msra.mxu0 0.0
    %1492 = vmatprep.subr.mxu0 0.0
    %1493 = vmatpush2.msra.mxu0 0.0
    %1494 = vmatprep.subr.mxu0 0.0
    %1495 = vmatpush2.msra.mxu0 0.0
    %1496 = vmatprep.subr.mxu0 0.0
    %1497 = vmatpush2.msra.mxu0 0.0
    %1498 = vmatprep.subr.mxu0 0.0
    %1499 = vmatpush2.msra.mxu0 0.0
    %1500 = vmatprep.subr.mxu0 0.0
    %1501 = vmatpush2.msra.mxu0 0.0
    %1502 = vmatprep.subr.mxu0 0.0
    %1503 = vmatpush2.msra.mxu0 0.0
    %1504 = vmatprep.subr.mxu0 0.0
    %1505 = vmatpush2.msra.mxu0 0.0
    %1506 = vmatprep.subr.mxu0 0.0
    %1507 = vmatpush2.msra.mxu0 0.0
    %1508 = vmatprep.subr.mxu0 0.0
    %1509 = vmatpush2.msra.mxu0 0.0
    %1510 = vmatprep.subr.mxu0 0.0
    %1511 = vmatpush2.msra.mxu0 0.0
    %1512 = vmatprep.mubr.f32.mxu0 0.0
    %1513 = vmatmul.mubr.f32.gmra.mxu0 %v1194
    %v1514 = vpop.f32.mrf.mxu0
    %v1515 = vadd.f32 0.0, %v1514
    %v1516 = vpop.f32.mrf.mxu0
    %1517 = vdwg.mxu0
    %v1518 = vadd.f32 %v1434, %v1515
    %v1519 = vadd.f32 %v1518, %v1271
    %v1520 = vmax.f32 %v1519, 0.0
    %v1521 = vmax.f32 %v1274, %v1520
    %1522 = vmatprep.subr.mxu0 0.0
    %1523 = vmatpush1.msra.mxu0 0.0
    %1524 = vmatprep.subr.mxu0 0.0
    %1525 = vmatpush1.msra.mxu0 0.0
    %1526 = vmatprep.subr.mxu0 0.0
    %1527 = vmatpush1.msra.mxu0 0.0
    %1528 = vmatprep.subr.mxu0 0.0
    %1529 = vmatpush1.msra.mxu0 0.0
    %1530 = vmatprep.subr.mxu0 0.0
    %1531 = vmatpush1.msra.mxu0 0.0
    %1532 = vmatprep.subr.mxu0 0.0
    %1533 = vmatpush1.msra.mxu0 0.0
    %1534 = vmatprep.subr.mxu0 0.0
    %1535 = vmatpush1.msra.mxu0 %v1035
    %1536 = vmatprep.subr.mxu0 0.0
    %1537 = vmatpush1.msra.mxu0 %v1034
    %1538 = vmatprep.subr.mxu0 0.0
    %1539 = vmatpush1.msra.mxu0 %v1033
    %1540 = vmatprep.subr.mxu0 0.0
    %1541 = vmatpush1.msra.mxu0 %v1032
    %1542 = vmatprep.subr.mxu0 0.0
    %1543 = vmatpush1.msra.mxu0 %v1031
    %1544 = vmatprep.subr.mxu0 0.0
    %1545 = vmatpush1.msra.mxu0 %v1030
    %1546 = vmatprep.subr.mxu0 0.0
    %1547 = vmatpush1.msra.mxu0 %v1029
    %1548 = vmatprep.subr.mxu0 0.0
    %1549 = vmatpush1.msra.mxu0 %v1028
    %1550 = vmatprep.subr.mxu0 0.0
    %1551 = vmatpush1.msra.mxu0 %v1027
    %1552 = vmatprep.subr.mxu0 0.0
    %1553 = vmatpush1.msra.mxu0 %v1026
    %1554 = vmatprep.subr.mxu0 0.0
    %1555 = vmatpush2.msra.mxu0 0.0
    %1556 = vmatprep.subr.mxu0 0.0
    %1557 = vmatpush2.msra.mxu0 0.0
    %1558 = vmatprep.subr.mxu0 0.0
    %1559 = vmatpush2.msra.mxu0 0.0
    %1560 = vmatprep.subr.mxu0 0.0
    %1561 = vmatpush2.msra.mxu0 0.0
    %1562 = vmatprep.subr.mxu0 0.0
    %1563 = vmatpush2.msra.mxu0 0.0
    %1564 = vmatprep.subr.mxu0 0.0
    %1565 = vmatpush2.msra.mxu0 0.0
    %1566 = vmatprep.subr.mxu0 0.0
    %1567 = vmatpush2.msra.mxu0 0.0
    %1568 = vmatprep.subr.mxu0 0.0
    %1569 = vmatpush2.msra.mxu0 0.0
    %1570 = vmatprep.subr.mxu0 0.0
    %1571 = vmatpush2.msra.mxu0 0.0
    %1572 = vmatprep.subr.mxu0 0.0
    %1573 = vmatpush2.msra.mxu0 0.0
    %1574 = vmatprep.subr.mxu0 0.0
    %1575 = vmatpush2.msra.mxu0 0.0
    %1576 = vmatprep.subr.mxu0 0.0
    %1577 = vmatpush2.msra.mxu0 0.0
    %1578 = vmatprep.subr.mxu0 0.0
    %1579 = vmatpush2.msra.mxu0 0.0
    %1580 = vmatprep.subr.mxu0 0.0
    %1581 = vmatpush2.msra.mxu0 0.0
    %1582 = vmatprep.subr.mxu0 0.0
    %1583 = vmatpush2.msra.mxu0 0.0
    %1584 = vmatprep.subr.mxu0 0.0
    %1585 = vmatpush2.msra.mxu0 0.0
    %1586 = vmatprep.mubr.f32.mxu0 0.0
    %1587 = vmatmul.mubr.f32.gmra.mxu0 %v1194
    %v1588 = vpop.f32.mrf.mxu0
    %v1589 = vadd.f32 0.0, %v1588
    %v1590 = vpop.f32.mrf.mxu0
    %1591 = vdwg.mxu0
    %1592 = vmatprep.subr.mxu0 0.0
    %1593 = vmatpush1.msra.mxu0 0.0
    %1594 = vmatprep.subr.mxu0 0.0
    %1595 = vmatpush1.msra.mxu0 0.0
    %1596 = vmatprep.subr.mxu0 0.0
    %1597 = vmatpush1.msra.mxu0 0.0
    %1598 = vmatprep.subr.mxu0 0.0
    %1599 = vmatpush1.msra.mxu0 0.0
    %1600 = vmatprep.subr.mxu0 0.0
    %1601 = vmatpush1.msra.mxu0 0.0
    %1602 = vmatprep.subr.mxu0 0.0
    %1603 = vmatpush1.msra.mxu0 0.0
    %1604 = vmatprep.subr.mxu0 0.0
    %1605 = vmatpush1.msra.mxu0 %v1024
    %1606 = vmatprep.subr.mxu0 0.0
    %1607 = vmatpush1.msra.mxu0 %v1023
    %1608 = vmatprep.subr.mxu0 0.0
    %1609 = vmatpush1.msra.mxu0 %v1022
    %1610 = vmatprep.subr.mxu0 0.0
    %1611 = vmatpush1.msra.mxu0 %v1021
    %1612 = vmatprep.subr.mxu0 0.0
    %1613 = vmatpush1.msra.mxu0 %v1020
    %1614 = vmatprep.subr.mxu0 0.0
    %1615 = vmatpush1.msra.mxu0 %v1019
    %1616 = vmatprep.subr.mxu0 0.0
    %1617 = vmatpush1.msra.mxu0 %v1018
    %1618 = vmatprep.subr.mxu0 0.0
    %1619 = vmatpush1.msra.mxu0 %v1017
    %1620 = vmatprep.subr.mxu0 0.0
    %1621 = vmatpush1.msra.mxu0 %v1016
    %1622 = vmatprep.subr.mxu0 0.0
    %1623 = vmatpush1.msra.mxu0 %v1015
    %1624 = vmatprep.subr.mxu0 0.0
    %1625 = vmatpush2.msra.mxu0 0.0
    %1626 = vmatprep.subr.mxu0 0.0
    %1627 = vmatpush2.msra.mxu0 0.0
    %1628 = vmatprep.subr.mxu0 0.0
    %1629 = vmatpush2.msra.mxu0 0.0
    %1630 = vmatprep.subr.mxu0 0.0
    %1631 = vmatpush2.msra.mxu0 0.0
    %1632 = vmatprep.subr.mxu0 0.0
    %1633 = vmatpush2.msra.mxu0 0.0
    %1634 = vmatprep.subr.mxu0 0.0
    %1635 = vmatpush2.msra.mxu0 0.0
    %1636 = vmatprep.subr.mxu0 0.0
    %1637 = vmatpush2.msra.mxu0 0.0
    %1638 = vmatprep.subr.mxu0 0.0
    %1639 = vmatpush2.msra.mxu0 0.0
    %1640 = vmatprep.subr.mxu0 0.0
    %1641 = vmatpush2.msra.mxu0 0.0
    %1642 = vmatprep.subr.mxu0 0.0
    %1643 = vmatpush2.msra.mxu0 0.0
    %1644 = vmatprep.subr.mxu0 0.0
    %1645 = vmatpush2.msra.mxu0 0.0
    %1646 = vmatprep.subr.mxu0 0.0
    %1647 = vmatpush2.msra.mxu0 0.0
    %1648 = vmatprep.subr.mxu0 0.0
    %1649 = vmatpush2.msra.mxu0 0.0
    %1650 = vmatprep.subr.mxu0 0.0
    %1651 = vmatpush2.msra.mxu0 0.0
    %1652 = vmatprep.subr.mxu0 0.0
    %1653 = vmatpush2.msra.mxu0 0.0
    %1654 = vmatprep.subr.mxu0 0.0
    %1655 = vmatpush2.msra.mxu0 0.0
    %1656 = vmatprep.mubr.f32.mxu0 0.0
    %1657 = vmatmul.mubr.f32.gmra.mxu0 %v1037
    %v1658 = vpop.f32.mrf.mxu0
    %v1659 = vadd.f32 %v1589, %v1658
    %v1660 = vpop.f32.mrf.mxu0
    %1661 = vdwg.mxu0
    %v1663 = vsel %vm55, %v1013, 0
    %1665 = vmatprep.subr.mxu0 0.0
    %1666 = vmatpush1.msra.mxu0 0.0
    %1667 = vmatprep.subr.mxu0 0.0
    %1668 = vmatpush1.msra.mxu0 0.0
    %1669 = vmatprep.subr.mxu0 0.0
    %1670 = vmatpush1.msra.mxu0 0.0
    %1671 = vmatprep.subr.mxu0 0.0
    %1672 = vmatpush1.msra.mxu0 0.0
    %1673 = vmatprep.subr.mxu0 0.0
    %1674 = vmatpush1.msra.mxu0 0.0
    %1675 = vmatprep.subr.mxu0 0.0
    %1676 = vmatpush1.msra.mxu0 0.0
    %1677 = vmatprep.subr.mxu0 0.0
    %1678 = vmatpush1.msra.mxu0 %v1192
    %1679 = vmatprep.subr.mxu0 0.0
    %1680 = vmatpush1.msra.mxu0 %v1191
    %1681 = vmatprep.subr.mxu0 0.0
    %1682 = vmatpush1.msra.mxu0 %v1190
    %1683 = vmatprep.subr.mxu0 0.0
    %1684 = vmatpush1.msra.mxu0 %v1189
    %1685 = vmatprep.subr.mxu0 0.0
    %1686 = vmatpush1.msra.mxu0 %v1188
    %1687 = vmatprep.subr.mxu0 0.0
    %1688 = vmatpush1.msra.mxu0 %v1187
    %1689 = vmatprep.subr.mxu0 0.0
    %1690 = vmatpush1.msra.mxu0 %v1186
    %1691 = vmatprep.subr.mxu0 0.0
    %1692 = vmatpush1.msra.mxu0 %v1185
    %1693 = vmatprep.subr.mxu0 0.0
    %1694 = vmatpush1.msra.mxu0 %v1184
    %1695 = vmatprep.subr.mxu0 0.0
    %1696 = vmatpush1.msra.mxu0 %v1183
    %1697 = vmatprep.subr.mxu0 0.0
    %1698 = vmatpush2.msra.mxu0 0.0
    %1699 = vmatprep.subr.mxu0 0.0
    %1700 = vmatpush2.msra.mxu0 0.0
    %1701 = vmatprep.subr.mxu0 0.0
    %1702 = vmatpush2.msra.mxu0 0.0
    %1703 = vmatprep.subr.mxu0 0.0
    %1704 = vmatpush2.msra.mxu0 0.0
    %1705 = vmatprep.subr.mxu0 0.0
    %1706 = vmatpush2.msra.mxu0 0.0
    %1707 = vmatprep.subr.mxu0 0.0
    %1708 = vmatpush2.msra.mxu0 0.0
    %1709 = vmatprep.subr.mxu0 0.0
    %1710 = vmatpush2.msra.mxu0 0.0
    %1711 = vmatprep.subr.mxu0 0.0
    %1712 = vmatpush2.msra.mxu0 0.0
    %1713 = vmatprep.subr.mxu0 0.0
    %1714 = vmatpush2.msra.mxu0 0.0
    %1715 = vmatprep.subr.mxu0 0.0
    %1716 = vmatpush2.msra.mxu0 0.0
    %1717 = vmatprep.subr.mxu0 0.0
    %1718 = vmatpush2.msra.mxu0 0.0
    %1719 = vmatprep.subr.mxu0 0.0
    %1720 = vmatpush2.msra.mxu0 0.0
    %1721 = vmatprep.subr.mxu0 0.0
    %1722 = vmatpush2.msra.mxu0 0.0
    %1723 = vmatprep.subr.mxu0 0.0
    %1724 = vmatpush2.msra.mxu0 0.0
    %1725 = vmatprep.subr.mxu0 0.0
    %1726 = vmatpush2.msra.mxu0 0.0
    %1727 = vmatprep.subr.mxu0 0.0
    %1728 = vmatpush2.msra.mxu0 0.0
    %1729 = vmatprep.mubr.f32.mxu0 0.0
    %1730 = vmatmul.mubr.f32.gmra.mxu0 %v1663
    %v1731 = vpop.f32.mrf.mxu0
    %v1732 = vadd.f32 0.0, %v1731
    %v1733 = vpop.f32.mrf.mxu0
    %1734 = vdwg.mxu0
    %v1735 = vadd.f32 %v1659, %v1732
    %v1736 = vadd.f32 %v1735, %v1271
    %v1737 = vmax.f32 %v1736, 0.0
    %v1738 = vmax.f32 %v1521, %v1737
    %1739 = vmatprep.subr.mxu0 0.0
    %1740 = vmatpush1.msra.mxu0 0.0
    %1741 = vmatprep.subr.mxu0 0.0
    %1742 = vmatpush1.msra.mxu0 0.0
    %1743 = vmatprep.subr.mxu0 0.0
    %1744 = vmatpush1.msra.mxu0 0.0
    %1745 = vmatprep.subr.mxu0 0.0
    %1746 = vmatpush1.msra.mxu0 0.0
    %1747 = vmatprep.subr.mxu0 0.0
    %1748 = vmatpush1.msra.mxu0 0.0
    %1749 = vmatprep.subr.mxu0 0.0
    %1750 = vmatpush1.msra.mxu0 0.0
    %1751 = vmatprep.subr.mxu0 0.0
    %1752 = vmatpush1.msra.mxu0 %v1296
    %1753 = vmatprep.subr.mxu0 0.0
    %1754 = vmatpush1.msra.mxu0 %v1295
    %1755 = vmatprep.subr.mxu0 0.0
    %1756 = vmatpush1.msra.mxu0 %v1294
    %1757 = vmatprep.subr.mxu0 0.0
    %1758 = vmatpush1.msra.mxu0 %v1293
    %1759 = vmatprep.subr.mxu0 0.0
    %1760 = vmatpush1.msra.mxu0 %v1292
    %1761 = vmatprep.subr.mxu0 0.0
    %1762 = vmatpush1.msra.mxu0 %v1291
    %1763 = vmatprep.subr.mxu0 0.0
    %1764 = vmatpush1.msra.mxu0 %v1290
    %1765 = vmatprep.subr.mxu0 0.0
    %1766 = vmatpush1.msra.mxu0 %v1289
    %1767 = vmatprep.subr.mxu0 0.0
    %1768 = vmatpush1.msra.mxu0 %v1288
    %1769 = vmatprep.subr.mxu0 0.0
    %1770 = vmatpush1.msra.mxu0 %v1287
    %1771 = vmatprep.subr.mxu0 0.0
    %1772 = vmatpush2.msra.mxu0 0.0
    %1773 = vmatprep.subr.mxu0 0.0
    %1774 = vmatpush2.msra.mxu0 0.0
    %1775 = vmatprep.subr.mxu0 0.0
    %1776 = vmatpush2.msra.mxu0 0.0
    %1777 = vmatprep.subr.mxu0 0.0
    %1778 = vmatpush2.msra.mxu0 0.0
    %1779 = vmatprep.subr.mxu0 0.0
    %1780 = vmatpush2.msra.mxu0 0.0
    %1781 = vmatprep.subr.mxu0 0.0
    %1782 = vmatpush2.msra.mxu0 0.0
    %1783 = vmatprep.subr.mxu0 0.0
    %1784 = vmatpush2.msra.mxu0 0.0
    %1785 = vmatprep.subr.mxu0 0.0
    %1786 = vmatpush2.msra.mxu0 0.0
    %1787 = vmatprep.subr.mxu0 0.0
    %1788 = vmatpush2.msra.mxu0 0.0
    %1789 = vmatprep.subr.mxu0 0.0
    %1790 = vmatpush2.msra.mxu0 0.0
    %1791 = vmatprep.subr.mxu0 0.0
    %1792 = vmatpush2.msra.mxu0 0.0
    %1793 = vmatprep.subr.mxu0 0.0
    %1794 = vmatpush2.msra.mxu0 0.0
    %1795 = vmatprep.subr.mxu0 0.0
    %1796 = vmatpush2.msra.mxu0 0.0
    %1797 = vmatprep.subr.mxu0 0.0
    %1798 = vmatpush2.msra.mxu0 0.0
    %1799 = vmatprep.subr.mxu0 0.0
    %1800 = vmatpush2.msra.mxu0 0.0
    %1801 = vmatprep.subr.mxu0 0.0
    %1802 = vmatpush2.msra.mxu0 0.0
    %1803 = vmatprep.mubr.f32.mxu0 0.0
    %1804 = vmatmul.mubr.f32.gmra.mxu0 %v1194
    %v1805 = vpop.f32.mrf.mxu0
    %v1806 = vadd.f32 0.0, %v1805
    %v1807 = vpop.f32.mrf.mxu0
    %1808 = vdwg.mxu0
    %1809 = vmatprep.subr.mxu0 0.0
    %1810 = vmatpush1.msra.mxu0 0.0
    %1811 = vmatprep.subr.mxu0 0.0
    %1812 = vmatpush1.msra.mxu0 0.0
    %1813 = vmatprep.subr.mxu0 0.0
    %1814 = vmatpush1.msra.mxu0 0.0
    %1815 = vmatprep.subr.mxu0 0.0
    %1816 = vmatpush1.msra.mxu0 0.0
    %1817 = vmatprep.subr.mxu0 0.0
    %1818 = vmatpush1.msra.mxu0 0.0
    %1819 = vmatprep.subr.mxu0 0.0
    %1820 = vmatpush1.msra.mxu0 0.0
    %1821 = vmatprep.subr.mxu0 0.0
    %1822 = vmatpush1.msra.mxu0 %v1285
    %1823 = vmatprep.subr.mxu0 0.0
    %1824 = vmatpush1.msra.mxu0 %v1284
    %1825 = vmatprep.subr.mxu0 0.0
    %1826 = vmatpush1.msra.mxu0 %v1283
    %1827 = vmatprep.subr.mxu0 0.0
    %1828 = vmatpush1.msra.mxu0 %v1282
    %1829 = vmatprep.subr.mxu0 0.0
    %1830 = vmatpush1.msra.mxu0 %v1281
    %1831 = vmatprep.subr.mxu0 0.0
    %1832 = vmatpush1.msra.mxu0 %v1280
    %1833 = vmatprep.subr.mxu0 0.0
    %1834 = vmatpush1.msra.mxu0 %v1279
    %1835 = vmatprep.subr.mxu0 0.0
    %1836 = vmatpush1.msra.mxu0 %v1278
    %1837 = vmatprep.subr.mxu0 0.0
    %1838 = vmatpush1.msra.mxu0 %v1277
    %1839 = vmatprep.subr.mxu0 0.0
    %1840 = vmatpush1.msra.mxu0 %v1276
    %1841 = vmatprep.subr.mxu0 0.0
    %1842 = vmatpush2.msra.mxu0 0.0
    %1843 = vmatprep.subr.mxu0 0.0
    %1844 = vmatpush2.msra.mxu0 0.0
    %1845 = vmatprep.subr.mxu0 0.0
    %1846 = vmatpush2.msra.mxu0 0.0
    %1847 = vmatprep.subr.mxu0 0.0
    %1848 = vmatpush2.msra.mxu0 0.0
    %1849 = vmatprep.subr.mxu0 0.0
    %1850 = vmatpush2.msra.mxu0 0.0
    %1851 = vmatprep.subr.mxu0 0.0
    %1852 = vmatpush2.msra.mxu0 0.0
    %1853 = vmatprep.subr.mxu0 0.0
    %1854 = vmatpush2.msra.mxu0 0.0
    %1855 = vmatprep.subr.mxu0 0.0
    %1856 = vmatpush2.msra.mxu0 0.0
    %1857 = vmatprep.subr.mxu0 0.0
    %1858 = vmatpush2.msra.mxu0 0.0
    %1859 = vmatprep.subr.mxu0 0.0
    %1860 = vmatpush2.msra.mxu0 0.0
    %1861 = vmatprep.subr.mxu0 0.0
    %1862 = vmatpush2.msra.mxu0 0.0
    %1863 = vmatprep.subr.mxu0 0.0
    %1864 = vmatpush2.msra.mxu0 0.0
    %1865 = vmatprep.subr.mxu0 0.0
    %1866 = vmatpush2.msra.mxu0 0.0
    %1867 = vmatprep.subr.mxu0 0.0
    %1868 = vmatpush2.msra.mxu0 0.0
    %1869 = vmatprep.subr.mxu0 0.0
    %1870 = vmatpush2.msra.mxu0 0.0
    %1871 = vmatprep.subr.mxu0 0.0
    %1872 = vmatpush2.msra.mxu0 0.0
    %1873 = vmatprep.mubr.f32.mxu0 0.0
    %1874 = vmatmul.mubr.f32.gmra.mxu0 %v1037
    %v1875 = vpop.f32.mrf.mxu0
    %v1876 = vadd.f32 %v1806, %v1875
    %v1877 = vpop.f32.mrf.mxu0
    %1878 = vdwg.mxu0
    %1879 = vmatprep.subr.mxu0 0.0
    %1880 = vmatpush1.msra.mxu0 0.0
    %1881 = vmatprep.subr.mxu0 0.0
    %1882 = vmatpush1.msra.mxu0 0.0
    %1883 = vmatprep.subr.mxu0 0.0
    %1884 = vmatpush1.msra.mxu0 0.0
    %1885 = vmatprep.subr.mxu0 0.0
    %1886 = vmatpush1.msra.mxu0 0.0
    %1887 = vmatprep.subr.mxu0 0.0
    %1888 = vmatpush1.msra.mxu0 0.0
    %1889 = vmatprep.subr.mxu0 0.0
    %1890 = vmatpush1.msra.mxu0 0.0
    %1891 = vmatprep.subr.mxu0 0.0
    %1892 = vmatpush1.msra.mxu0 %v1447
    %1893 = vmatprep.subr.mxu0 0.0
    %1894 = vmatpush1.msra.mxu0 %v1446
    %1895 = vmatprep.subr.mxu0 0.0
    %1896 = vmatpush1.msra.mxu0 %v1445
    %1897 = vmatprep.subr.mxu0 0.0
    %1898 = vmatpush1.msra.mxu0 %v1444
    %1899 = vmatprep.subr.mxu0 0.0
    %1900 = vmatpush1.msra.mxu0 %v1443
    %1901 = vmatprep.subr.mxu0 0.0
    %1902 = vmatpush1.msra.mxu0 %v1442
    %1903 = vmatprep.subr.mxu0 0.0
    %1904 = vmatpush1.msra.mxu0 %v1441
    %1905 = vmatprep.subr.mxu0 0.0
    %1906 = vmatpush1.msra.mxu0 %v1440
    %1907 = vmatprep.subr.mxu0 0.0
    %1908 = vmatpush1.msra.mxu0 %v1439
    %1909 = vmatprep.subr.mxu0 0.0
    %1910 = vmatpush1.msra.mxu0 %v1438
    %1911 = vmatprep.subr.mxu0 0.0
    %1912 = vmatpush2.msra.mxu0 0.0
    %1913 = vmatprep.subr.mxu0 0.0
    %1914 = vmatpush2.msra.mxu0 0.0
    %1915 = vmatprep.subr.mxu0 0.0
    %1916 = vmatpush2.msra.mxu0 0.0
    %1917 = vmatprep.subr.mxu0 0.0
    %1918 = vmatpush2.msra.mxu0 0.0
    %1919 = vmatprep.subr.mxu0 0.0
    %1920 = vmatpush2.msra.mxu0 0.0
    %1921 = vmatprep.subr.mxu0 0.0
    %1922 = vmatpush2.msra.mxu0 0.0
    %1923 = vmatprep.subr.mxu0 0.0
    %1924 = vmatpush2.msra.mxu0 0.0
    %1925 = vmatprep.subr.mxu0 0.0
    %1926 = vmatpush2.msra.mxu0 0.0
    %1927 = vmatprep.subr.mxu0 0.0
    %1928 = vmatpush2.msra.mxu0 0.0
    %1929 = vmatprep.subr.mxu0 0.0
    %1930 = vmatpush2.msra.mxu0 0.0
    %1931 = vmatprep.subr.mxu0 0.0
    %1932 = vmatpush2.msra.mxu0 0.0
    %1933 = vmatprep.subr.mxu0 0.0
    %1934 = vmatpush2.msra.mxu0 0.0
    %1935 = vmatprep.subr.mxu0 0.0
    %1936 = vmatpush2.msra.mxu0 0.0
    %1937 = vmatprep.subr.mxu0 0.0
    %1938 = vmatpush2.msra.mxu0 0.0
    %1939 = vmatprep.subr.mxu0 0.0
    %1940 = vmatpush2.msra.mxu0 0.0
    %1941 = vmatprep.subr.mxu0 0.0
    %1942 = vmatpush2.msra.mxu0 0.0
    %1943 = vmatprep.mubr.f32.mxu0 0.0
    %1944 = vmatmul.mubr.f32.gmra.mxu0 %v1663
    %v1945 = vpop.f32.mrf.mxu0
    %v1946 = vadd.f32 0.0, %v1945
    %v1947 = vpop.f32.mrf.mxu0
    %1948 = vdwg.mxu0
    %v1949 = vadd.f32 %v1876, %v1946
    %v1950 = vadd.f32 %v1949, %v1271
    %v1951 = vmax.f32 %v1950, 0.0
    %v1952 = vmax.f32 %v1738, %v1951
    %v1953 = vld [vmem:[%s6] sm:$0x1]
    %v1954 = vld [vmem:[%s5] sm:$0xff]
    %v1955 = vld [vmem:[%s5 + $0x8] sm:$0xff]
    %v1956 = vld [vmem:[%s5 + $0x10] sm:$0xff]
    %v1957 = vld [vmem:[%s5 + $0x18] sm:$0xff]
    %v1958 = vld [vmem:[%s5 + $0x20] sm:$0xff]
    %v1959 = vld [vmem:[%s5 + $0x28] sm:$0xff]
    %v1960 = vld [vmem:[%s5 + $0x30] sm:$0xff]
    %v1961 = vld [vmem:[%s5 + $0x38] sm:$0xff]
    %vm1962 = vcmask 523264
    %v1964 = vsel %vm1962, %v1952, 0
    %1966 = vmatprep.subr.mxu0 0.0
    %1967 = vmatpush1.msra.mxu0 0.0
    %1968 = vmatprep.subr.mxu0 0.0
    %1969 = vmatpush1.msra.mxu0 0.0
    %1970 = vmatprep.subr.mxu0 0.0
    %1971 = vmatpush1.msra.mxu0 0.0
    %1972 = vmatprep.subr.mxu0 0.0
    %1973 = vmatpush1.msra.mxu0 0.0
    %1974 = vmatprep.subr.mxu0 0.0
    %1975 = vmatpush1.msra.mxu0 0.0
    %1976 = vmatprep.subr.mxu0 0.0
    %1977 = vmatpush1.msra.mxu0 0.0
    %1978 = vmatprep.subr.mxu0 0.0
    %1979 = vmatpush1.msra.mxu0 0.0
    %1980 = vmatprep.subr.mxu0 0.0
    %1981 = vmatpush1.msra.mxu0 0.0
    %1982 = vmatprep.subr.mxu0 0.0
    %1983 = vmatpush1.msra.mxu0 %v1961
    %1984 = vmatprep.subr.mxu0 0.0
    %1985 = vmatpush1.msra.mxu0 %v1960
    %1986 = vmatprep.subr.mxu0 0.0
    %1987 = vmatpush1.msra.mxu0 %v1959
    %1988 = vmatprep.subr.mxu0 0.0
    %1989 = vmatpush1.msra.mxu0 %v1958
    %1990 = vmatprep.subr.mxu0 0.0
    %1991 = vmatpush1.msra.mxu0 %v1957
    %1992 = vmatprep.subr.mxu0 0.0
    %1993 = vmatpush1.msra.mxu0 %v1956
    %1994 = vmatprep.subr.mxu0 0.0
    %1995 = vmatpush1.msra.mxu0 %v1955
    %1996 = vmatprep.subr.mxu0 0.0
    %1997 = vmatpush1.msra.mxu0 %v1954
    %1998 = vmatprep.subr.mxu0 0.0
    %1999 = vmatpush2.msra.mxu0 0.0
    %2000 = vmatprep.subr.mxu0 0.0
    %2001 = vmatpush2.msra.mxu0 0.0
    %2002 = vmatprep.subr.mxu0 0.0
    %2003 = vmatpush2.msra.mxu0 0.0
    %2004 = vmatprep.subr.mxu0 0.0
    %2005 = vmatpush2.msra.mxu0 0.0
    %2006 = vmatprep.subr.mxu0 0.0
    %2007 = vmatpush2.msra.mxu0 0.0
    %2008 = vmatprep.subr.mxu0 0.0
    %2009 = vmatpush2.msra.mxu0 0.0
    %2010 = vmatprep.subr.mxu0 0.0
    %2011 = vmatpush2.msra.mxu0 0.0
    %2012 = vmatprep.subr.mxu0 0.0
    %2013 = vmatpush2.msra.mxu0 0.0
    %2014 = vmatprep.subr.mxu0 0.0
    %2015 = vmatpush2.msra.mxu0 0.0
    %2016 = vmatprep.subr.mxu0 0.0
    %2017 = vmatpush2.msra.mxu0 0.0
    %2018 = vmatprep.subr.mxu0 0.0
    %2019 = vmatpush2.msra.mxu0 0.0
    %2020 = vmatprep.subr.mxu0 0.0
    %2021 = vmatpush2.msra.mxu0 0.0
    %2022 = vmatprep.subr.mxu0 0.0
    %2023 = vmatpush2.msra.mxu0 0.0
    %2024 = vmatprep.subr.mxu0 0.0
    %2025 = vmatpush2.msra.mxu0 0.0
    %2026 = vmatprep.subr.mxu0 0.0
    %2027 = vmatpush2.msra.mxu0 0.0
    %2028 = vmatprep.subr.mxu0 0.0
    %2029 = vmatpush2.msra.mxu0 0.0
    %2030 = vmatprep.mubr.f32.mxu0 0.0
    %2031 = vmatmul.mubr.f32.gmra.mxu0 %v1964
    %v2032 = vpop.f32.mrf.mxu0
    %v2033 = vadd.f32 0.0, %v2032
    %v2034 = vpop.f32.mrf.mxu0
    %2035 = vdwg.mxu0
    %v2036 = vadd.f32 %v1953, %v2033
    %v2037 = vld [vmem:[%s5 + $0x40] sm:$0xff]
    %v2038 = vld [vmem:[%s5 + $0x48] sm:$0xff]
    %v2039 = vld [vmem:[%s5 + $0x50] sm:$0xff]
    %v2040 = vld [vmem:[%s5 + $0x58] sm:$0xff]
    %v2041 = vld [vmem:[%s5 + $0x60] sm:$0xff]
    %v2042 = vld [vmem:[%s5 + $0x68] sm:$0xff]
    %v2043 = vld [vmem:[%s5 + $0x70] sm:$0xff]
    %v2044 = vld [vmem:[%s5 + $0x78] sm:$0xff]
    %v2045 = vrot.slane %v1952, 1
    %v2046 = vsel %vm1962, %v2045, 0
    %2048 = vmatprep.subr.mxu0 0.0
    %2049 = vmatpush1.msra.mxu0 0.0
    %2050 = vmatprep.subr.mxu0 0.0
    %2051 = vmatpush1.msra.mxu0 0.0
    %2052 = vmatprep.subr.mxu0 0.0
    %2053 = vmatpush1.msra.mxu0 0.0
    %2054 = vmatprep.subr.mxu0 0.0
    %2055 = vmatpush1.msra.mxu0 0.0
    %2056 = vmatprep.subr.mxu0 0.0
    %2057 = vmatpush1.msra.mxu0 0.0
    %2058 = vmatprep.subr.mxu0 0.0
    %2059 = vmatpush1.msra.mxu0 0.0
    %2060 = vmatprep.subr.mxu0 0.0
    %2061 = vmatpush1.msra.mxu0 0.0
    %2062 = vmatprep.subr.mxu0 0.0
    %2063 = vmatpush1.msra.mxu0 0.0
    %2064 = vmatprep.subr.mxu0 0.0
    %2065 = vmatpush1.msra.mxu0 %v2044
    %2066 = vmatprep.subr.mxu0 0.0
    %2067 = vmatpush1.msra.mxu0 %v2043
    %2068 = vmatprep.subr.mxu0 0.0
    %2069 = vmatpush1.msra.mxu0 %v2042
    %2070 = vmatprep.subr.mxu0 0.0
    %2071 = vmatpush1.msra.mxu0 %v2041
    %2072 = vmatprep.subr.mxu0 0.0
    %2073 = vmatpush1.msra.mxu0 %v2040
    %2074 = vmatprep.subr.mxu0 0.0
    %2075 = vmatpush1.msra.mxu0 %v2039
    %2076 = vmatprep.subr.mxu0 0.0
    %2077 = vmatpush1.msra.mxu0 %v2038
    %2078 = vmatprep.subr.mxu0 0.0
    %2079 = vmatpush1.msra.mxu0 %v2037
    %2080 = vmatprep.subr.mxu0 0.0
    %2081 = vmatpush2.msra.mxu0 0.0
    %2082 = vmatprep.subr.mxu0 0.0
    %2083 = vmatpush2.msra.mxu0 0.0
    %2084 = vmatprep.subr.mxu0 0.0
    %2085 = vmatpush2.msra.mxu0 0.0
    %2086 = vmatprep.subr.mxu0 0.0
    %2087 = vmatpush2.msra.mxu0 0.0
    %2088 = vmatprep.subr.mxu0 0.0
    %2089 = vmatpush2.msra.mxu0 0.0
    %2090 = vmatprep.subr.mxu0 0.0
    %2091 = vmatpush2.msra.mxu0 0.0
    %2092 = vmatprep.subr.mxu0 0.0
    %2093 = vmatpush2.msra.mxu0 0.0
    %2094 = vmatprep.subr.mxu0 0.0
    %2095 = vmatpush2.msra.mxu0 0.0
    %2096 = vmatprep.subr.mxu0 0.0
    %2097 = vmatpush2.msra.mxu0 0.0
    %2098 = vmatprep.subr.mxu0 0.0
    %2099 = vmatpush2.msra.mxu0 0.0
    %2100 = vmatprep.subr.mxu0 0.0
    %2101 = vmatpush2.msra.mxu0 0.0
    %2102 = vmatprep.subr.mxu0 0.0
    %2103 = vmatpush2.msra.mxu0 0.0
    %2104 = vmatprep.subr.mxu0 0.0
    %2105 = vmatpush2.msra.mxu0 0.0
    %2106 = vmatprep.subr.mxu0 0.0
    %2107 = vmatpush2.msra.mxu0 0.0
    %2108 = vmatprep.subr.mxu0 0.0
    %2109 = vmatpush2.msra.mxu0 0.0
    %2110 = vmatprep.subr.mxu0 0.0
    %2111 = vmatpush2.msra.mxu0 0.0
    %2112 = vmatprep.mubr.f32.mxu0 0.0
    %2113 = vmatmul.mubr.f32.gmra.mxu0 %v2046
    %v2114 = vpop.f32.mrf.mxu0
    %v2115 = vadd.f32 0.0, %v2114
    %v2116 = vpop.f32.mrf.mxu0
    %2117 = vdwg.mxu0
    %v2118 = vadd.f32 %v2036, %v2115
    %v2119 = vld [vmem:[%s5 + $0x80] sm:$0xff]
    %v2120 = vld [vmem:[%s5 + $0x88] sm:$0xff]
    %v2121 = vld [vmem:[%s5 + $0x90] sm:$0xff]
    %v2122 = vld [vmem:[%s5 + $0x98] sm:$0xff]
    %v2123 = vld [vmem:[%s5 + $0xa0] sm:$0xff]
    %v2124 = vld [vmem:[%s5 + $0xa8] sm:$0xff]
    %v2125 = vld [vmem:[%s5 + $0xb0] sm:$0xff]
    %v2126 = vld [vmem:[%s5 + $0xb8] sm:$0xff]
    %v2127 = vrot.slane %v1952, 2
    %v2128 = vsel %vm1962, %v2127, 0
    %2130 = vmatprep.subr.mxu0 0.0
    %2131 = vmatpush1.msra.mxu0 0.0
    %2132 = vmatprep.subr.mxu0 0.0
    %2133 = vmatpush1.msra.mxu0 0.0
    %2134 = vmatprep.subr.mxu0 0.0
    %2135 = vmatpush1.msra.mxu0 0.0
    %2136 = vmatprep.subr.mxu0 0.0
    %2137 = vmatpush1.msra.mxu0 0.0
    %2138 = vmatprep.subr.mxu0 0.0
    %2139 = vmatpush1.msra.mxu0 0.0
    %2140 = vmatprep.subr.mxu0 0.0
    %2141 = vmatpush1.msra.mxu0 0.0
    %2142 = vmatprep.subr.mxu0 0.0
    %2143 = vmatpush1.msra.mxu0 0.0
    %2144 = vmatprep.subr.mxu0 0.0
    %2145 = vmatpush1.msra.mxu0 0.0
    %2146 = vmatprep.subr.mxu0 0.0
    %2147 = vmatpush1.msra.mxu0 %v2126
    %2148 = vmatprep.subr.mxu0 0.0
    %2149 = vmatpush1.msra.mxu0 %v2125
    %2150 = vmatprep.subr.mxu0 0.0
    %2151 = vmatpush1.msra.mxu0 %v2124
    %2152 = vmatprep.subr.mxu0 0.0
    %2153 = vmatpush1.msra.mxu0 %v2123
    %2154 = vmatprep.subr.mxu0 0.0
    %2155 = vmatpush1.msra.mxu0 %v2122
    %2156 = vmatprep.subr.mxu0 0.0
    %2157 = vmatpush1.msra.mxu0 %v2121
    %2158 = vmatprep.subr.mxu0 0.0
    %2159 = vmatpush1.msra.mxu0 %v2120
    %2160 = vmatprep.subr.mxu0 0.0
    %2161 = vmatpush1.msra.mxu0 %v2119
    %2162 = vmatprep.subr.mxu0 0.0
    %2163 = vmatpush2.msra.mxu0 0.0
    %2164 = vmatprep.subr.mxu0 0.0
    %2165 = vmatpush2.msra.mxu0 0.0
    %2166 = vmatprep.subr.mxu0 0.0
    %2167 = vmatpush2.msra.mxu0 0.0
    %2168 = vmatprep.subr.mxu0 0.0
    %2169 = vmatpush2.msra.mxu0 0.0
    %2170 = vmatprep.subr.mxu0 0.0
    %2171 = vmatpush2.msra.mxu0 0.0
    %2172 = vmatprep.subr.mxu0 0.0
    %2173 = vmatpush2.msra.mxu0 0.0
    %2174 = vmatprep.subr.mxu0 0.0
    %2175 = vmatpush2.msra.mxu0 0.0
    %2176 = vmatprep.subr.mxu0 0.0
    %2177 = vmatpush2.msra.mxu0 0.0
    %2178 = vmatprep.subr.mxu0 0.0
    %2179 = vmatpush2.msra.mxu0 0.0
    %2180 = vmatprep.subr.mxu0 0.0
    %2181 = vmatpush2.msra.mxu0 0.0
    %2182 = vmatprep.subr.mxu0 0.0
    %2183 = vmatpush2.msra.mxu0 0.0
    %2184 = vmatprep.subr.mxu0 0.0
    %2185 = vmatpush2.msra.mxu0 0.0
    %2186 = vmatprep.subr.mxu0 0.0
    %2187 = vmatpush2.msra.mxu0 0.0
    %2188 = vmatprep.subr.mxu0 0.0
    %2189 = vmatpush2.msra.mxu0 0.0
    %2190 = vmatprep.subr.mxu0 0.0
    %2191 = vmatpush2.msra.mxu0 0.0
    %2192 = vmatprep.subr.mxu0 0.0
    %2193 = vmatpush2.msra.mxu0 0.0
    %2194 = vmatprep.mubr.f32.mxu0 0.0
    %2195 = vmatmul.mubr.f32.gmra.mxu0 %v2128
    %v2196 = vpop.f32.mrf.mxu0
    %v2197 = vadd.f32 0.0, %v2196
    %v2198 = vpop.f32.mrf.mxu0
    %2199 = vdwg.mxu0
    %v2200 = vadd.f32 %v2118, %v2197
    %v2201 = vld [vmem:[%s5 + $0xc0] sm:$0xff]
    %v2202 = vld [vmem:[%s5 + $0xc8] sm:$0xff]
    %v2203 = vld [vmem:[%s5 + $0xd0] sm:$0xff]
    %v2204 = vld [vmem:[%s5 + $0xd8] sm:$0xff]
    %v2205 = vld [vmem:[%s5 + $0xe0] sm:$0xff]
    %v2206 = vld [vmem:[%s5 + $0xe8] sm:$0xff]
    %v2207 = vld [vmem:[%s5 + $0xf0] sm:$0xff]
    %v2208 = vld [vmem:[%s5 + $0xf8] sm:$0xff]
    %v2209 = vrot.slane %v1952, 3
    %v2210 = vsel %vm1962, %v2209, 0
    %2212 = vmatprep.subr.mxu0 0.0
    %2213 = vmatpush1.msra.mxu0 0.0
    %2214 = vmatprep.subr.mxu0 0.0
    %2215 = vmatpush1.msra.mxu0 0.0
    %2216 = vmatprep.subr.mxu0 0.0
    %2217 = vmatpush1.msra.mxu0 0.0
    %2218 = vmatprep.subr.mxu0 0.0
    %2219 = vmatpush1.msra.mxu0 0.0
    %2220 = vmatprep.subr.mxu0 0.0
    %2221 = vmatpush1.msra.mxu0 0.0
    %2222 = vmatprep.subr.mxu0 0.0
    %2223 = vmatpush1.msra.mxu0 0.0
    %2224 = vmatprep.subr.mxu0 0.0
    %2225 = vmatpush1.msra.mxu0 0.0
    %2226 = vmatprep.subr.mxu0 0.0
    %2227 = vmatpush1.msra.mxu0 0.0
    %2228 = vmatprep.subr.mxu0 0.0
    %2229 = vmatpush1.msra.mxu0 %v2208
    %2230 = vmatprep.subr.mxu0 0.0
    %2231 = vmatpush1.msra.mxu0 %v2207
    %2232 = vmatprep.subr.mxu0 0.0
    %2233 = vmatpush1.msra.mxu0 %v2206
    %2234 = vmatprep.subr.mxu0 0.0
    %2235 = vmatpush1.msra.mxu0 %v2205
    %2236 = vmatprep.subr.mxu0 0.0
    %2237 = vmatpush1.msra.mxu0 %v2204
    %2238 = vmatprep.subr.mxu0 0.0
    %2239 = vmatpush1.msra.mxu0 %v2203
    %2240 = vmatprep.subr.mxu0 0.0
    %2241 = vmatpush1.msra.mxu0 %v2202
    %2242 = vmatprep.subr.mxu0 0.0
    %2243 = vmatpush1.msra.mxu0 %v2201
    %2244 = vmatprep.subr.mxu0 0.0
    %2245 = vmatpush2.msra.mxu0 0.0
    %2246 = vmatprep.subr.mxu0 0.0
    %2247 = vmatpush2.msra.mxu0 0.0
    %2248 = vmatprep.subr.mxu0 0.0
    %2249 = vmatpush2.msra.mxu0 0.0
    %2250 = vmatprep.subr.mxu0 0.0
    %2251 = vmatpush2.msra.mxu0 0.0
    %2252 = vmatprep.subr.mxu0 0.0
    %2253 = vmatpush2.msra.mxu0 0.0
    %2254 = vmatprep.subr.mxu0 0.0
    %2255 = vmatpush2.msra.mxu0 0.0
    %2256 = vmatprep.subr.mxu0 0.0
    %2257 = vmatpush2.msra.mxu0 0.0
    %2258 = vmatprep.subr.mxu0 0.0
    %2259 = vmatpush2.msra.mxu0 0.0
    %2260 = vmatprep.subr.mxu0 0.0
    %2261 = vmatpush2.msra.mxu0 0.0
    %2262 = vmatprep.subr.mxu0 0.0
    %2263 = vmatpush2.msra.mxu0 0.0
    %2264 = vmatprep.subr.mxu0 0.0
    %2265 = vmatpush2.msra.mxu0 0.0
    %2266 = vmatprep.subr.mxu0 0.0
    %2267 = vmatpush2.msra.mxu0 0.0
    %2268 = vmatprep.subr.mxu0 0.0
    %2269 = vmatpush2.msra.mxu0 0.0
    %2270 = vmatprep.subr.mxu0 0.0
    %2271 = vmatpush2.msra.mxu0 0.0
    %2272 = vmatprep.subr.mxu0 0.0
    %2273 = vmatpush2.msra.mxu0 0.0
    %2274 = vmatprep.subr.mxu0 0.0
    %2275 = vmatpush2.msra.mxu0 0.0
    %2276 = vmatprep.mubr.f32.mxu0 0.0
    %2277 = vmatmul.mubr.f32.gmra.mxu0 %v2210
    %v2278 = vpop.f32.mrf.mxu0
    %v2279 = vadd.f32 0.0, %v2278
    %v2280 = vpop.f32.mrf.mxu0
    %2281 = vdwg.mxu0
    %v2282 = vadd.f32 %v2200, %v2279
    %v2283 = vmax.f32 %v2282, 0.0
    %v2284 = vld [vmem:[%s7] sm:$0xff]
    %v2285 = vld [vmem:[%s7 + $0x8] sm:$0xff]
    %v2286 = vld [vmem:[%s7 + $0x10] sm:$0xff]
    %v2287 = vld [vmem:[%s7 + $0x18] sm:$0xff]
    %v2288 = vld [vmem:[%s7 + $0x20] sm:$0xff]
    %v2289 = vld [vmem:[%s7 + $0x28] sm:$0xff]
    %v2290 = vld [vmem:[%s7 + $0x30] sm:$0xff]
    %v2291 = vld [vmem:[%s7 + $0x38] sm:$0xff]
    %v2292 = vld [vmem:[%s8] sm:$0x1]
    %v2294 = vsel %vm1962, %v2283, 0
    %2296 = vmatprep.subr.mxu0 0.0
    %2297 = vmatpush1.msra.mxu0 0.0
    %2298 = vmatprep.subr.mxu0 0.0
    %2299 = vmatpush1.msra.mxu0 0.0
    %2300 = vmatprep.subr.mxu0 0.0
    %2301 = vmatpush1.msra.mxu0 0.0
    %2302 = vmatprep.subr.mxu0 0.0
    %2303 = vmatpush1.msra.mxu0 0.0
    %2304 = vmatprep.subr.mxu0 0.0
    %2305 = vmatpush1.msra.mxu0 0.0
    %2306 = vmatprep.subr.mxu0 0.0
    %2307 = vmatpush1.msra.mxu0 0.0
    %2308 = vmatprep.subr.mxu0 0.0
    %2309 = vmatpush1.msra.mxu0 0.0
    %2310 = vmatprep.subr.mxu0 0.0
    %2311 = vmatpush1.msra.mxu0 0.0
    %2312 = vmatprep.subr.mxu0 0.0
    %2313 = vmatpush1.msra.mxu0 %v2291
    %2314 = vmatprep.subr.mxu0 0.0
    %2315 = vmatpush1.msra.mxu0 %v2290
    %2316 = vmatprep.subr.mxu0 0.0
    %2317 = vmatpush1.msra.mxu0 %v2289
    %2318 = vmatprep.subr.mxu0 0.0
    %2319 = vmatpush1.msra.mxu0 %v2288
    %2320 = vmatprep.subr.mxu0 0.0
    %2321 = vmatpush1.msra.mxu0 %v2287
    %2322 = vmatprep.subr.mxu0 0.0
    %2323 = vmatpush1.msra.mxu0 %v2286
    %2324 = vmatprep.subr.mxu0 0.0
    %2325 = vmatpush1.msra.mxu0 %v2285
    %2326 = vmatprep.subr.mxu0 0.0
    %2327 = vmatpush1.msra.mxu0 %v2284
    %2328 = vmatprep.subr.mxu0 0.0
    %2329 = vmatpush2.msra.mxu0 0.0
    %2330 = vmatprep.subr.mxu0 0.0
    %2331 = vmatpush2.msra.mxu0 0.0
    %2332 = vmatprep.subr.mxu0 0.0
    %2333 = vmatpush2.msra.mxu0 0.0
    %2334 = vmatprep.subr.mxu0 0.0
    %2335 = vmatpush2.msra.mxu0 0.0
    %2336 = vmatprep.subr.mxu0 0.0
    %2337 = vmatpush2.msra.mxu0 0.0
    %2338 = vmatprep.subr.mxu0 0.0
    %2339 = vmatpush2.msra.mxu0 0.0
    %2340 = vmatprep.subr.mxu0 0.0
    %2341 = vmatpush2.msra.mxu0 0.0
    %2342 = vmatprep.subr.mxu0 0.0
    %2343 = vmatpush2.msra.mxu0 0.0
    %2344 = vmatprep.subr.mxu0 0.0
    %2345 = vmatpush2.msra.mxu0 0.0
    %2346 = vmatprep.subr.mxu0 0.0
    %2347 = vmatpush2.msra.mxu0 0.0
    %2348 = vmatprep.subr.mxu0 0.0
    %2349 = vmatpush2.msra.mxu0 0.0
    %2350 = vmatprep.subr.mxu0 0.0
    %2351 = vmatpush2.msra.mxu0 0.0
    %2352 = vmatprep.subr.mxu0 0.0
    %2353 = vmatpush2.msra.mxu0 0.0
    %2354 = vmatprep.subr.mxu0 0.0
    %2355 = vmatpush2.msra.mxu0 0.0
    %2356 = vmatprep.subr.mxu0 0.0
    %2357 = vmatpush2.msra.mxu0 0.0
    %2358 = vmatprep.subr.mxu0 0.0
    %2359 = vmatpush2.msra.mxu0 0.0
    %2360 = vmatprep.mubr.f32.mxu0 0.0
    %2361 = vmatmul.mubr.f32.gmra.mxu0 %v2294
    %v2362 = vpop.f32.mrf.mxu0
    %v2363 = vadd.f32 %v2292, %v2362
    %v2364 = vpop.f32.mrf.mxu0
    %2365 = vdwg.mxu0
    %v2366 = vmax.f32 %v2363, 0.0
    %v2367 = vld [vmem:[%s9] sm:$0xff]
    %v2368 = vld [vmem:[%s9 + $0x8] sm:$0xff]
    %v2369 = vld [vmem:[%s9 + $0x10] sm:$0xff]
    %v2370 = vld [vmem:[%s9 + $0x18] sm:$0xff]
    %v2371 = vld [vmem:[%s10] sm:$0x1]
    %vm2372 = vcmask 261120
    %v2374 = vsel %vm2372, %v2366, 0
    %2376 = vmatprep.subr.mxu0 0.0
    %2377 = vmatpush1.msra.mxu0 0.0
    %2378 = vmatprep.subr.mxu0 0.0
    %2379 = vmatpush1.msra.mxu0 0.0
    %2380 = vmatprep.subr.mxu0 0.0
    %2381 = vmatpush1.msra.mxu0 0.0
    %2382 = vmatprep.subr.mxu0 0.0
    %2383 = vmatpush1.msra.mxu0 0.0
    %2384 = vmatprep.subr.mxu0 0.0
    %2385 = vmatpush1.msra.mxu0 0.0
    %2386 = vmatprep.subr.mxu0 0.0
    %2387 = vmatpush1.msra.mxu0 0.0
    %2388 = vmatprep.subr.mxu0 0.0
    %2389 = vmatpush1.msra.mxu0 0.0
    %2390 = vmatprep.subr.mxu0 0.0
    %2391 = vmatpush1.msra.mxu0 0.0
    %2392 = vmatprep.subr.mxu0 0.0
    %2393 = vmatpush1.msra.mxu0 0.0
    %2394 = vmatprep.subr.mxu0 0.0
    %2395 = vmatpush1.msra.mxu0 0.0
    %2396 = vmatprep.subr.mxu0 0.0
    %2397 = vmatpush1.msra.mxu0 0.0
    %2398 = vmatprep.subr.mxu0 0.0
    %2399 = vmatpush1.msra.mxu0 0.0
    %2400 = vmatprep.subr.mxu0 0.0
    %2401 = vmatpush1.msra.mxu0 %v2370
    %2402 = vmatprep.subr.mxu0 0.0
    %2403 = vmatpush1.msra.mxu0 %v2369
    %2404 = vmatprep.subr.mxu0 0.0
    %2405 = vmatpush1.msra.mxu0 %v2368
    %2406 = vmatprep.subr.mxu0 0.0
    %2407 = vmatpush1.msra.mxu0 %v2367
    %2408 = vmatprep.subr.mxu0 0.0
    %2409 = vmatpush2.msra.mxu0 0.0
    %2410 = vmatprep.subr.mxu0 0.0
    %2411 = vmatpush2.msra.mxu0 0.0
    %2412 = vmatprep.subr.mxu0 0.0
    %2413 = vmatpush2.msra.mxu0 0.0
    %2414 = vmatprep.subr.mxu0 0.0
    %2415 = vmatpush2.msra.mxu0 0.0
    %2416 = vmatprep.subr.mxu0 0.0
    %2417 = vmatpush2.msra.mxu0 0.0
    %2418 = vmatprep.subr.mxu0 0.0
    %2419 = vmatpush2.msra.mxu0 0.0
    %2420 = vmatprep.subr.mxu0 0.0
    %2421 = vmatpush2.msra.mxu0 0.0
    %2422 = vmatprep.subr.mxu0 0.0
    %2423 = vmatpush2.msra.mxu0 0.0
    %2424 = vmatprep.subr.mxu0 0.0
    %2425 = vmatpush2.msra.mxu0 0.0
    %2426 = vmatprep.subr.mxu0 0.0
    %2427 = vmatpush2.msra.mxu0 0.0
    %2428 = vmatprep.subr.mxu0 0.0
    %2429 = vmatpush2.msra.mxu0 0.0
    %2430 = vmatprep.subr.mxu0 0.0
    %2431 = vmatpush2.msra.mxu0 0.0
    %2432 = vmatprep.subr.mxu0 0.0
    %2433 = vmatpush2.msra.mxu0 0.0
    %2434 = vmatprep.subr.mxu0 0.0
    %2435 = vmatpush2.msra.mxu0 0.0
    %2436 = vmatprep.subr.mxu0 0.0
    %2437 = vmatpush2.msra.mxu0 0.0
    %2438 = vmatprep.subr.mxu0 0.0
    %2439 = vmatpush2.msra.mxu0 0.0
    %2440 = vmatprep.mubr.f32.mxu0 0.0
    %2441 = vmatmul.mubr.f32.gmra.mxu0 %v2374
    %v2442 = vpop.f32.mrf.mxu0
    %v2443 = vadd.f32 %v2371, %v2442
    %v2444 = vpop.f32.mrf.mxu0
    %2445 = vdwg.mxu0
    %v2446 = vsub.f32 0.0, %v2443
    %v2447 = vmul.f32 %v2446, 1.442695
    %v2448 = vpow.pop %v2447
    %v2449 = vadd.f32 %v2448, 1.0
    %v2450 = vrcp.pop %v2449
    %v2451 = vmul.f32 1.0, %v2450
    %v2452 = vld [vmem:[%s11] sm:$0x1]
    %v2453 = vmul.f32 %v2451, %v2452
    %vm2454 = vcmask 204800
    %2455 = vst.msk [vmem:[%s12] sm:$0x1] %vm2454, %v2453
    %s2456 = scalar_lea.vmem %s0, 18
    %v2457 = vld [vmem:[%s2456] ss:$2 sm:$0xff]
    %s2458 = scalar_lea.vmem %s0, 19
    %v2459 = vld [vmem:[%s2458] ss:$2 sm:$0xff]
    %s2460 = scalar_lea.vmem %s0, 20
    %v2461 = vld [vmem:[%s2460] ss:$2 sm:$0xff]
    %s2462 = scalar_lea.vmem %s0, 21
    %v2463 = vld [vmem:[%s2462] ss:$2 sm:$0xff]
    %v2464 = vld [vmem:[%s2] sm:$0x1]
    %v2465 = vld [vmem:[#allocation3] sm:$0xff]
    %v2466 = vld [vmem:[#allocation3 + $0x8] sm:$0xff]
    %v2467 = vld [vmem:[#allocation3 + $0x10] sm:$0xff]
    %v2468 = vld [vmem:[#allocation3 + $0x18] sm:$0xff]
    %v2469 = vld [vmem:[#allocation3 + $0x20] sm:$0xff]
    %v2470 = vld [vmem:[#allocation3 + $0x28] sm:$0xff]
    %v2471 = vld [vmem:[#allocation3 + $0x30] sm:$0xff]
    %v2472 = vld [vmem:[#allocation3 + $0x38] sm:$0xff]
    %v2473 = vld [vmem:[#allocation3 + $0x40] sm:$0xff]
    %v2474 = vld [vmem:[%s77] sm:$0xff]
    %v2475 = vld [vmem:[%s77 + $0x8] sm:$0xff]
    %v2476 = vld [vmem:[%s77 + $0x10] sm:$0xff]
    %v2477 = vld [vmem:[%s77 + $0x18] sm:$0xff]
    %v2478 = vld [vmem:[%s77 + $0x20] sm:$0xff]
    %v2479 = vld [vmem:[%s77 + $0x28] sm:$0xff]
    %v2480 = vld [vmem:[%s77 + $0x30] sm:$0xff]
    %v2481 = vld [vmem:[%s77 + $0x38] sm:$0xff]
    %v2482 = vld [vmem:[%s77 + $0x40] sm:$0xff]
    %v2484 = vsel %vm87, %v2459, 0
    %2486 = vmatprep.subr.mxu0 0.0
    %2487 = vmatpush1.msra.mxu0 0.0
    %2488 = vmatprep.subr.mxu0 0.0
    %2489 = vmatpush1.msra.mxu0 0.0
    %2490 = vmatprep.subr.mxu0 0.0
    %2491 = vmatpush1.msra.mxu0 0.0
    %2492 = vmatprep.subr.mxu0 0.0
    %2493 = vmatpush1.msra.mxu0 0.0
    %2494 = vmatprep.subr.mxu0 0.0
    %2495 = vmatpush1.msra.mxu0 0.0
    %2496 = vmatprep.subr.mxu0 0.0
    %2497 = vmatpush1.msra.mxu0 0.0
    %2498 = vmatprep.subr.mxu0 0.0
    %2499 = vmatpush1.msra.mxu0 0.0
    %2500 = vmatprep.subr.mxu0 0.0
    %2501 = vmatpush1.msra.mxu0 %v2482
    %2502 = vmatprep.subr.mxu0 0.0
    %2503 = vmatpush1.msra.mxu0 %v2481
    %2504 = vmatprep.subr.mxu0 0.0
    %2505 = vmatpush1.msra.mxu0 %v2480
    %2506 = vmatprep.subr.mxu0 0.0
    %2507 = vmatpush1.msra.mxu0 %v2479
    %2508 = vmatprep.subr.mxu0 0.0
    %2509 = vmatpush1.msra.mxu0 %v2478
    %2510 = vmatprep.subr.mxu0 0.0
    %2511 = vmatpush1.msra.mxu0 %v2477
    %2512 = vmatprep.subr.mxu0 0.0
    %2513 = vmatpush1.msra.mxu0 %v2476
    %2514 = vmatprep.subr.mxu0 0.0
    %2515 = vmatpush1.msra.mxu0 %v2475
    %2516 = vmatprep.subr.mxu0 0.0
    %2517 = vmatpush1.msra.mxu0 %v2474
    %2518 = vmatprep.subr.mxu0 0.0
    %2519 = vmatpush2.msra.mxu0 0.0
    %2520 = vmatprep.subr.mxu0 0.0
    %2521 = vmatpush2.msra.mxu0 0.0
    %2522 = vmatprep.subr.mxu0 0.0
    %2523 = vmatpush2.msra.mxu0 0.0
    %2524 = vmatprep.subr.mxu0 0.0
    %2525 = vmatpush2.msra.mxu0 0.0
    %2526 = vmatprep.subr.mxu0 0.0
    %2527 = vmatpush2.msra.mxu0 0.0
    %2528 = vmatprep.subr.mxu0 0.0
    %2529 = vmatpush2.msra.mxu0 0.0
    %2530 = vmatprep.subr.mxu0 0.0
    %2531 = vmatpush2.msra.mxu0 0.0
    %2532 = vmatprep.subr.mxu0 0.0
    %2533 = vmatpush2.msra.mxu0 0.0
    %2534 = vmatprep.subr.mxu0 0.0
    %2535 = vmatpush2.msra.mxu0 0.0
    %2536 = vmatprep.subr.mxu0 0.0
    %2537 = vmatpush2.msra.mxu0 0.0
    %2538 = vmatprep.subr.mxu0 0.0
    %2539 = vmatpush2.msra.mxu0 0.0
    %2540 = vmatprep.subr.mxu0 0.0
    %2541 = vmatpush2.msra.mxu0 0.0
    %2542 = vmatprep.subr.mxu0 0.0
    %2543 = vmatpush2.msra.mxu0 0.0
    %2544 = vmatprep.subr.mxu0 0.0
    %2545 = vmatpush2.msra.mxu0 0.0
    %2546 = vmatprep.subr.mxu0 0.0
    %2547 = vmatpush2.msra.mxu0 0.0
    %2548 = vmatprep.subr.mxu0 0.0
    %2549 = vmatpush2.msra.mxu0 0.0
    %2550 = vmatprep.mubr.f32.mxu0 0.0
    %2551 = vmatmul.mubr.f32.gmra.mxu0 %v2484
    %v2552 = vpop.f32.mrf.mxu0
    %v2553 = vadd.f32 0.0, %v2552
    %v2554 = vpop.f32.mrf.mxu0
    %2555 = vdwg.mxu0
    %v2557 = vsel %vm87, %v2457, 0
    %2559 = vmatprep.subr.mxu0 0.0
    %2560 = vmatpush1.msra.mxu0 0.0
    %2561 = vmatprep.subr.mxu0 0.0
    %2562 = vmatpush1.msra.mxu0 0.0
    %2563 = vmatprep.subr.mxu0 0.0
    %2564 = vmatpush1.msra.mxu0 0.0
    %2565 = vmatprep.subr.mxu0 0.0
    %2566 = vmatpush1.msra.mxu0 0.0
    %2567 = vmatprep.subr.mxu0 0.0
    %2568 = vmatpush1.msra.mxu0 0.0
    %2569 = vmatprep.subr.mxu0 0.0
    %2570 = vmatpush1.msra.mxu0 0.0
    %2571 = vmatprep.subr.mxu0 0.0
    %2572 = vmatpush1.msra.mxu0 0.0
    %2573 = vmatprep.subr.mxu0 0.0
    %2574 = vmatpush1.msra.mxu0 %v2473
    %2575 = vmatprep.subr.mxu0 0.0
    %2576 = vmatpush1.msra.mxu0 %v2472
    %2577 = vmatprep.subr.mxu0 0.0
    %2578 = vmatpush1.msra.mxu0 %v2471
    %2579 = vmatprep.subr.mxu0 0.0
    %2580 = vmatpush1.msra.mxu0 %v2470
    %2581 = vmatprep.subr.mxu0 0.0
    %2582 = vmatpush1.msra.mxu0 %v2469
    %2583 = vmatprep.subr.mxu0 0.0
    %2584 = vmatpush1.msra.mxu0 %v2468
    %2585 = vmatprep.subr.mxu0 0.0
    %2586 = vmatpush1.msra.mxu0 %v2467
    %2587 = vmatprep.subr.mxu0 0.0
    %2588 = vmatpush1.msra.mxu0 %v2466
    %2589 = vmatprep.subr.mxu0 0.0
    %2590 = vmatpush1.msra.mxu0 %v2465
    %2591 = vmatprep.subr.mxu0 0.0
    %2592 = vmatpush2.msra.mxu0 0.0
    %2593 = vmatprep.subr.mxu0 0.0
    %2594 = vmatpush2.msra.mxu0 0.0
    %2595 = vmatprep.subr.mxu0 0.0
    %2596 = vmatpush2.msra.mxu0 0.0
    %2597 = vmatprep.subr.mxu0 0.0
    %2598 = vmatpush2.msra.mxu0 0.0
    %2599 = vmatprep.subr.mxu0 0.0
    %2600 = vmatpush2.msra.mxu0 0.0
    %2601 = vmatprep.subr.mxu0 0.0
    %2602 = vmatpush2.msra.mxu0 0.0
    %2603 = vmatprep.subr.mxu0 0.0
    %2604 = vmatpush2.msra.mxu0 0.0
    %2605 = vmatprep.subr.mxu0 0.0
    %2606 = vmatpush2.msra.mxu0 0.0
    %2607 = vmatprep.subr.mxu0 0.0
    %2608 = vmatpush2.msra.mxu0 0.0
    %2609 = vmatprep.subr.mxu0 0.0
    %2610 = vmatpush2.msra.mxu0 0.0
    %2611 = vmatprep.subr.mxu0 0.0
    %2612 = vmatpush2.msra.mxu0 0.0
    %2613 = vmatprep.subr.mxu0 0.0
    %2614 = vmatpush2.msra.mxu0 0.0
    %2615 = vmatprep.subr.mxu0 0.0
    %2616 = vmatpush2.msra.mxu0 0.0
    %2617 = vmatprep.subr.mxu0 0.0
    %2618 = vmatpush2.msra.mxu0 0.0
    %2619 = vmatprep.subr.mxu0 0.0
    %2620 = vmatpush2.msra.mxu0 0.0
    %2621 = vmatprep.subr.mxu0 0.0
    %2622 = vmatpush2.msra.mxu0 0.0
    %2623 = vmatprep.mubr.f32.mxu0 0.0
    %2624 = vmatmul.mubr.f32.gmra.mxu0 %v2557
    %v2625 = vpop.f32.mrf.mxu0
    %v2626 = vadd.f32 %v2553, %v2625
    %v2627 = vpop.f32.mrf.mxu0
    %2628 = vdwg.mxu0
    %v2629 = vld [vmem:[%s234] sm:$0xff]
    %v2630 = vld [vmem:[%s234 + $0x8] sm:$0xff]
    %v2631 = vld [vmem:[%s234 + $0x10] sm:$0xff]
    %v2632 = vld [vmem:[%s234 + $0x18] sm:$0xff]
    %v2633 = vld [vmem:[%s234 + $0x20] sm:$0xff]
    %v2634 = vld [vmem:[%s234 + $0x28] sm:$0xff]
    %v2635 = vld [vmem:[%s234 + $0x30] sm:$0xff]
    %v2636 = vld [vmem:[%s234 + $0x38] sm:$0xff]
    %v2637 = vld [vmem:[%s234 + $0x40] sm:$0xff]
    %v2639 = vsel %vm87, %v2461, 0
    %2641 = vmatprep.subr.mxu0 0.0
    %2642 = vmatpush1.msra.mxu0 0.0
    %2643 = vmatprep.subr.mxu0 0.0
    %2644 = vmatpush1.msra.mxu0 0.0
    %2645 = vmatprep.subr.mxu0 0.0
    %2646 = vmatpush1.msra.mxu0 0.0
    %2647 = vmatprep.subr.mxu0 0.0
    %2648 = vmatpush1.msra.mxu0 0.0
    %2649 = vmatprep.subr.mxu0 0.0
    %2650 = vmatpush1.msra.mxu0 0.0
    %2651 = vmatprep.subr.mxu0 0.0
    %2652 = vmatpush1.msra.mxu0 0.0
    %2653 = vmatprep.subr.mxu0 0.0
    %2654 = vmatpush1.msra.mxu0 0.0
    %2655 = vmatprep.subr.mxu0 0.0
    %2656 = vmatpush1.msra.mxu0 %v2637
    %2657 = vmatprep.subr.mxu0 0.0
    %2658 = vmatpush1.msra.mxu0 %v2636
    %2659 = vmatprep.subr.mxu0 0.0
    %2660 = vmatpush1.msra.mxu0 %v2635
    %2661 = vmatprep.subr.mxu0 0.0
    %2662 = vmatpush1.msra.mxu0 %v2634
    %2663 = vmatprep.subr.mxu0 0.0
    %2664 = vmatpush1.msra.mxu0 %v2633
    %2665 = vmatprep.subr.mxu0 0.0
    %2666 = vmatpush1.msra.mxu0 %v2632
    %2667 = vmatprep.subr.mxu0 0.0
    %2668 = vmatpush1.msra.mxu0 %v2631
    %2669 = vmatprep.subr.mxu0 0.0
    %2670 = vmatpush1.msra.mxu0 %v2630
    %2671 = vmatprep.subr.mxu0 0.0
    %2672 = vmatpush1.msra.mxu0 %v2629
    %2673 = vmatprep.subr.mxu0 0.0
    %2674 = vmatpush2.msra.mxu0 0.0
    %2675 = vmatprep.subr.mxu0 0.0
    %2676 = vmatpush2.msra.mxu0 0.0
    %2677 = vmatprep.subr.mxu0 0.0
    %2678 = vmatpush2.msra.mxu0 0.0
    %2679 = vmatprep.subr.mxu0 0.0
    %2680 = vmatpush2.msra.mxu0 0.0
    %2681 = vmatprep.subr.mxu0 0.0
    %2682 = vmatpush2.msra.mxu0 0.0
    %2683 = vmatprep.subr.mxu0 0.0
    %2684 = vmatpush2.msra.mxu0 0.0
    %2685 = vmatprep.subr.mxu0 0.0
    %2686 = vmatpush2.msra.mxu0 0.0
    %2687 = vmatprep.subr.mxu0 0.0
    %2688 = vmatpush2.msra.mxu0 0.0
    %2689 = vmatprep.subr.mxu0 0.0
    %2690 = vmatpush2.msra.mxu0 0.0
    %2691 = vmatprep.subr.mxu0 0.0
    %2692 = vmatpush2.msra.mxu0 0.0
    %2693 = vmatprep.subr.mxu0 0.0
    %2694 = vmatpush2.msra.mxu0 0.0
    %2695 = vmatprep.subr.mxu0 0.0
    %2696 = vmatpush2.msra.mxu0 0.0
    %2697 = vmatprep.subr.mxu0 0.0
    %2698 = vmatpush2.msra.mxu0 0.0
    %2699 = vmatprep.subr.mxu0 0.0
    %2700 = vmatpush2.msra.mxu0 0.0
    %2701 = vmatprep.subr.mxu0 0.0
    %2702 = vmatpush2.msra.mxu0 0.0
    %2703 = vmatprep.subr.mxu0 0.0
    %2704 = vmatpush2.msra.mxu0 0.0
    %2705 = vmatprep.mubr.f32.mxu0 0.0
    %2706 = vmatmul.mubr.f32.gmra.mxu0 %v2639
    %v2707 = vpop.f32.mrf.mxu0
    %v2708 = vadd.f32 0.0, %v2707
    %v2709 = vpop.f32.mrf.mxu0
    %2710 = vdwg.mxu0
    %v2711 = vadd.f32 %v2626, %v2708
    %v2713 = vlaneseq
    %v2714 = vshrl.u32 %v2713, 7
    %v2715 = vsub.s32 0, %v2714
    %v2716 = vrot.slane %v2464, %v2715
    %v2718 = vadd.f32 %v2711, %v2716
    %v2719 = vmax.f32 %v2718, 0.0
    %v2720 = vld [vmem:[%s326] sm:$0xff]
    %v2721 = vld [vmem:[%s326 + $0x8] sm:$0xff]
    %v2722 = vld [vmem:[%s326 + $0x10] sm:$0xff]
    %v2723 = vld [vmem:[%s326 + $0x18] sm:$0xff]
    %v2724 = vld [vmem:[%s326 + $0x20] sm:$0xff]
    %v2725 = vld [vmem:[%s326 + $0x28] sm:$0xff]
    %v2726 = vld [vmem:[%s326 + $0x30] sm:$0xff]
    %v2727 = vld [vmem:[%s326 + $0x38] sm:$0xff]
    %v2728 = vld [vmem:[%s326 + $0x40] sm:$0xff]
    %v2729 = vld [vmem:[%s336] sm:$0xff]
    %v2730 = vld [vmem:[%s336 + $0x8] sm:$0xff]
    %v2731 = vld [vmem:[%s336 + $0x10] sm:$0xff]
    %v2732 = vld [vmem:[%s336 + $0x18] sm:$0xff]
    %v2733 = vld [vmem:[%s336 + $0x20] sm:$0xff]
    %v2734 = vld [vmem:[%s336 + $0x28] sm:$0xff]
    %v2735 = vld [vmem:[%s336 + $0x30] sm:$0xff]
    %v2736 = vld [vmem:[%s336 + $0x38] sm:$0xff]
    %v2737 = vld [vmem:[%s336 + $0x40] sm:$0xff]
    %2738 = vmatprep.subr.mxu0 0.0
    %2739 = vmatpush1.msra.mxu0 0.0
    %2740 = vmatprep.subr.mxu0 0.0
    %2741 = vmatpush1.msra.mxu0 0.0
    %2742 = vmatprep.subr.mxu0 0.0
    %2743 = vmatpush1.msra.mxu0 0.0
    %2744 = vmatprep.subr.mxu0 0.0
    %2745 = vmatpush1.msra.mxu0 0.0
    %2746 = vmatprep.subr.mxu0 0.0
    %2747 = vmatpush1.msra.mxu0 0.0
    %2748 = vmatprep.subr.mxu0 0.0
    %2749 = vmatpush1.msra.mxu0 0.0
    %2750 = vmatprep.subr.mxu0 0.0
    %2751 = vmatpush1.msra.mxu0 0.0
    %2752 = vmatprep.subr.mxu0 0.0
    %2753 = vmatpush1.msra.mxu0 %v2737
    %2754 = vmatprep.subr.mxu0 0.0
    %2755 = vmatpush1.msra.mxu0 %v2736
    %2756 = vmatprep.subr.mxu0 0.0
    %2757 = vmatpush1.msra.mxu0 %v2735
    %2758 = vmatprep.subr.mxu0 0.0
    %2759 = vmatpush1.msra.mxu0 %v2734
    %2760 = vmatprep.subr.mxu0 0.0
    %2761 = vmatpush1.msra.mxu0 %v2733
    %2762 = vmatprep.subr.mxu0 0.0
    %2763 = vmatpush1.msra.mxu0 %v2732
    %2764 = vmatprep.subr.mxu0 0.0
    %2765 = vmatpush1.msra.mxu0 %v2731
    %2766 = vmatprep.subr.mxu0 0.0
    %2767 = vmatpush1.msra.mxu0 %v2730
    %2768 = vmatprep.subr.mxu0 0.0
    %2769 = vmatpush1.msra.mxu0 %v2729
    %2770 = vmatprep.subr.mxu0 0.0
    %2771 = vmatpush2.msra.mxu0 0.0
    %2772 = vmatprep.subr.mxu0 0.0
    %2773 = vmatpush2.msra.mxu0 0.0
    %2774 = vmatprep.subr.mxu0 0.0
    %2775 = vmatpush2.msra.mxu0 0.0
    %2776 = vmatprep.subr.mxu0 0.0
    %2777 = vmatpush2.msra.mxu0 0.0
    %2778 = vmatprep.subr.mxu0 0.0
    %2779 = vmatpush2.msra.mxu0 0.0
    %2780 = vmatprep.subr.mxu0 0.0
    %2781 = vmatpush2.msra.mxu0 0.0
    %2782 = vmatprep.subr.mxu0 0.0
    %2783 = vmatpush2.msra.mxu0 0.0
    %2784 = vmatprep.subr.mxu0 0.0
    %2785 = vmatpush2.msra.mxu0 0.0
    %2786 = vmatprep.subr.mxu0 0.0
    %2787 = vmatpush2.msra.mxu0 0.0
    %2788 = vmatprep.subr.mxu0 0.0
    %2789 = vmatpush2.msra.mxu0 0.0
    %2790 = vmatprep.subr.mxu0 0.0
    %2791 = vmatpush2.msra.mxu0 0.0
    %2792 = vmatprep.subr.mxu0 0.0
    %2793 = vmatpush2.msra.mxu0 0.0
    %2794 = vmatprep.subr.mxu0 0.0
    %2795 = vmatpush2.msra.mxu0 0.0
    %2796 = vmatprep.subr.mxu0 0.0
    %2797 = vmatpush2.msra.mxu0 0.0
    %2798 = vmatprep.subr.mxu0 0.0
    %2799 = vmatpush2.msra.mxu0 0.0
    %2800 = vmatprep.subr.mxu0 0.0
    %2801 = vmatpush2.msra.mxu0 0.0
    %2802 = vmatprep.mubr.f32.mxu0 0.0
    %2803 = vmatmul.mubr.f32.gmra.mxu0 %v2484
    %v2804 = vpop.f32.mrf.mxu0
    %v2805 = vadd.f32 0.0, %v2804
    %v2806 = vpop.f32.mrf.mxu0
    %2807 = vdwg.mxu0
    %2808 = vmatprep.subr.mxu0 0.0
    %2809 = vmatpush1.msra.mxu0 0.0
    %2810 = vmatprep.subr.mxu0 0.0
    %2811 = vmatpush1.msra.mxu0 0.0
    %2812 = vmatprep.subr.mxu0 0.0
    %2813 = vmatpush1.msra.mxu0 0.0
    %2814 = vmatprep.subr.mxu0 0.0
    %2815 = vmatpush1.msra.mxu0 0.0
    %2816 = vmatprep.subr.mxu0 0.0
    %2817 = vmatpush1.msra.mxu0 0.0
    %2818 = vmatprep.subr.mxu0 0.0
    %2819 = vmatpush1.msra.mxu0 0.0
    %2820 = vmatprep.subr.mxu0 0.0
    %2821 = vmatpush1.msra.mxu0 0.0
    %2822 = vmatprep.subr.mxu0 0.0
    %2823 = vmatpush1.msra.mxu0 %v2728
    %2824 = vmatprep.subr.mxu0 0.0
    %2825 = vmatpush1.msra.mxu0 %v2727
    %2826 = vmatprep.subr.mxu0 0.0
    %2827 = vmatpush1.msra.mxu0 %v2726
    %2828 = vmatprep.subr.mxu0 0.0
    %2829 = vmatpush1.msra.mxu0 %v2725
    %2830 = vmatprep.subr.mxu0 0.0
    %2831 = vmatpush1.msra.mxu0 %v2724
    %2832 = vmatprep.subr.mxu0 0.0
    %2833 = vmatpush1.msra.mxu0 %v2723
    %2834 = vmatprep.subr.mxu0 0.0
    %2835 = vmatpush1.msra.mxu0 %v2722
    %2836 = vmatprep.subr.mxu0 0.0
    %2837 = vmatpush1.msra.mxu0 %v2721
    %2838 = vmatprep.subr.mxu0 0.0
    %2839 = vmatpush1.msra.mxu0 %v2720
    %2840 = vmatprep.subr.mxu0 0.0
    %2841 = vmatpush2.msra.mxu0 0.0
    %2842 = vmatprep.subr.mxu0 0.0
    %2843 = vmatpush2.msra.mxu0 0.0
    %2844 = vmatprep.subr.mxu0 0.0
    %2845 = vmatpush2.msra.mxu0 0.0
    %2846 = vmatprep.subr.mxu0 0.0
    %2847 = vmatpush2.msra.mxu0 0.0
    %2848 = vmatprep.subr.mxu0 0.0
    %2849 = vmatpush2.msra.mxu0 0.0
    %2850 = vmatprep.subr.mxu0 0.0
    %2851 = vmatpush2.msra.mxu0 0.0
    %2852 = vmatprep.subr.mxu0 0.0
    %2853 = vmatpush2.msra.mxu0 0.0
    %2854 = vmatprep.subr.mxu0 0.0
    %2855 = vmatpush2.msra.mxu0 0.0
    %2856 = vmatprep.subr.mxu0 0.0
    %2857 = vmatpush2.msra.mxu0 0.0
    %2858 = vmatprep.subr.mxu0 0.0
    %2859 = vmatpush2.msra.mxu0 0.0
    %2860 = vmatprep.subr.mxu0 0.0
    %2861 = vmatpush2.msra.mxu0 0.0
    %2862 = vmatprep.subr.mxu0 0.0
    %2863 = vmatpush2.msra.mxu0 0.0
    %2864 = vmatprep.subr.mxu0 0.0
    %2865 = vmatpush2.msra.mxu0 0.0
    %2866 = vmatprep.subr.mxu0 0.0
    %2867 = vmatpush2.msra.mxu0 0.0
    %2868 = vmatprep.subr.mxu0 0.0
    %2869 = vmatpush2.msra.mxu0 0.0
    %2870 = vmatprep.subr.mxu0 0.0
    %2871 = vmatpush2.msra.mxu0 0.0
    %2872 = vmatprep.mubr.f32.mxu0 0.0
    %2873 = vmatmul.mubr.f32.gmra.mxu0 %v2557
    %v2874 = vpop.f32.mrf.mxu0
    %v2875 = vadd.f32 %v2805, %v2874
    %v2876 = vpop.f32.mrf.mxu0
    %2877 = vdwg.mxu0
    %v2878 = vld [vmem:[%s486] sm:$0xff]
    %v2879 = vld [vmem:[%s486 + $0x8] sm:$0xff]
    %v2880 = vld [vmem:[%s486 + $0x10] sm:$0xff]
    %v2881 = vld [vmem:[%s486 + $0x18] sm:$0xff]
    %v2882 = vld [vmem:[%s486 + $0x20] sm:$0xff]
    %v2883 = vld [vmem:[%s486 + $0x28] sm:$0xff]
    %v2884 = vld [vmem:[%s486 + $0x30] sm:$0xff]
    %v2885 = vld [vmem:[%s486 + $0x38] sm:$0xff]
    %v2886 = vld [vmem:[%s486 + $0x40] sm:$0xff]
    %2887 = vmatprep.subr.mxu0 0.0
    %2888 = vmatpush1.msra.mxu0 0.0
    %2889 = vmatprep.subr.mxu0 0.0
    %2890 = vmatpush1.msra.mxu0 0.0
    %2891 = vmatprep.subr.mxu0 0.0
    %2892 = vmatpush1.msra.mxu0 0.0
    %2893 = vmatprep.subr.mxu0 0.0
    %2894 = vmatpush1.msra.mxu0 0.0
    %2895 = vmatprep.subr.mxu0 0.0
    %2896 = vmatpush1.msra.mxu0 0.0
    %2897 = vmatprep.subr.mxu0 0.0
    %2898 = vmatpush1.msra.mxu0 0.0
    %2899 = vmatprep.subr.mxu0 0.0
    %2900 = vmatpush1.msra.mxu0 0.0
    %2901 = vmatprep.subr.mxu0 0.0
    %2902 = vmatpush1.msra.mxu0 %v2886
    %2903 = vmatprep.subr.mxu0 0.0
    %2904 = vmatpush1.msra.mxu0 %v2885
    %2905 = vmatprep.subr.mxu0 0.0
    %2906 = vmatpush1.msra.mxu0 %v2884
    %2907 = vmatprep.subr.mxu0 0.0
    %2908 = vmatpush1.msra.mxu0 %v2883
    %2909 = vmatprep.subr.mxu0 0.0
    %2910 = vmatpush1.msra.mxu0 %v2882
    %2911 = vmatprep.subr.mxu0 0.0
    %2912 = vmatpush1.msra.mxu0 %v2881
    %2913 = vmatprep.subr.mxu0 0.0
    %2914 = vmatpush1.msra.mxu0 %v2880
    %2915 = vmatprep.subr.mxu0 0.0
    %2916 = vmatpush1.msra.mxu0 %v2879
    %2917 = vmatprep.subr.mxu0 0.0
    %2918 = vmatpush1.msra.mxu0 %v2878
    %2919 = vmatprep.subr.mxu0 0.0
    %2920 = vmatpush2.msra.mxu0 0.0
    %2921 = vmatprep.subr.mxu0 0.0
    %2922 = vmatpush2.msra.mxu0 0.0
    %2923 = vmatprep.subr.mxu0 0.0
    %2924 = vmatpush2.msra.mxu0 0.0
    %2925 = vmatprep.subr.mxu0 0.0
    %2926 = vmatpush2.msra.mxu0 0.0
    %2927 = vmatprep.subr.mxu0 0.0
    %2928 = vmatpush2.msra.mxu0 0.0
    %2929 = vmatprep.subr.mxu0 0.0
    %2930 = vmatpush2.msra.mxu0 0.0
    %2931 = vmatprep.subr.mxu0 0.0
    %2932 = vmatpush2.msra.mxu0 0.0
    %2933 = vmatprep.subr.mxu0 0.0
    %2934 = vmatpush2.msra.mxu0 0.0
    %2935 = vmatprep.subr.mxu0 0.0
    %2936 = vmatpush2.msra.mxu0 0.0
    %2937 = vmatprep.subr.mxu0 0.0
    %2938 = vmatpush2.msra.mxu0 0.0
    %2939 = vmatprep.subr.mxu0 0.0
    %2940 = vmatpush2.msra.mxu0 0.0
    %2941 = vmatprep.subr.mxu0 0.0
    %2942 = vmatpush2.msra.mxu0 0.0
    %2943 = vmatprep.subr.mxu0 0.0
    %2944 = vmatpush2.msra.mxu0 0.0
    %2945 = vmatprep.subr.mxu0 0.0
    %2946 = vmatpush2.msra.mxu0 0.0
    %2947 = vmatprep.subr.mxu0 0.0
    %2948 = vmatpush2.msra.mxu0 0.0
    %2949 = vmatprep.subr.mxu0 0.0
    %2950 = vmatpush2.msra.mxu0 0.0
    %2951 = vmatprep.mubr.f32.mxu0 0.0
    %2952 = vmatmul.mubr.f32.gmra.mxu0 %v2639
    %v2953 = vpop.f32.mrf.mxu0
    %v2954 = vadd.f32 0.0, %v2953
    %v2955 = vpop.f32.mrf.mxu0
    %2956 = vdwg.mxu0
    %v2957 = vadd.f32 %v2875, %v2954
    %v2958 = vadd.f32 %v2957, %v2716
    %v2959 = vmax.f32 %v2958, 0.0
    %v2960 = vmax.f32 %v2719, %v2959
    %2961 = vmatprep.subr.mxu0 0.0
    %2962 = vmatpush1.msra.mxu0 0.0
    %2963 = vmatprep.subr.mxu0 0.0
    %2964 = vmatpush1.msra.mxu0 0.0
    %2965 = vmatprep.subr.mxu0 0.0
    %2966 = vmatpush1.msra.mxu0 0.0
    %2967 = vmatprep.subr.mxu0 0.0
    %2968 = vmatpush1.msra.mxu0 0.0
    %2969 = vmatprep.subr.mxu0 0.0
    %2970 = vmatpush1.msra.mxu0 0.0
    %2971 = vmatprep.subr.mxu0 0.0
    %2972 = vmatpush1.msra.mxu0 0.0
    %2973 = vmatprep.subr.mxu0 0.0
    %2974 = vmatpush1.msra.mxu0 0.0
    %2975 = vmatprep.subr.mxu0 0.0
    %2976 = vmatpush1.msra.mxu0 %v2482
    %2977 = vmatprep.subr.mxu0 0.0
    %2978 = vmatpush1.msra.mxu0 %v2481
    %2979 = vmatprep.subr.mxu0 0.0
    %2980 = vmatpush1.msra.mxu0 %v2480
    %2981 = vmatprep.subr.mxu0 0.0
    %2982 = vmatpush1.msra.mxu0 %v2479
    %2983 = vmatprep.subr.mxu0 0.0
    %2984 = vmatpush1.msra.mxu0 %v2478
    %2985 = vmatprep.subr.mxu0 0.0
    %2986 = vmatpush1.msra.mxu0 %v2477
    %2987 = vmatprep.subr.mxu0 0.0
    %2988 = vmatpush1.msra.mxu0 %v2476
    %2989 = vmatprep.subr.mxu0 0.0
    %2990 = vmatpush1.msra.mxu0 %v2475
    %2991 = vmatprep.subr.mxu0 0.0
    %2992 = vmatpush1.msra.mxu0 %v2474
    %2993 = vmatprep.subr.mxu0 0.0
    %2994 = vmatpush2.msra.mxu0 0.0
    %2995 = vmatprep.subr.mxu0 0.0
    %2996 = vmatpush2.msra.mxu0 0.0
    %2997 = vmatprep.subr.mxu0 0.0
    %2998 = vmatpush2.msra.mxu0 0.0
    %2999 = vmatprep.subr.mxu0 0.0
    %3000 = vmatpush2.msra.mxu0 0.0
    %3001 = vmatprep.subr.mxu0 0.0
    %3002 = vmatpush2.msra.mxu0 0.0
    %3003 = vmatprep.subr.mxu0 0.0
    %3004 = vmatpush2.msra.mxu0 0.0
    %3005 = vmatprep.subr.mxu0 0.0
    %3006 = vmatpush2.msra.mxu0 0.0
    %3007 = vmatprep.subr.mxu0 0.0
    %3008 = vmatpush2.msra.mxu0 0.0
    %3009 = vmatprep.subr.mxu0 0.0
    %3010 = vmatpush2.msra.mxu0 0.0
    %3011 = vmatprep.subr.mxu0 0.0
    %3012 = vmatpush2.msra.mxu0 0.0
    %3013 = vmatprep.subr.mxu0 0.0
    %3014 = vmatpush2.msra.mxu0 0.0
    %3015 = vmatprep.subr.mxu0 0.0
    %3016 = vmatpush2.msra.mxu0 0.0
    %3017 = vmatprep.subr.mxu0 0.0
    %3018 = vmatpush2.msra.mxu0 0.0
    %3019 = vmatprep.subr.mxu0 0.0
    %3020 = vmatpush2.msra.mxu0 0.0
    %3021 = vmatprep.subr.mxu0 0.0
    %3022 = vmatpush2.msra.mxu0 0.0
    %3023 = vmatprep.subr.mxu0 0.0
    %3024 = vmatpush2.msra.mxu0 0.0
    %3025 = vmatprep.mubr.f32.mxu0 0.0
    %3026 = vmatmul.mubr.f32.gmra.mxu0 %v2639
    %v3027 = vpop.f32.mrf.mxu0
    %v3028 = vadd.f32 0.0, %v3027
    %v3029 = vpop.f32.mrf.mxu0
    %3030 = vdwg.mxu0
    %3031 = vmatprep.subr.mxu0 0.0
    %3032 = vmatpush1.msra.mxu0 0.0
    %3033 = vmatprep.subr.mxu0 0.0
    %3034 = vmatpush1.msra.mxu0 0.0
    %3035 = vmatprep.subr.mxu0 0.0
    %3036 = vmatpush1.msra.mxu0 0.0
    %3037 = vmatprep.subr.mxu0 0.0
    %3038 = vmatpush1.msra.mxu0 0.0
    %3039 = vmatprep.subr.mxu0 0.0
    %3040 = vmatpush1.msra.mxu0 0.0
    %3041 = vmatprep.subr.mxu0 0.0
    %3042 = vmatpush1.msra.mxu0 0.0
    %3043 = vmatprep.subr.mxu0 0.0
    %3044 = vmatpush1.msra.mxu0 0.0
    %3045 = vmatprep.subr.mxu0 0.0
    %3046 = vmatpush1.msra.mxu0 %v2473
    %3047 = vmatprep.subr.mxu0 0.0
    %3048 = vmatpush1.msra.mxu0 %v2472
    %3049 = vmatprep.subr.mxu0 0.0
    %3050 = vmatpush1.msra.mxu0 %v2471
    %3051 = vmatprep.subr.mxu0 0.0
    %3052 = vmatpush1.msra.mxu0 %v2470
    %3053 = vmatprep.subr.mxu0 0.0
    %3054 = vmatpush1.msra.mxu0 %v2469
    %3055 = vmatprep.subr.mxu0 0.0
    %3056 = vmatpush1.msra.mxu0 %v2468
    %3057 = vmatprep.subr.mxu0 0.0
    %3058 = vmatpush1.msra.mxu0 %v2467
    %3059 = vmatprep.subr.mxu0 0.0
    %3060 = vmatpush1.msra.mxu0 %v2466
    %3061 = vmatprep.subr.mxu0 0.0
    %3062 = vmatpush1.msra.mxu0 %v2465
    %3063 = vmatprep.subr.mxu0 0.0
    %3064 = vmatpush2.msra.mxu0 0.0
    %3065 = vmatprep.subr.mxu0 0.0
    %3066 = vmatpush2.msra.mxu0 0.0
    %3067 = vmatprep.subr.mxu0 0.0
    %3068 = vmatpush2.msra.mxu0 0.0
    %3069 = vmatprep.subr.mxu0 0.0
    %3070 = vmatpush2.msra.mxu0 0.0
    %3071 = vmatprep.subr.mxu0 0.0
    %3072 = vmatpush2.msra.mxu0 0.0
    %3073 = vmatprep.subr.mxu0 0.0
    %3074 = vmatpush2.msra.mxu0 0.0
    %3075 = vmatprep.subr.mxu0 0.0
    %3076 = vmatpush2.msra.mxu0 0.0
    %3077 = vmatprep.subr.mxu0 0.0
    %3078 = vmatpush2.msra.mxu0 0.0
    %3079 = vmatprep.subr.mxu0 0.0
    %3080 = vmatpush2.msra.mxu0 0.0
    %3081 = vmatprep.subr.mxu0 0.0
    %3082 = vmatpush2.msra.mxu0 0.0
    %3083 = vmatprep.subr.mxu0 0.0
    %3084 = vmatpush2.msra.mxu0 0.0
    %3085 = vmatprep.subr.mxu0 0.0
    %3086 = vmatpush2.msra.mxu0 0.0
    %3087 = vmatprep.subr.mxu0 0.0
    %3088 = vmatpush2.msra.mxu0 0.0
    %3089 = vmatprep.subr.mxu0 0.0
    %3090 = vmatpush2.msra.mxu0 0.0
    %3091 = vmatprep.subr.mxu0 0.0
    %3092 = vmatpush2.msra.mxu0 0.0
    %3093 = vmatprep.subr.mxu0 0.0
    %3094 = vmatpush2.msra.mxu0 0.0
    %3095 = vmatprep.mubr.f32.mxu0 0.0
    %3096 = vmatmul.mubr.f32.gmra.mxu0 %v2484
    %v3097 = vpop.f32.mrf.mxu0
    %v3098 = vadd.f32 %v3028, %v3097
    %v3099 = vpop.f32.mrf.mxu0
    %3100 = vdwg.mxu0
    %v3102 = vsel %vm87, %v2463, 0
    %3104 = vmatprep.subr.mxu0 0.0
    %3105 = vmatpush1.msra.mxu0 0.0
    %3106 = vmatprep.subr.mxu0 0.0
    %3107 = vmatpush1.msra.mxu0 0.0
    %3108 = vmatprep.subr.mxu0 0.0
    %3109 = vmatpush1.msra.mxu0 0.0
    %3110 = vmatprep.subr.mxu0 0.0
    %3111 = vmatpush1.msra.mxu0 0.0
    %3112 = vmatprep.subr.mxu0 0.0
    %3113 = vmatpush1.msra.mxu0 0.0
    %3114 = vmatprep.subr.mxu0 0.0
    %3115 = vmatpush1.msra.mxu0 0.0
    %3116 = vmatprep.subr.mxu0 0.0
    %3117 = vmatpush1.msra.mxu0 0.0
    %3118 = vmatprep.subr.mxu0 0.0
    %3119 = vmatpush1.msra.mxu0 %v2637
    %3120 = vmatprep.subr.mxu0 0.0
    %3121 = vmatpush1.msra.mxu0 %v2636
    %3122 = vmatprep.subr.mxu0 0.0
    %3123 = vmatpush1.msra.mxu0 %v2635
    %3124 = vmatprep.subr.mxu0 0.0
    %3125 = vmatpush1.msra.mxu0 %v2634
    %3126 = vmatprep.subr.mxu0 0.0
    %3127 = vmatpush1.msra.mxu0 %v2633
    %3128 = vmatprep.subr.mxu0 0.0
    %3129 = vmatpush1.msra.mxu0 %v2632
    %3130 = vmatprep.subr.mxu0 0.0
    %3131 = vmatpush1.msra.mxu0 %v2631
    %3132 = vmatprep.subr.mxu0 0.0
    %3133 = vmatpush1.msra.mxu0 %v2630
    %3134 = vmatprep.subr.mxu0 0.0
    %3135 = vmatpush1.msra.mxu0 %v2629
    %3136 = vmatprep.subr.mxu0 0.0
    %3137 = vmatpush2.msra.mxu0 0.0
    %3138 = vmatprep.subr.mxu0 0.0
    %3139 = vmatpush2.msra.mxu0 0.0
    %3140 = vmatprep.subr.mxu0 0.0
    %3141 = vmatpush2.msra.mxu0 0.0
    %3142 = vmatprep.subr.mxu0 0.0
    %3143 = vmatpush2.msra.mxu0 0.0
    %3144 = vmatprep.subr.mxu0 0.0
    %3145 = vmatpush2.msra.mxu0 0.0
    %3146 = vmatprep.subr.mxu0 0.0
    %3147 = vmatpush2.msra.mxu0 0.0
    %3148 = vmatprep.subr.mxu0 0.0
    %3149 = vmatpush2.msra.mxu0 0.0
    %3150 = vmatprep.subr.mxu0 0.0
    %3151 = vmatpush2.msra.mxu0 0.0
    %3152 = vmatprep.subr.mxu0 0.0
    %3153 = vmatpush2.msra.mxu0 0.0
    %3154 = vmatprep.subr.mxu0 0.0
    %3155 = vmatpush2.msra.mxu0 0.0
    %3156 = vmatprep.subr.mxu0 0.0
    %3157 = vmatpush2.msra.mxu0 0.0
    %3158 = vmatprep.subr.mxu0 0.0
    %3159 = vmatpush2.msra.mxu0 0.0
    %3160 = vmatprep.subr.mxu0 0.0
    %3161 = vmatpush2.msra.mxu0 0.0
    %3162 = vmatprep.subr.mxu0 0.0
    %3163 = vmatpush2.msra.mxu0 0.0
    %3164 = vmatprep.subr.mxu0 0.0
    %3165 = vmatpush2.msra.mxu0 0.0
    %3166 = vmatprep.subr.mxu0 0.0
    %3167 = vmatpush2.msra.mxu0 0.0
    %3168 = vmatprep.mubr.f32.mxu0 0.0
    %3169 = vmatmul.mubr.f32.gmra.mxu0 %v3102
    %v3170 = vpop.f32.mrf.mxu0
    %v3171 = vadd.f32 0.0, %v3170
    %v3172 = vpop.f32.mrf.mxu0
    %3173 = vdwg.mxu0
    %v3174 = vadd.f32 %v3098, %v3171
    %v3175 = vadd.f32 %v3174, %v2716
    %v3176 = vmax.f32 %v3175, 0.0
    %v3177 = vmax.f32 %v2960, %v3176
    %3178 = vmatprep.subr.mxu0 0.0
    %3179 = vmatpush1.msra.mxu0 0.0
    %3180 = vmatprep.subr.mxu0 0.0
    %3181 = vmatpush1.msra.mxu0 0.0
    %3182 = vmatprep.subr.mxu0 0.0
    %3183 = vmatpush1.msra.mxu0 0.0
    %3184 = vmatprep.subr.mxu0 0.0
    %3185 = vmatpush1.msra.mxu0 0.0
    %3186 = vmatprep.subr.mxu0 0.0
    %3187 = vmatpush1.msra.mxu0 0.0
    %3188 = vmatprep.subr.mxu0 0.0
    %3189 = vmatpush1.msra.mxu0 0.0
    %3190 = vmatprep.subr.mxu0 0.0
    %3191 = vmatpush1.msra.mxu0 0.0
    %3192 = vmatprep.subr.mxu0 0.0
    %3193 = vmatpush1.msra.mxu0 %v2737
    %3194 = vmatprep.subr.mxu0 0.0
    %3195 = vmatpush1.msra.mxu0 %v2736
    %3196 = vmatprep.subr.mxu0 0.0
    %3197 = vmatpush1.msra.mxu0 %v2735
    %3198 = vmatprep.subr.mxu0 0.0
    %3199 = vmatpush1.msra.mxu0 %v2734
    %3200 = vmatprep.subr.mxu0 0.0
    %3201 = vmatpush1.msra.mxu0 %v2733
    %3202 = vmatprep.subr.mxu0 0.0
    %3203 = vmatpush1.msra.mxu0 %v2732
    %3204 = vmatprep.subr.mxu0 0.0
    %3205 = vmatpush1.msra.mxu0 %v2731
    %3206 = vmatprep.subr.mxu0 0.0
    %3207 = vmatpush1.msra.mxu0 %v2730
    %3208 = vmatprep.subr.mxu0 0.0
    %3209 = vmatpush1.msra.mxu0 %v2729
    %3210 = vmatprep.subr.mxu0 0.0
    %3211 = vmatpush2.msra.mxu0 0.0
    %3212 = vmatprep.subr.mxu0 0.0
    %3213 = vmatpush2.msra.mxu0 0.0
    %3214 = vmatprep.subr.mxu0 0.0
    %3215 = vmatpush2.msra.mxu0 0.0
    %3216 = vmatprep.subr.mxu0 0.0
    %3217 = vmatpush2.msra.mxu0 0.0
    %3218 = vmatprep.subr.mxu0 0.0
    %3219 = vmatpush2.msra.mxu0 0.0
    %3220 = vmatprep.subr.mxu0 0.0
    %3221 = vmatpush2.msra.mxu0 0.0
    %3222 = vmatprep.subr.mxu0 0.0
    %3223 = vmatpush2.msra.mxu0 0.0
    %3224 = vmatprep.subr.mxu0 0.0
    %3225 = vmatpush2.msra.mxu0 0.0
    %3226 = vmatprep.subr.mxu0 0.0
    %3227 = vmatpush2.msra.mxu0 0.0
    %3228 = vmatprep.subr.mxu0 0.0
    %3229 = vmatpush2.msra.mxu0 0.0
    %3230 = vmatprep.subr.mxu0 0.0
    %3231 = vmatpush2.msra.mxu0 0.0
    %3232 = vmatprep.subr.mxu0 0.0
    %3233 = vmatpush2.msra.mxu0 0.0
    %3234 = vmatprep.subr.mxu0 0.0
    %3235 = vmatpush2.msra.mxu0 0.0
    %3236 = vmatprep.subr.mxu0 0.0
    %3237 = vmatpush2.msra.mxu0 0.0
    %3238 = vmatprep.subr.mxu0 0.0
    %3239 = vmatpush2.msra.mxu0 0.0
    %3240 = vmatprep.subr.mxu0 0.0
    %3241 = vmatpush2.msra.mxu0 0.0
    %3242 = vmatprep.mubr.f32.mxu0 0.0
    %3243 = vmatmul.mubr.f32.gmra.mxu0 %v2639
    %v3244 = vpop.f32.mrf.mxu0
    %v3245 = vadd.f32 0.0, %v3244
    %v3246 = vpop.f32.mrf.mxu0
    %3247 = vdwg.mxu0
    %3248 = vmatprep.subr.mxu0 0.0
    %3249 = vmatpush1.msra.mxu0 0.0
    %3250 = vmatprep.subr.mxu0 0.0
    %3251 = vmatpush1.msra.mxu0 0.0
    %3252 = vmatprep.subr.mxu0 0.0
    %3253 = vmatpush1.msra.mxu0 0.0
    %3254 = vmatprep.subr.mxu0 0.0
    %3255 = vmatpush1.msra.mxu0 0.0
    %3256 = vmatprep.subr.mxu0 0.0
    %3257 = vmatpush1.msra.mxu0 0.0
    %3258 = vmatprep.subr.mxu0 0.0
    %3259 = vmatpush1.msra.mxu0 0.0
    %3260 = vmatprep.subr.mxu0 0.0
    %3261 = vmatpush1.msra.mxu0 0.0
    %3262 = vmatprep.subr.mxu0 0.0
    %3263 = vmatpush1.msra.mxu0 %v2728
    %3264 = vmatprep.subr.mxu0 0.0
    %3265 = vmatpush1.msra.mxu0 %v2727
    %3266 = vmatprep.subr.mxu0 0.0
    %3267 = vmatpush1.msra.mxu0 %v2726
    %3268 = vmatprep.subr.mxu0 0.0
    %3269 = vmatpush1.msra.mxu0 %v2725
    %3270 = vmatprep.subr.mxu0 0.0
    %3271 = vmatpush1.msra.mxu0 %v2724
    %3272 = vmatprep.subr.mxu0 0.0
    %3273 = vmatpush1.msra.mxu0 %v2723
    %3274 = vmatprep.subr.mxu0 0.0
    %3275 = vmatpush1.msra.mxu0 %v2722
    %3276 = vmatprep.subr.mxu0 0.0
    %3277 = vmatpush1.msra.mxu0 %v2721
    %3278 = vmatprep.subr.mxu0 0.0
    %3279 = vmatpush1.msra.mxu0 %v2720
    %3280 = vmatprep.subr.mxu0 0.0
    %3281 = vmatpush2.msra.mxu0 0.0
    %3282 = vmatprep.subr.mxu0 0.0
    %3283 = vmatpush2.msra.mxu0 0.0
    %3284 = vmatprep.subr.mxu0 0.0
    %3285 = vmatpush2.msra.mxu0 0.0
    %3286 = vmatprep.subr.mxu0 0.0
    %3287 = vmatpush2.msra.mxu0 0.0
    %3288 = vmatprep.subr.mxu0 0.0
    %3289 = vmatpush2.msra.mxu0 0.0
    %3290 = vmatprep.subr.mxu0 0.0
    %3291 = vmatpush2.msra.mxu0 0.0
    %3292 = vmatprep.subr.mxu0 0.0
    %3293 = vmatpush2.msra.mxu0 0.0
    %3294 = vmatprep.subr.mxu0 0.0
    %3295 = vmatpush2.msra.mxu0 0.0
    %3296 = vmatprep.subr.mxu0 0.0
    %3297 = vmatpush2.msra.mxu0 0.0
    %3298 = vmatprep.subr.mxu0 0.0
    %3299 = vmatpush2.msra.mxu0 0.0
    %3300 = vmatprep.subr.mxu0 0.0
    %3301 = vmatpush2.msra.mxu0 0.0
    %3302 = vmatprep.subr.mxu0 0.0
    %3303 = vmatpush2.msra.mxu0 0.0
    %3304 = vmatprep.subr.mxu0 0.0
    %3305 = vmatpush2.msra.mxu0 0.0
    %3306 = vmatprep.subr.mxu0 0.0
    %3307 = vmatpush2.msra.mxu0 0.0
    %3308 = vmatprep.subr.mxu0 0.0
    %3309 = vmatpush2.msra.mxu0 0.0
    %3310 = vmatprep.subr.mxu0 0.0
    %3311 = vmatpush2.msra.mxu0 0.0
    %3312 = vmatprep.mubr.f32.mxu0 0.0
    %3313 = vmatmul.mubr.f32.gmra.mxu0 %v2484
    %v3314 = vpop.f32.mrf.mxu0
    %v3315 = vadd.f32 %v3245, %v3314
    %v3316 = vpop.f32.mrf.mxu0
    %3317 = vdwg.mxu0
    %3318 = vmatprep.subr.mxu0 0.0
    %3319 = vmatpush1.msra.mxu0 0.0
    %3320 = vmatprep.subr.mxu0 0.0
    %3321 = vmatpush1.msra.mxu0 0.0
    %3322 = vmatprep.subr.mxu0 0.0
    %3323 = vmatpush1.msra.mxu0 0.0
    %3324 = vmatprep.subr.mxu0 0.0
    %3325 = vmatpush1.msra.mxu0 0.0
    %3326 = vmatprep.subr.mxu0 0.0
    %3327 = vmatpush1.msra.mxu0 0.0
    %3328 = vmatprep.subr.mxu0 0.0
    %3329 = vmatpush1.msra.mxu0 0.0
    %3330 = vmatprep.subr.mxu0 0.0
    %3331 = vmatpush1.msra.mxu0 0.0
    %3332 = vmatprep.subr.mxu0 0.0
    %3333 = vmatpush1.msra.mxu0 %v2886
    %3334 = vmatprep.subr.mxu0 0.0
    %3335 = vmatpush1.msra.mxu0 %v2885
    %3336 = vmatprep.subr.mxu0 0.0
    %3337 = vmatpush1.msra.mxu0 %v2884
    %3338 = vmatprep.subr.mxu0 0.0
    %3339 = vmatpush1.msra.mxu0 %v2883
    %3340 = vmatprep.subr.mxu0 0.0
    %3341 = vmatpush1.msra.mxu0 %v2882
    %3342 = vmatprep.subr.mxu0 0.0
    %3343 = vmatpush1.msra.mxu0 %v2881
    %3344 = vmatprep.subr.mxu0 0.0
    %3345 = vmatpush1.msra.mxu0 %v2880
    %3346 = vmatprep.subr.mxu0 0.0
    %3347 = vmatpush1.msra.mxu0 %v2879
    %3348 = vmatprep.subr.mxu0 0.0
    %3349 = vmatpush1.msra.mxu0 %v2878
    %3350 = vmatprep.subr.mxu0 0.0
    %3351 = vmatpush2.msra.mxu0 0.0
    %3352 = vmatprep.subr.mxu0 0.0
    %3353 = vmatpush2.msra.mxu0 0.0
    %3354 = vmatprep.subr.mxu0 0.0
    %3355 = vmatpush2.msra.mxu0 0.0
    %3356 = vmatprep.subr.mxu0 0.0
    %3357 = vmatpush2.msra.mxu0 0.0
    %3358 = vmatprep.subr.mxu0 0.0
    %3359 = vmatpush2.msra.mxu0 0.0
    %3360 = vmatprep.subr.mxu0 0.0
    %3361 = vmatpush2.msra.mxu0 0.0
    %3362 = vmatprep.subr.mxu0 0.0
    %3363 = vmatpush2.msra.mxu0 0.0
    %3364 = vmatprep.subr.mxu0 0.0
    %3365 = vmatpush2.msra.mxu0 0.0
    %3366 = vmatprep.subr.mxu0 0.0
    %3367 = vmatpush2.msra.mxu0 0.0
    %3368 = vmatprep.subr.mxu0 0.0
    %3369 = vmatpush2.msra.mxu0 0.0
    %3370 = vmatprep.subr.mxu0 0.0
    %3371 = vmatpush2.msra.mxu0 0.0
    %3372 = vmatprep.subr.mxu0 0.0
    %3373 = vmatpush2.msra.mxu0 0.0
    %3374 = vmatprep.subr.mxu0 0.0
    %3375 = vmatpush2.msra.mxu0 0.0
    %3376 = vmatprep.subr.mxu0 0.0
    %3377 = vmatpush2.msra.mxu0 0.0
    %3378 = vmatprep.subr.mxu0 0.0
    %3379 = vmatpush2.msra.mxu0 0.0
    %3380 = vmatprep.subr.mxu0 0.0
    %3381 = vmatpush2.msra.mxu0 0.0
    %3382 = vmatprep.mubr.f32.mxu0 0.0
    %3383 = vmatmul.mubr.f32.gmra.mxu0 %v3102
    %v3384 = vpop.f32.mrf.mxu0
    %v3385 = vadd.f32 0.0, %v3384
    %v3386 = vpop.f32.mrf.mxu0
    %3387 = vdwg.mxu0
    %v3388 = vadd.f32 %v3315, %v3385
    %v3389 = vadd.f32 %v3388, %v2716
    %v3390 = vmax.f32 %v3389, 0.0
    %v3391 = vmax.f32 %v3177, %v3390
    %3393 = vrot.lane.b32.xlu0 %v3391, 8
    %v3394 = vpop.permute.xlu0 %3393
    %3396 = vst.msk [vmem:[#allocation2 + $0xb] sm:$0xff] %vm1005, %v3394
    %s3397 = scalar_lea.vmem [#allocation2], 10
    %v3398 = vld [vmem:[%s3397] ss:$2 sm:$0xf]
    %s3399 = scalar_lea.vmem [#allocation2], 11
    %v3400 = vld [vmem:[%s3399] ss:$2 sm:$0xf]
    %s3401 = scalar_lea.vmem [#allocation2], 12
    %v3402 = vld [vmem:[%s3401] ss:$2 sm:$0xf]
    %s3403 = scalar_lea.vmem [#allocation2], 13
    %v3404 = vld [vmem:[%s3403] ss:$2 sm:$0xf]
    %v3405 = vld [vmem:[%s4] sm:$0x1]
    %v3406 = vld [vmem:[%s3] sm:$0xff]
    %v3407 = vld [vmem:[%s3 + $0x8] sm:$0xff]
    %v3408 = vld [vmem:[%s3 + $0x10] sm:$0xff]
    %v3409 = vld [vmem:[%s3 + $0x18] sm:$0xff]
    %v3410 = vld [vmem:[%s3 + $0x20] sm:$0xff]
    %v3411 = vld [vmem:[%s3 + $0x28] sm:$0xff]
    %v3412 = vld [vmem:[%s3 + $0x30] sm:$0xff]
    %v3413 = vld [vmem:[%s3 + $0x38] sm:$0xff]
    %v3414 = vld [vmem:[%s3 + $0x40] sm:$0xff]
    %v3415 = vld [vmem:[%s3 + $0x48] sm:$0xff]
    %v3416 = vld [vmem:[%s1025] sm:$0xff]
    %v3417 = vld [vmem:[%s1025 + $0x8] sm:$0xff]
    %v3418 = vld [vmem:[%s1025 + $0x10] sm:$0xff]
    %v3419 = vld [vmem:[%s1025 + $0x18] sm:$0xff]
    %v3420 = vld [vmem:[%s1025 + $0x20] sm:$0xff]
    %v3421 = vld [vmem:[%s1025 + $0x28] sm:$0xff]
    %v3422 = vld [vmem:[%s1025 + $0x30] sm:$0xff]
    %v3423 = vld [vmem:[%s1025 + $0x38] sm:$0xff]
    %v3424 = vld [vmem:[%s1025 + $0x40] sm:$0xff]
    %v3425 = vld [vmem:[%s1025 + $0x48] sm:$0xff]
    %v3427 = vsel %vm55, %v3400, 0
    %3429 = vmatprep.subr.mxu0 0.0
    %3430 = vmatpush1.msra.mxu0 0.0
    %3431 = vmatprep.subr.mxu0 0.0
    %3432 = vmatpush1.msra.mxu0 0.0
    %3433 = vmatprep.subr.mxu0 0.0
    %3434 = vmatpush1.msra.mxu0 0.0
    %3435 = vmatprep.subr.mxu0 0.0
    %3436 = vmatpush1.msra.mxu0 0.0
    %3437 = vmatprep.subr.mxu0 0.0
    %3438 = vmatpush1.msra.mxu0 0.0
    %3439 = vmatprep.subr.mxu0 0.0
    %3440 = vmatpush1.msra.mxu0 0.0
    %3441 = vmatprep.subr.mxu0 0.0
    %3442 = vmatpush1.msra.mxu0 %v3425
    %3443 = vmatprep.subr.mxu0 0.0
    %3444 = vmatpush1.msra.mxu0 %v3424
    %3445 = vmatprep.subr.mxu0 0.0
    %3446 = vmatpush1.msra.mxu0 %v3423
    %3447 = vmatprep.subr.mxu0 0.0
    %3448 = vmatpush1.msra.mxu0 %v3422
    %3449 = vmatprep.subr.mxu0 0.0
    %3450 = vmatpush1.msra.mxu0 %v3421
    %3451 = vmatprep.subr.mxu0 0.0
    %3452 = vmatpush1.msra.mxu0 %v3420
    %3453 = vmatprep.subr.mxu0 0.0
    %3454 = vmatpush1.msra.mxu0 %v3419
    %3455 = vmatprep.subr.mxu0 0.0
    %3456 = vmatpush1.msra.mxu0 %v3418
    %3457 = vmatprep.subr.mxu0 0.0
    %3458 = vmatpush1.msra.mxu0 %v3417
    %3459 = vmatprep.subr.mxu0 0.0
    %3460 = vmatpush1.msra.mxu0 %v3416
    %3461 = vmatprep.subr.mxu0 0.0
    %3462 = vmatpush2.msra.mxu0 0.0
    %3463 = vmatprep.subr.mxu0 0.0
    %3464 = vmatpush2.msra.mxu0 0.0
    %3465 = vmatprep.subr.mxu0 0.0
    %3466 = vmatpush2.msra.mxu0 0.0
    %3467 = vmatprep.subr.mxu0 0.0
    %3468 = vmatpush2.msra.mxu0 0.0
    %3469 = vmatprep.subr.mxu0 0.0
    %3470 = vmatpush2.msra.mxu0 0.0
    %3471 = vmatprep.subr.mxu0 0.0
    %3472 = vmatpush2.msra.mxu0 0.0
    %3473 = vmatprep.subr.mxu0 0.0
    %3474 = vmatpush2.msra.mxu0 0.0
    %3475 = vmatprep.subr.mxu0 0.0
    %3476 = vmatpush2.msra.mxu0 0.0
    %3477 = vmatprep.subr.mxu0 0.0
    %3478 = vmatpush2.msra.mxu0 0.0
    %3479 = vmatprep.subr.mxu0 0.0
    %3480 = vmatpush2.msra.mxu0 0.0
    %3481 = vmatprep.subr.mxu0 0.0
    %3482 = vmatpush2.msra.mxu0 0.0
    %3483 = vmatprep.subr.mxu0 0.0
    %3484 = vmatpush2.msra.mxu0 0.0
    %3485 = vmatprep.subr.mxu0 0.0
    %3486 = vmatpush2.msra.mxu0 0.0
    %3487 = vmatprep.subr.mxu0 0.0
    %3488 = vmatpush2.msra.mxu0 0.0
    %3489 = vmatprep.subr.mxu0 0.0
    %3490 = vmatpush2.msra.mxu0 0.0
    %3491 = vmatprep.subr.mxu0 0.0
    %3492 = vmatpush2.msra.mxu0 0.0
    %3493 = vmatprep.mubr.f32.mxu0 0.0
    %3494 = vmatmul.mubr.f32.gmra.mxu0 %v3427
    %v3495 = vpop.f32.mrf.mxu0
    %v3496 = vadd.f32 0.0, %v3495
    %v3497 = vpop.f32.mrf.mxu0
    %3498 = vdwg.mxu0
    %v3500 = vsel %vm55, %v3398, 0
    %3502 = vmatprep.subr.mxu0 0.0
    %3503 = vmatpush1.msra.mxu0 0.0
    %3504 = vmatprep.subr.mxu0 0.0
    %3505 = vmatpush1.msra.mxu0 0.0
    %3506 = vmatprep.subr.mxu0 0.0
    %3507 = vmatpush1.msra.mxu0 0.0
    %3508 = vmatprep.subr.mxu0 0.0
    %3509 = vmatpush1.msra.mxu0 0.0
    %3510 = vmatprep.subr.mxu0 0.0
    %3511 = vmatpush1.msra.mxu0 0.0
    %3512 = vmatprep.subr.mxu0 0.0
    %3513 = vmatpush1.msra.mxu0 0.0
    %3514 = vmatprep.subr.mxu0 0.0
    %3515 = vmatpush1.msra.mxu0 %v3415
    %3516 = vmatprep.subr.mxu0 0.0
    %3517 = vmatpush1.msra.mxu0 %v3414
    %3518 = vmatprep.subr.mxu0 0.0
    %3519 = vmatpush1.msra.mxu0 %v3413
    %3520 = vmatprep.subr.mxu0 0.0
    %3521 = vmatpush1.msra.mxu0 %v3412
    %3522 = vmatprep.subr.mxu0 0.0
    %3523 = vmatpush1.msra.mxu0 %v3411
    %3524 = vmatprep.subr.mxu0 0.0
    %3525 = vmatpush1.msra.mxu0 %v3410
    %3526 = vmatprep.subr.mxu0 0.0
    %3527 = vmatpush1.msra.mxu0 %v3409
    %3528 = vmatprep.subr.mxu0 0.0
    %3529 = vmatpush1.msra.mxu0 %v3408
    %3530 = vmatprep.subr.mxu0 0.0
    %3531 = vmatpush1.msra.mxu0 %v3407
    %3532 = vmatprep.subr.mxu0 0.0
    %3533 = vmatpush1.msra.mxu0 %v3406
    %3534 = vmatprep.subr.mxu0 0.0
    %3535 = vmatpush2.msra.mxu0 0.0
    %3536 = vmatprep.subr.mxu0 0.0
    %3537 = vmatpush2.msra.mxu0 0.0
    %3538 = vmatprep.subr.mxu0 0.0
    %3539 = vmatpush2.msra.mxu0 0.0
    %3540 = vmatprep.subr.mxu0 0.0
    %3541 = vmatpush2.msra.mxu0 0.0
    %3542 = vmatprep.subr.mxu0 0.0
    %3543 = vmatpush2.msra.mxu0 0.0
    %3544 = vmatprep.subr.mxu0 0.0
    %3545 = vmatpush2.msra.mxu0 0.0
    %3546 = vmatprep.subr.mxu0 0.0
    %3547 = vmatpush2.msra.mxu0 0.0
    %3548 = vmatprep.subr.mxu0 0.0
    %3549 = vmatpush2.msra.mxu0 0.0
    %3550 = vmatprep.subr.mxu0 0.0
    %3551 = vmatpush2.msra.mxu0 0.0
    %3552 = vmatprep.subr.mxu0 0.0
    %3553 = vmatpush2.msra.mxu0 0.0
    %3554 = vmatprep.subr.mxu0 0.0
    %3555 = vmatpush2.msra.mxu0 0.0
    %3556 = vmatprep.subr.mxu0 0.0
    %3557 = vmatpush2.msra.mxu0 0.0
    %3558 = vmatprep.subr.mxu0 0.0
    %3559 = vmatpush2.msra.mxu0 0.0
    %3560 = vmatprep.subr.mxu0 0.0
    %3561 = vmatpush2.msra.mxu0 0.0
    %3562 = vmatprep.subr.mxu0 0.0
    %3563 = vmatpush2.msra.mxu0 0.0
    %3564 = vmatprep.subr.mxu0 0.0
    %3565 = vmatpush2.msra.mxu0 0.0
    %3566 = vmatprep.mubr.f32.mxu0 0.0
    %3567 = vmatmul.mubr.f32.gmra.mxu0 %v3500
    %v3568 = vpop.f32.mrf.mxu0
    %v3569 = vadd.f32 %v3496, %v3568
    %v3570 = vpop.f32.mrf.mxu0
    %3571 = vdwg.mxu0
    %v3572 = vld [vmem:[%s1182] sm:$0xff]
    %v3573 = vld [vmem:[%s1182 + $0x8] sm:$0xff]
    %v3574 = vld [vmem:[%s1182 + $0x10] sm:$0xff]
    %v3575 = vld [vmem:[%s1182 + $0x18] sm:$0xff]
    %v3576 = vld [vmem:[%s1182 + $0x20] sm:$0xff]
    %v3577 = vld [vmem:[%s1182 + $0x28] sm:$0xff]
    %v3578 = vld [vmem:[%s1182 + $0x30] sm:$0xff]
    %v3579 = vld [vmem:[%s1182 + $0x38] sm:$0xff]
    %v3580 = vld [vmem:[%s1182 + $0x40] sm:$0xff]
    %v3581 = vld [vmem:[%s1182 + $0x48] sm:$0xff]
    %v3583 = vsel %vm55, %v3402, 0
    %3585 = vmatprep.subr.mxu0 0.0
    %3586 = vmatpush1.msra.mxu0 0.0
    %3587 = vmatprep.subr.mxu0 0.0
    %3588 = vmatpush1.msra.mxu0 0.0
    %3589 = vmatprep.subr.mxu0 0.0
    %3590 = vmatpush1.msra.mxu0 0.0
    %3591 = vmatprep.subr.mxu0 0.0
    %3592 = vmatpush1.msra.mxu0 0.0
    %3593 = vmatprep.subr.mxu0 0.0
    %3594 = vmatpush1.msra.mxu0 0.0
    %3595 = vmatprep.subr.mxu0 0.0
    %3596 = vmatpush1.msra.mxu0 0.0
    %3597 = vmatprep.subr.mxu0 0.0
    %3598 = vmatpush1.msra.mxu0 %v3581
    %3599 = vmatprep.subr.mxu0 0.0
    %3600 = vmatpush1.msra.mxu0 %v3580
    %3601 = vmatprep.subr.mxu0 0.0
    %3602 = vmatpush1.msra.mxu0 %v3579
    %3603 = vmatprep.subr.mxu0 0.0
    %3604 = vmatpush1.msra.mxu0 %v3578
    %3605 = vmatprep.subr.mxu0 0.0
    %3606 = vmatpush1.msra.mxu0 %v3577
    %3607 = vmatprep.subr.mxu0 0.0
    %3608 = vmatpush1.msra.mxu0 %v3576
    %3609 = vmatprep.subr.mxu0 0.0
    %3610 = vmatpush1.msra.mxu0 %v3575
    %3611 = vmatprep.subr.mxu0 0.0
    %3612 = vmatpush1.msra.mxu0 %v3574
    %3613 = vmatprep.subr.mxu0 0.0
    %3614 = vmatpush1.msra.mxu0 %v3573
    %3615 = vmatprep.subr.mxu0 0.0
    %3616 = vmatpush1.msra.mxu0 %v3572
    %3617 = vmatprep.subr.mxu0 0.0
    %3618 = vmatpush2.msra.mxu0 0.0
    %3619 = vmatprep.subr.mxu0 0.0
    %3620 = vmatpush2.msra.mxu0 0.0
    %3621 = vmatprep.subr.mxu0 0.0
    %3622 = vmatpush2.msra.mxu0 0.0
    %3623 = vmatprep.subr.mxu0 0.0
    %3624 = vmatpush2.msra.mxu0 0.0
    %3625 = vmatprep.subr.mxu0 0.0
    %3626 = vmatpush2.msra.mxu0 0.0
    %3627 = vmatprep.subr.mxu0 0.0
    %3628 = vmatpush2.msra.mxu0 0.0
    %3629 = vmatprep.subr.mxu0 0.0
    %3630 = vmatpush2.msra.mxu0 0.0
    %3631 = vmatprep.subr.mxu0 0.0
    %3632 = vmatpush2.msra.mxu0 0.0
    %3633 = vmatprep.subr.mxu0 0.0
    %3634 = vmatpush2.msra.mxu0 0.0
    %3635 = vmatprep.subr.mxu0 0.0
    %3636 = vmatpush2.msra.mxu0 0.0
    %3637 = vmatprep.subr.mxu0 0.0
    %3638 = vmatpush2.msra.mxu0 0.0
    %3639 = vmatprep.subr.mxu0 0.0
    %3640 = vmatpush2.msra.mxu0 0.0
    %3641 = vmatprep.subr.mxu0 0.0
    %3642 = vmatpush2.msra.mxu0 0.0
    %3643 = vmatprep.subr.mxu0 0.0
    %3644 = vmatpush2.msra.mxu0 0.0
    %3645 = vmatprep.subr.mxu0 0.0
    %3646 = vmatpush2.msra.mxu0 0.0
    %3647 = vmatprep.subr.mxu0 0.0
    %3648 = vmatpush2.msra.mxu0 0.0
    %3649 = vmatprep.mubr.f32.mxu0 0.0
    %3650 = vmatmul.mubr.f32.gmra.mxu0 %v3583
    %v3651 = vpop.f32.mrf.mxu0
    %v3652 = vadd.f32 0.0, %v3651
    %v3653 = vpop.f32.mrf.mxu0
    %3654 = vdwg.mxu0
    %v3655 = vadd.f32 %v3569, %v3652
    %v3657 = vlaneseq
    %v3658 = vshrl.u32 %v3657, 7
    %v3659 = vsub.s32 0, %v3658
    %v3660 = vrot.slane %v3405, %v3659
    %v3662 = vadd.f32 %v3655, %v3660
    %v3663 = vmax.f32 %v3662, 0.0
    %v3664 = vld [vmem:[%s1275] sm:$0xff]
    %v3665 = vld [vmem:[%s1275 + $0x8] sm:$0xff]
    %v3666 = vld [vmem:[%s1275 + $0x10] sm:$0xff]
    %v3667 = vld [vmem:[%s1275 + $0x18] sm:$0xff]
    %v3668 = vld [vmem:[%s1275 + $0x20] sm:$0xff]
    %v3669 = vld [vmem:[%s1275 + $0x28] sm:$0xff]
    %v3670 = vld [vmem:[%s1275 + $0x30] sm:$0xff]
    %v3671 = vld [vmem:[%s1275 + $0x38] sm:$0xff]
    %v3672 = vld [vmem:[%s1275 + $0x40] sm:$0xff]
    %v3673 = vld [vmem:[%s1275 + $0x48] sm:$0xff]
    %v3674 = vld [vmem:[%s1286] sm:$0xff]
    %v3675 = vld [vmem:[%s1286 + $0x8] sm:$0xff]
    %v3676 = vld [vmem:[%s1286 + $0x10] sm:$0xff]
    %v3677 = vld [vmem:[%s1286 + $0x18] sm:$0xff]
    %v3678 = vld [vmem:[%s1286 + $0x20] sm:$0xff]
    %v3679 = vld [vmem:[%s1286 + $0x28] sm:$0xff]
    %v3680 = vld [vmem:[%s1286 + $0x30] sm:$0xff]
    %v3681 = vld [vmem:[%s1286 + $0x38] sm:$0xff]
    %v3682 = vld [vmem:[%s1286 + $0x40] sm:$0xff]
    %v3683 = vld [vmem:[%s1286 + $0x48] sm:$0xff]
    %3684 = vmatprep.subr.mxu0 0.0
    %3685 = vmatpush1.msra.mxu0 0.0
    %3686 = vmatprep.subr.mxu0 0.0
    %3687 = vmatpush1.msra.mxu0 0.0
    %3688 = vmatprep.subr.mxu0 0.0
    %3689 = vmatpush1.msra.mxu0 0.0
    %3690 = vmatprep.subr.mxu0 0.0
    %3691 = vmatpush1.msra.mxu0 0.0
    %3692 = vmatprep.subr.mxu0 0.0
    %3693 = vmatpush1.msra.mxu0 0.0
    %3694 = vmatprep.subr.mxu0 0.0
    %3695 = vmatpush1.msra.mxu0 0.0
    %3696 = vmatprep.subr.mxu0 0.0
    %3697 = vmatpush1.msra.mxu0 %v3683
    %3698 = vmatprep.subr.mxu0 0.0
    %3699 = vmatpush1.msra.mxu0 %v3682
    %3700 = vmatprep.subr.mxu0 0.0
    %3701 = vmatpush1.msra.mxu0 %v3681
    %3702 = vmatprep.subr.mxu0 0.0
    %3703 = vmatpush1.msra.mxu0 %v3680
    %3704 = vmatprep.subr.mxu0 0.0
    %3705 = vmatpush1.msra.mxu0 %v3679
    %3706 = vmatprep.subr.mxu0 0.0
    %3707 = vmatpush1.msra.mxu0 %v3678
    %3708 = vmatprep.subr.mxu0 0.0
    %3709 = vmatpush1.msra.mxu0 %v3677
    %3710 = vmatprep.subr.mxu0 0.0
    %3711 = vmatpush1.msra.mxu0 %v3676
    %3712 = vmatprep.subr.mxu0 0.0
    %3713 = vmatpush1.msra.mxu0 %v3675
    %3714 = vmatprep.subr.mxu0 0.0
    %3715 = vmatpush1.msra.mxu0 %v3674
    %3716 = vmatprep.subr.mxu0 0.0
    %3717 = vmatpush2.msra.mxu0 0.0
    %3718 = vmatprep.subr.mxu0 0.0
    %3719 = vmatpush2.msra.mxu0 0.0
    %3720 = vmatprep.subr.mxu0 0.0
    %3721 = vmatpush2.msra.mxu0 0.0
    %3722 = vmatprep.subr.mxu0 0.0
    %3723 = vmatpush2.msra.mxu0 0.0
    %3724 = vmatprep.subr.mxu0 0.0
    %3725 = vmatpush2.msra.mxu0 0.0
    %3726 = vmatprep.subr.mxu0 0.0
    %3727 = vmatpush2.msra.mxu0 0.0
    %3728 = vmatprep.subr.mxu0 0.0
    %3729 = vmatpush2.msra.mxu0 0.0
    %3730 = vmatprep.subr.mxu0 0.0
    %3731 = vmatpush2.msra.mxu0 0.0
    %3732 = vmatprep.subr.mxu0 0.0
    %3733 = vmatpush2.msra.mxu0 0.0
    %3734 = vmatprep.subr.mxu0 0.0
    %3735 = vmatpush2.msra.mxu0 0.0
    %3736 = vmatprep.subr.mxu0 0.0
    %3737 = vmatpush2.msra.mxu0 0.0
    %3738 = vmatprep.subr.mxu0 0.0
    %3739 = vmatpush2.msra.mxu0 0.0
    %3740 = vmatprep.subr.mxu0 0.0
    %3741 = vmatpush2.msra.mxu0 0.0
    %3742 = vmatprep.subr.mxu0 0.0
    %3743 = vmatpush2.msra.mxu0 0.0
    %3744 = vmatprep.subr.mxu0 0.0
    %3745 = vmatpush2.msra.mxu0 0.0
    %3746 = vmatprep.subr.mxu0 0.0
    %3747 = vmatpush2.msra.mxu0 0.0
    %3748 = vmatprep.mubr.f32.mxu0 0.0
    %3749 = vmatmul.mubr.f32.gmra.mxu0 %v3427
    %v3750 = vpop.f32.mrf.mxu0
    %v3751 = vadd.f32 0.0, %v3750
    %v3752 = vpop.f32.mrf.mxu0
    %3753 = vdwg.mxu0
    %3754 = vmatprep.subr.mxu0 0.0
    %3755 = vmatpush1.msra.mxu0 0.0
    %3756 = vmatprep.subr.mxu0 0.0
    %3757 = vmatpush1.msra.mxu0 0.0
    %3758 = vmatprep.subr.mxu0 0.0
    %3759 = vmatpush1.msra.mxu0 0.0
    %3760 = vmatprep.subr.mxu0 0.0
    %3761 = vmatpush1.msra.mxu0 0.0
    %3762 = vmatprep.subr.mxu0 0.0
    %3763 = vmatpush1.msra.mxu0 0.0
    %3764 = vmatprep.subr.mxu0 0.0
    %3765 = vmatpush1.msra.mxu0 0.0
    %3766 = vmatprep.subr.mxu0 0.0
    %3767 = vmatpush1.msra.mxu0 %v3673
    %3768 = vmatprep.subr.mxu0 0.0
    %3769 = vmatpush1.msra.mxu0 %v3672
    %3770 = vmatprep.subr.mxu0 0.0
    %3771 = vmatpush1.msra.mxu0 %v3671
    %3772 = vmatprep.subr.mxu0 0.0
    %3773 = vmatpush1.msra.mxu0 %v3670
    %3774 = vmatprep.subr.mxu0 0.0
    %3775 = vmatpush1.msra.mxu0 %v3669
    %3776 = vmatprep.subr.mxu0 0.0
    %3777 = vmatpush1.msra.mxu0 %v3668
    %3778 = vmatprep.subr.mxu0 0.0
    %3779 = vmatpush1.msra.mxu0 %v3667
    %3780 = vmatprep.subr.mxu0 0.0
    %3781 = vmatpush1.msra.mxu0 %v3666
    %3782 = vmatprep.subr.mxu0 0.0
    %3783 = vmatpush1.msra.mxu0 %v3665
    %3784 = vmatprep.subr.mxu0 0.0
    %3785 = vmatpush1.msra.mxu0 %v3664
    %3786 = vmatprep.subr.mxu0 0.0
    %3787 = vmatpush2.msra.mxu0 0.0
    %3788 = vmatprep.subr.mxu0 0.0
    %3789 = vmatpush2.msra.mxu0 0.0
    %3790 = vmatprep.subr.mxu0 0.0
    %3791 = vmatpush2.msra.mxu0 0.0
    %3792 = vmatprep.subr.mxu0 0.0
    %3793 = vmatpush2.msra.mxu0 0.0
    %3794 = vmatprep.subr.mxu0 0.0
    %3795 = vmatpush2.msra.mxu0 0.0
    %3796 = vmatprep.subr.mxu0 0.0
    %3797 = vmatpush2.msra.mxu0 0.0
    %3798 = vmatprep.subr.mxu0 0.0
    %3799 = vmatpush2.msra.mxu0 0.0
    %3800 = vmatprep.subr.mxu0 0.0
    %3801 = vmatpush2.msra.mxu0 0.0
    %3802 = vmatprep.subr.mxu0 0.0
    %3803 = vmatpush2.msra.mxu0 0.0
    %3804 = vmatprep.subr.mxu0 0.0
    %3805 = vmatpush2.msra.mxu0 0.0
    %3806 = vmatprep.subr.mxu0 0.0
    %3807 = vmatpush2.msra.mxu0 0.0
    %3808 = vmatprep.subr.mxu0 0.0
    %3809 = vmatpush2.msra.mxu0 0.0
    %3810 = vmatprep.subr.mxu0 0.0
    %3811 = vmatpush2.msra.mxu0 0.0
    %3812 = vmatprep.subr.mxu0 0.0
    %3813 = vmatpush2.msra.mxu0 0.0
    %3814 = vmatprep.subr.mxu0 0.0
    %3815 = vmatpush2.msra.mxu0 0.0
    %3816 = vmatprep.subr.mxu0 0.0
    %3817 = vmatpush2.msra.mxu0 0.0
    %3818 = vmatprep.mubr.f32.mxu0 0.0
    %3819 = vmatmul.mubr.f32.gmra.mxu0 %v3500
    %v3820 = vpop.f32.mrf.mxu0
    %v3821 = vadd.f32 %v3751, %v3820
    %v3822 = vpop.f32.mrf.mxu0
    %3823 = vdwg.mxu0
    %v3824 = vld [vmem:[%s1437] sm:$0xff]
    %v3825 = vld [vmem:[%s1437 + $0x8] sm:$0xff]
    %v3826 = vld [vmem:[%s1437 + $0x10] sm:$0xff]
    %v3827 = vld [vmem:[%s1437 + $0x18] sm:$0xff]
    %v3828 = vld [vmem:[%s1437 + $0x20] sm:$0xff]
    %v3829 = vld [vmem:[%s1437 + $0x28] sm:$0xff]
    %v3830 = vld [vmem:[%s1437 + $0x30] sm:$0xff]
    %v3831 = vld [vmem:[%s1437 + $0x38] sm:$0xff]
    %v3832 = vld [vmem:[%s1437 + $0x40] sm:$0xff]
    %v3833 = vld [vmem:[%s1437 + $0x48] sm:$0xff]
    %3834 = vmatprep.subr.mxu0 0.0
    %3835 = vmatpush1.msra.mxu0 0.0
    %3836 = vmatprep.subr.mxu0 0.0
    %3837 = vmatpush1.msra.mxu0 0.0
    %3838 = vmatprep.subr.mxu0 0.0
    %3839 = vmatpush1.msra.mxu0 0.0
    %3840 = vmatprep.subr.mxu0 0.0
    %3841 = vmatpush1.msra.mxu0 0.0
    %3842 = vmatprep.subr.mxu0 0.0
    %3843 = vmatpush1.msra.mxu0 0.0
    %3844 = vmatprep.subr.mxu0 0.0
    %3845 = vmatpush1.msra.mxu0 0.0
    %3846 = vmatprep.subr.mxu0 0.0
    %3847 = vmatpush1.msra.mxu0 %v3833
    %3848 = vmatprep.subr.mxu0 0.0
    %3849 = vmatpush1.msra.mxu0 %v3832
    %3850 = vmatprep.subr.mxu0 0.0
    %3851 = vmatpush1.msra.mxu0 %v3831
    %3852 = vmatprep.subr.mxu0 0.0
    %3853 = vmatpush1.msra.mxu0 %v3830
    %3854 = vmatprep.subr.mxu0 0.0
    %3855 = vmatpush1.msra.mxu0 %v3829
    %3856 = vmatprep.subr.mxu0 0.0
    %3857 = vmatpush1.msra.mxu0 %v3828
    %3858 = vmatprep.subr.mxu0 0.0
    %3859 = vmatpush1.msra.mxu0 %v3827
    %3860 = vmatprep.subr.mxu0 0.0
    %3861 = vmatpush1.msra.mxu0 %v3826
    %3862 = vmatprep.subr.mxu0 0.0
    %3863 = vmatpush1.msra.mxu0 %v3825
    %3864 = vmatprep.subr.mxu0 0.0
    %3865 = vmatpush1.msra.mxu0 %v3824
    %3866 = vmatprep.subr.mxu0 0.0
    %3867 = vmatpush2.msra.mxu0 0.0
    %3868 = vmatprep.subr.mxu0 0.0
    %3869 = vmatpush2.msra.mxu0 0.0
    %3870 = vmatprep.subr.mxu0 0.0
    %3871 = vmatpush2.msra.mxu0 0.0
    %3872 = vmatprep.subr.mxu0 0.0
    %3873 = vmatpush2.msra.mxu0 0.0
    %3874 = vmatprep.subr.mxu0 0.0
    %3875 = vmatpush2.msra.mxu0 0.0
    %3876 = vmatprep.subr.mxu0 0.0
    %3877 = vmatpush2.msra.mxu0 0.0
    %3878 = vmatprep.subr.mxu0 0.0
    %3879 = vmatpush2.msra.mxu0 0.0
    %3880 = vmatprep.subr.mxu0 0.0
    %3881 = vmatpush2.msra.mxu0 0.0
    %3882 = vmatprep.subr.mxu0 0.0
    %3883 = vmatpush2.msra.mxu0 0.0
    %3884 = vmatprep.subr.mxu0 0.0
    %3885 = vmatpush2.msra.mxu0 0.0
    %3886 = vmatprep.subr.mxu0 0.0
    %3887 = vmatpush2.msra.mxu0 0.0
    %3888 = vmatprep.subr.mxu0 0.0
    %3889 = vmatpush2.msra.mxu0 0.0
    %3890 = vmatprep.subr.mxu0 0.0
    %3891 = vmatpush2.msra.mxu0 0.0
    %3892 = vmatprep.subr.mxu0 0.0
    %3893 = vmatpush2.msra.mxu0 0.0
    %3894 = vmatprep.subr.mxu0 0.0
    %3895 = vmatpush2.msra.mxu0 0.0
    %3896 = vmatprep.subr.mxu0 0.0
    %3897 = vmatpush2.msra.mxu0 0.0
    %3898 = vmatprep.mubr.f32.mxu0 0.0
    %3899 = vmatmul.mubr.f32.gmra.mxu0 %v3583
    %v3900 = vpop.f32.mrf.mxu0
    %v3901 = vadd.f32 0.0, %v3900
    %v3902 = vpop.f32.mrf.mxu0
    %3903 = vdwg.mxu0
    %v3904 = vadd.f32 %v3821, %v3901
    %v3905 = vadd.f32 %v3904, %v3660
    %v3906 = vmax.f32 %v3905, 0.0
    %v3907 = vmax.f32 %v3663, %v3906
    %3908 = vmatprep.subr.mxu0 0.0
    %3909 = vmatpush1.msra.mxu0 0.0
    %3910 = vmatprep.subr.mxu0 0.0
    %3911 = vmatpush1.msra.mxu0 0.0
    %3912 = vmatprep.subr.mxu0 0.0
    %3913 = vmatpush1.msra.mxu0 0.0
    %3914 = vmatprep.subr.mxu0 0.0
    %3915 = vmatpush1.msra.mxu0 0.0
    %3916 = vmatprep.subr.mxu0 0.0
    %3917 = vmatpush1.msra.mxu0 0.0
    %3918 = vmatprep.subr.mxu0 0.0
    %3919 = vmatpush1.msra.mxu0 0.0
    %3920 = vmatprep.subr.mxu0 0.0
    %3921 = vmatpush1.msra.mxu0 %v3425
    %3922 = vmatprep.subr.mxu0 0.0
    %3923 = vmatpush1.msra.mxu0 %v3424
    %3924 = vmatprep.subr.mxu0 0.0
    %3925 = vmatpush1.msra.mxu0 %v3423
    %3926 = vmatprep.subr.mxu0 0.0
    %3927 = vmatpush1.msra.mxu0 %v3422
    %3928 = vmatprep.subr.mxu0 0.0
    %3929 = vmatpush1.msra.mxu0 %v3421
    %3930 = vmatprep.subr.mxu0 0.0
    %3931 = vmatpush1.msra.mxu0 %v3420
    %3932 = vmatprep.subr.mxu0 0.0
    %3933 = vmatpush1.msra.mxu0 %v3419
    %3934 = vmatprep.subr.mxu0 0.0
    %3935 = vmatpush1.msra.mxu0 %v3418
    %3936 = vmatprep.subr.mxu0 0.0
    %3937 = vmatpush1.msra.mxu0 %v3417
    %3938 = vmatprep.subr.mxu0 0.0
    %3939 = vmatpush1.msra.mxu0 %v3416
    %3940 = vmatprep.subr.mxu0 0.0
    %3941 = vmatpush2.msra.mxu0 0.0
    %3942 = vmatprep.subr.mxu0 0.0
    %3943 = vmatpush2.msra.mxu0 0.0
    %3944 = vmatprep.subr.mxu0 0.0
    %3945 = vmatpush2.msra.mxu0 0.0
    %3946 = vmatprep.subr.mxu0 0.0
    %3947 = vmatpush2.msra.mxu0 0.0
    %3948 = vmatprep.subr.mxu0 0.0
    %3949 = vmatpush2.msra.mxu0 0.0
    %3950 = vmatprep.subr.mxu0 0.0
    %3951 = vmatpush2.msra.mxu0 0.0
    %3952 = vmatprep.subr.mxu0 0.0
    %3953 = vmatpush2.msra.mxu0 0.0
    %3954 = vmatprep.subr.mxu0 0.0
    %3955 = vmatpush2.msra.mxu0 0.0
    %3956 = vmatprep.subr.mxu0 0.0
    %3957 = vmatpush2.msra.mxu0 0.0
    %3958 = vmatprep.subr.mxu0 0.0
    %3959 = vmatpush2.msra.mxu0 0.0
    %3960 = vmatprep.subr.mxu0 0.0
    %3961 = vmatpush2.msra.mxu0 0.0
    %3962 = vmatprep.subr.mxu0 0.0
    %3963 = vmatpush2.msra.mxu0 0.0
    %3964 = vmatprep.subr.mxu0 0.0
    %3965 = vmatpush2.msra.mxu0 0.0
    %3966 = vmatprep.subr.mxu0 0.0
    %3967 = vmatpush2.msra.mxu0 0.0
    %3968 = vmatprep.subr.mxu0 0.0
    %3969 = vmatpush2.msra.mxu0 0.0
    %3970 = vmatprep.subr.mxu0 0.0
    %3971 = vmatpush2.msra.mxu0 0.0
    %3972 = vmatprep.mubr.f32.mxu0 0.0
    %3973 = vmatmul.mubr.f32.gmra.mxu0 %v3583
    %v3974 = vpop.f32.mrf.mxu0
    %v3975 = vadd.f32 0.0, %v3974
    %v3976 = vpop.f32.mrf.mxu0
    %3977 = vdwg.mxu0
    %3978 = vmatprep.subr.mxu0 0.0
    %3979 = vmatpush1.msra.mxu0 0.0
    %3980 = vmatprep.subr.mxu0 0.0
    %3981 = vmatpush1.msra.mxu0 0.0
    %3982 = vmatprep.subr.mxu0 0.0
    %3983 = vmatpush1.msra.mxu0 0.0
    %3984 = vmatprep.subr.mxu0 0.0
    %3985 = vmatpush1.msra.mxu0 0.0
    %3986 = vmatprep.subr.mxu0 0.0
    %3987 = vmatpush1.msra.mxu0 0.0
    %3988 = vmatprep.subr.mxu0 0.0
    %3989 = vmatpush1.msra.mxu0 0.0
    %3990 = vmatprep.subr.mxu0 0.0
    %3991 = vmatpush1.msra.mxu0 %v3415
    %3992 = vmatprep.subr.mxu0 0.0
    %3993 = vmatpush1.msra.mxu0 %v3414
    %3994 = vmatprep.subr.mxu0 0.0
    %3995 = vmatpush1.msra.mxu0 %v3413
    %3996 = vmatprep.subr.mxu0 0.0
    %3997 = vmatpush1.msra.mxu0 %v3412
    %3998 = vmatprep.subr.mxu0 0.0
    %3999 = vmatpush1.msra.mxu0 %v3411
    %4000 = vmatprep.subr.mxu0 0.0
    %4001 = vmatpush1.msra.mxu0 %v3410
    %4002 = vmatprep.subr.mxu0 0.0
    %4003 = vmatpush1.msra.mxu0 %v3409
    %4004 = vmatprep.subr.mxu0 0.0
    %4005 = vmatpush1.msra.mxu0 %v3408
    %4006 = vmatprep.subr.mxu0 0.0
    %4007 = vmatpush1.msra.mxu0 %v3407
    %4008 = vmatprep.subr.mxu0 0.0
    %4009 = vmatpush1.msra.mxu0 %v3406
    %4010 = vmatprep.subr.mxu0 0.0
    %4011 = vmatpush2.msra.mxu0 0.0
    %4012 = vmatprep.subr.mxu0 0.0
    %4013 = vmatpush2.msra.mxu0 0.0
    %4014 = vmatprep.subr.mxu0 0.0
    %4015 = vmatpush2.msra.mxu0 0.0
    %4016 = vmatprep.subr.mxu0 0.0
    %4017 = vmatpush2.msra.mxu0 0.0
    %4018 = vmatprep.subr.mxu0 0.0
    %4019 = vmatpush2.msra.mxu0 0.0
    %4020 = vmatprep.subr.mxu0 0.0
    %4021 = vmatpush2.msra.mxu0 0.0
    %4022 = vmatprep.subr.mxu0 0.0
    %4023 = vmatpush2.msra.mxu0 0.0
    %4024 = vmatprep.subr.mxu0 0.0
    %4025 = vmatpush2.msra.mxu0 0.0
    %4026 = vmatprep.subr.mxu0 0.0
    %4027 = vmatpush2.msra.mxu0 0.0
    %4028 = vmatprep.subr.mxu0 0.0
    %4029 = vmatpush2.msra.mxu0 0.0
    %4030 = vmatprep.subr.mxu0 0.0
    %4031 = vmatpush2.msra.mxu0 0.0
    %4032 = vmatprep.subr.mxu0 0.0
    %4033 = vmatpush2.msra.mxu0 0.0
    %4034 = vmatprep.subr.mxu0 0.0
    %4035 = vmatpush2.msra.mxu0 0.0
    %4036 = vmatprep.subr.mxu0 0.0
    %4037 = vmatpush2.msra.mxu0 0.0
    %4038 = vmatprep.subr.mxu0 0.0
    %4039 = vmatpush2.msra.mxu0 0.0
    %4040 = vmatprep.subr.mxu0 0.0
    %4041 = vmatpush2.msra.mxu0 0.0
    %4042 = vmatprep.mubr.f32.mxu0 0.0
    %4043 = vmatmul.mubr.f32.gmra.mxu0 %v3427
    %v4044 = vpop.f32.mrf.mxu0
    %v4045 = vadd.f32 %v3975, %v4044
    %v4046 = vpop.f32.mrf.mxu0
    %4047 = vdwg.mxu0
    %v4049 = vsel %vm55, %v3404, 0
    %4051 = vmatprep.subr.mxu0 0.0
    %4052 = vmatpush1.msra.mxu0 0.0
    %4053 = vmatprep.subr.mxu0 0.0
    %4054 = vmatpush1.msra.mxu0 0.0
    %4055 = vmatprep.subr.mxu0 0.0
    %4056 = vmatpush1.msra.mxu0 0.0
    %4057 = vmatprep.subr.mxu0 0.0
    %4058 = vmatpush1.msra.mxu0 0.0
    %4059 = vmatprep.subr.mxu0 0.0
    %4060 = vmatpush1.msra.mxu0 0.0
    %4061 = vmatprep.subr.mxu0 0.0
    %4062 = vmatpush1.msra.mxu0 0.0
    %4063 = vmatprep.subr.mxu0 0.0
    %4064 = vmatpush1.msra.mxu0 %v3581
    %4065 = vmatprep.subr.mxu0 0.0
    %4066 = vmatpush1.msra.mxu0 %v3580
    %4067 = vmatprep.subr.mxu0 0.0
    %4068 = vmatpush1.msra.mxu0 %v3579
    %4069 = vmatprep.subr.mxu0 0.0
    %4070 = vmatpush1.msra.mxu0 %v3578
    %4071 = vmatprep.subr.mxu0 0.0
    %4072 = vmatpush1.msra.mxu0 %v3577
    %4073 = vmatprep.subr.mxu0 0.0
    %4074 = vmatpush1.msra.mxu0 %v3576
    %4075 = vmatprep.subr.mxu0 0.0
    %4076 = vmatpush1.msra.mxu0 %v3575
    %4077 = vmatprep.subr.mxu0 0.0
    %4078 = vmatpush1.msra.mxu0 %v3574
    %4079 = vmatprep.subr.mxu0 0.0
    %4080 = vmatpush1.msra.mxu0 %v3573
    %4081 = vmatprep.subr.mxu0 0.0
    %4082 = vmatpush1.msra.mxu0 %v3572
    %4083 = vmatprep.subr.mxu0 0.0
    %4084 = vmatpush2.msra.mxu0 0.0
    %4085 = vmatprep.subr.mxu0 0.0
    %4086 = vmatpush2.msra.mxu0 0.0
    %4087 = vmatprep.subr.mxu0 0.0
    %4088 = vmatpush2.msra.mxu0 0.0
    %4089 = vmatprep.subr.mxu0 0.0
    %4090 = vmatpush2.msra.mxu0 0.0
    %4091 = vmatprep.subr.mxu0 0.0
    %4092 = vmatpush2.msra.mxu0 0.0
    %4093 = vmatprep.subr.mxu0 0.0
    %4094 = vmatpush2.msra.mxu0 0.0
    %4095 = vmatprep.subr.mxu0 0.0
    %4096 = vmatpush2.msra.mxu0 0.0
    %4097 = vmatprep.subr.mxu0 0.0
    %4098 = vmatpush2.msra.mxu0 0.0
    %4099 = vmatprep.subr.mxu0 0.0
    %4100 = vmatpush2.msra.mxu0 0.0
    %4101 = vmatprep.subr.mxu0 0.0
    %4102 = vmatpush2.msra.mxu0 0.0
    %4103 = vmatprep.subr.mxu0 0.0
    %4104 = vmatpush2.msra.mxu0 0.0
    %4105 = vmatprep.subr.mxu0 0.0
    %4106 = vmatpush2.msra.mxu0 0.0
    %4107 = vmatprep.subr.mxu0 0.0
    %4108 = vmatpush2.msra.mxu0 0.0
    %4109 = vmatprep.subr.mxu0 0.0
    %4110 = vmatpush2.msra.mxu0 0.0
    %4111 = vmatprep.subr.mxu0 0.0
    %4112 = vmatpush2.msra.mxu0 0.0
    %4113 = vmatprep.subr.mxu0 0.0
    %4114 = vmatpush2.msra.mxu0 0.0
    %4115 = vmatprep.mubr.f32.mxu0 0.0
    %4116 = vmatmul.mubr.f32.gmra.mxu0 %v4049
    %v4117 = vpop.f32.mrf.mxu0
    %v4118 = vadd.f32 0.0, %v4117
    %v4119 = vpop.f32.mrf.mxu0
    %4120 = vdwg.mxu0
    %v4121 = vadd.f32 %v4045, %v4118
    %v4122 = vadd.f32 %v4121, %v3660
    %v4123 = vmax.f32 %v4122, 0.0
    %v4124 = vmax.f32 %v3907, %v4123
    %4125 = vmatprep.subr.mxu0 0.0
    %4126 = vmatpush1.msra.mxu0 0.0
    %4127 = vmatprep.subr.mxu0 0.0
    %4128 = vmatpush1.msra.mxu0 0.0
    %4129 = vmatprep.subr.mxu0 0.0
    %4130 = vmatpush1.msra.mxu0 0.0
    %4131 = vmatprep.subr.mxu0 0.0
    %4132 = vmatpush1.msra.mxu0 0.0
    %4133 = vmatprep.subr.mxu0 0.0
    %4134 = vmatpush1.msra.mxu0 0.0
    %4135 = vmatprep.subr.mxu0 0.0
    %4136 = vmatpush1.msra.mxu0 0.0
    %4137 = vmatprep.subr.mxu0 0.0
    %4138 = vmatpush1.msra.mxu0 %v3683
    %4139 = vmatprep.subr.mxu0 0.0
    %4140 = vmatpush1.msra.mxu0 %v3682
    %4141 = vmatprep.subr.mxu0 0.0
    %4142 = vmatpush1.msra.mxu0 %v3681
    %4143 = vmatprep.subr.mxu0 0.0
    %4144 = vmatpush1.msra.mxu0 %v3680
    %4145 = vmatprep.subr.mxu0 0.0
    %4146 = vmatpush1.msra.mxu0 %v3679
    %4147 = vmatprep.subr.mxu0 0.0
    %4148 = vmatpush1.msra.mxu0 %v3678
    %4149 = vmatprep.subr.mxu0 0.0
    %4150 = vmatpush1.msra.mxu0 %v3677
    %4151 = vmatprep.subr.mxu0 0.0
    %4152 = vmatpush1.msra.mxu0 %v3676
    %4153 = vmatprep.subr.mxu0 0.0
    %4154 = vmatpush1.msra.mxu0 %v3675
    %4155 = vmatprep.subr.mxu0 0.0
    %4156 = vmatpush1.msra.mxu0 %v3674
    %4157 = vmatprep.subr.mxu0 0.0
    %4158 = vmatpush2.msra.mxu0 0.0
    %4159 = vmatprep.subr.mxu0 0.0
    %4160 = vmatpush2.msra.mxu0 0.0
    %4161 = vmatprep.subr.mxu0 0.0
    %4162 = vmatpush2.msra.mxu0 0.0
    %4163 = vmatprep.subr.mxu0 0.0
    %4164 = vmatpush2.msra.mxu0 0.0
    %4165 = vmatprep.subr.mxu0 0.0
    %4166 = vmatpush2.msra.mxu0 0.0
    %4167 = vmatprep.subr.mxu0 0.0
    %4168 = vmatpush2.msra.mxu0 0.0
    %4169 = vmatprep.subr.mxu0 0.0
    %4170 = vmatpush2.msra.mxu0 0.0
    %4171 = vmatprep.subr.mxu0 0.0
    %4172 = vmatpush2.msra.mxu0 0.0
    %4173 = vmatprep.subr.mxu0 0.0
    %4174 = vmatpush2.msra.mxu0 0.0
    %4175 = vmatprep.subr.mxu0 0.0
    %4176 = vmatpush2.msra.mxu0 0.0
    %4177 = vmatprep.subr.mxu0 0.0
    %4178 = vmatpush2.msra.mxu0 0.0
    %4179 = vmatprep.subr.mxu0 0.0
    %4180 = vmatpush2.msra.mxu0 0.0
    %4181 = vmatprep.subr.mxu0 0.0
    %4182 = vmatpush2.msra.mxu0 0.0
    %4183 = vmatprep.subr.mxu0 0.0
    %4184 = vmatpush2.msra.mxu0 0.0
    %4185 = vmatprep.subr.mxu0 0.0
    %4186 = vmatpush2.msra.mxu0 0.0
    %4187 = vmatprep.subr.mxu0 0.0
    %4188 = vmatpush2.msra.mxu0 0.0
    %4189 = vmatprep.mubr.f32.mxu0 0.0
    %4190 = vmatmul.mubr.f32.gmra.mxu0 %v3583
    %v4191 = vpop.f32.mrf.mxu0
    %v4192 = vadd.f32 0.0, %v4191
    %v4193 = vpop.f32.mrf.mxu0
    %4194 = vdwg.mxu0
    %4195 = vmatprep.subr.mxu0 0.0
    %4196 = vmatpush1.msra.mxu0 0.0
    %4197 = vmatprep.subr.mxu0 0.0
    %4198 = vmatpush1.msra.mxu0 0.0
    %4199 = vmatprep.subr.mxu0 0.0
    %4200 = vmatpush1.msra.mxu0 0.0
    %4201 = vmatprep.subr.mxu0 0.0
    %4202 = vmatpush1.msra.mxu0 0.0
    %4203 = vmatprep.subr.mxu0 0.0
    %4204 = vmatpush1.msra.mxu0 0.0
    %4205 = vmatprep.subr.mxu0 0.0
    %4206 = vmatpush1.msra.mxu0 0.0
    %4207 = vmatprep.subr.mxu0 0.0
    %4208 = vmatpush1.msra.mxu0 %v3673
    %4209 = vmatprep.subr.mxu0 0.0
    %4210 = vmatpush1.msra.mxu0 %v3672
    %4211 = vmatprep.subr.mxu0 0.0
    %4212 = vmatpush1.msra.mxu0 %v3671
    %4213 = vmatprep.subr.mxu0 0.0
    %4214 = vmatpush1.msra.mxu0 %v3670
    %4215 = vmatprep.subr.mxu0 0.0
    %4216 = vmatpush1.msra.mxu0 %v3669
    %4217 = vmatprep.subr.mxu0 0.0
    %4218 = vmatpush1.msra.mxu0 %v3668
    %4219 = vmatprep.subr.mxu0 0.0
    %4220 = vmatpush1.msra.mxu0 %v3667
    %4221 = vmatprep.subr.mxu0 0.0
    %4222 = vmatpush1.msra.mxu0 %v3666
    %4223 = vmatprep.subr.mxu0 0.0
    %4224 = vmatpush1.msra.mxu0 %v3665
    %4225 = vmatprep.subr.mxu0 0.0
    %4226 = vmatpush1.msra.mxu0 %v3664
    %4227 = vmatprep.subr.mxu0 0.0
    %4228 = vmatpush2.msra.mxu0 0.0
    %4229 = vmatprep.subr.mxu0 0.0
    %4230 = vmatpush2.msra.mxu0 0.0
    %4231 = vmatprep.subr.mxu0 0.0
    %4232 = vmatpush2.msra.mxu0 0.0
    %4233 = vmatprep.subr.mxu0 0.0
    %4234 = vmatpush2.msra.mxu0 0.0
    %4235 = vmatprep.subr.mxu0 0.0
    %4236 = vmatpush2.msra.mxu0 0.0
    %4237 = vmatprep.subr.mxu0 0.0
    %4238 = vmatpush2.msra.mxu0 0.0
    %4239 = vmatprep.subr.mxu0 0.0
    %4240 = vmatpush2.msra.mxu0 0.0
    %4241 = vmatprep.subr.mxu0 0.0
    %4242 = vmatpush2.msra.mxu0 0.0
    %4243 = vmatprep.subr.mxu0 0.0
    %4244 = vmatpush2.msra.mxu0 0.0
    %4245 = vmatprep.subr.mxu0 0.0
    %4246 = vmatpush2.msra.mxu0 0.0
    %4247 = vmatprep.subr.mxu0 0.0
    %4248 = vmatpush2.msra.mxu0 0.0
    %4249 = vmatprep.subr.mxu0 0.0
    %4250 = vmatpush2.msra.mxu0 0.0
    %4251 = vmatprep.subr.mxu0 0.0
    %4252 = vmatpush2.msra.mxu0 0.0
    %4253 = vmatprep.subr.mxu0 0.0
    %4254 = vmatpush2.msra.mxu0 0.0
    %4255 = vmatprep.subr.mxu0 0.0
    %4256 = vmatpush2.msra.mxu0 0.0
    %4257 = vmatprep.subr.mxu0 0.0
    %4258 = vmatpush2.msra.mxu0 0.0
    %4259 = vmatprep.mubr.f32.mxu0 0.0
    %4260 = vmatmul.mubr.f32.gmra.mxu0 %v3427
    %v4261 = vpop.f32.mrf.mxu0
    %v4262 = vadd.f32 %v4192, %v4261
    %v4263 = vpop.f32.mrf.mxu0
    %4264 = vdwg.mxu0
    %4265 = vmatprep.subr.mxu0 0.0
    %4266 = vmatpush1.msra.mxu0 0.0
    %4267 = vmatprep.subr.mxu0 0.0
    %4268 = vmatpush1.msra.mxu0 0.0
    %4269 = vmatprep.subr.mxu0 0.0
    %4270 = vmatpush1.msra.mxu0 0.0
    %4271 = vmatprep.subr.mxu0 0.0
    %4272 = vmatpush1.msra.mxu0 0.0
    %4273 = vmatprep.subr.mxu0 0.0
    %4274 = vmatpush1.msra.mxu0 0.0
    %4275 = vmatprep.subr.mxu0 0.0
    %4276 = vmatpush1.msra.mxu0 0.0
    %4277 = vmatprep.subr.mxu0 0.0
    %4278 = vmatpush1.msra.mxu0 %v3833
    %4279 = vmatprep.subr.mxu0 0.0
    %4280 = vmatpush1.msra.mxu0 %v3832
    %4281 = vmatprep.subr.mxu0 0.0
    %4282 = vmatpush1.msra.mxu0 %v3831
    %4283 = vmatprep.subr.mxu0 0.0
    %4284 = vmatpush1.msra.mxu0 %v3830
    %4285 = vmatprep.subr.mxu0 0.0
    %4286 = vmatpush1.msra.mxu0 %v3829
    %4287 = vmatprep.subr.mxu0 0.0
    %4288 = vmatpush1.msra.mxu0 %v3828
    %4289 = vmatprep.subr.mxu0 0.0
    %4290 = vmatpush1.msra.mxu0 %v3827
    %4291 = vmatprep.subr.mxu0 0.0
    %4292 = vmatpush1.msra.mxu0 %v3826
    %4293 = vmatprep.subr.mxu0 0.0
    %4294 = vmatpush1.msra.mxu0 %v3825
    %4295 = vmatprep.subr.mxu0 0.0
    %4296 = vmatpush1.msra.mxu0 %v3824
    %4297 = vmatprep.subr.mxu0 0.0
    %4298 = vmatpush2.msra.mxu0 0.0
    %4299 = vmatprep.subr.mxu0 0.0
    %4300 = vmatpush2.msra.mxu0 0.0
    %4301 = vmatprep.subr.mxu0 0.0
    %4302 = vmatpush2.msra.mxu0 0.0
    %4303 = vmatprep.subr.mxu0 0.0
    %4304 = vmatpush2.msra.mxu0 0.0
    %4305 = vmatprep.subr.mxu0 0.0
    %4306 = vmatpush2.msra.mxu0 0.0
    %4307 = vmatprep.subr.mxu0 0.0
    %4308 = vmatpush2.msra.mxu0 0.0
    %4309 = vmatprep.subr.mxu0 0.0
    %4310 = vmatpush2.msra.mxu0 0.0
    %4311 = vmatprep.subr.mxu0 0.0
    %4312 = vmatpush2.msra.mxu0 0.0
    %4313 = vmatprep.subr.mxu0 0.0
    %4314 = vmatpush2.msra.mxu0 0.0
    %4315 = vmatprep.subr.mxu0 0.0
    %4316 = vmatpush2.msra.mxu0 0.0
    %4317 = vmatprep.subr.mxu0 0.0
    %4318 = vmatpush2.msra.mxu0 0.0
    %4319 = vmatprep.subr.mxu0 0.0
    %4320 = vmatpush2.msra.mxu0 0.0
    %4321 = vmatprep.subr.mxu0 0.0
    %4322 = vmatpush2.msra.mxu0 0.0
    %4323 = vmatprep.subr.mxu0 0.0
    %4324 = vmatpush2.msra.mxu0 0.0
    %4325 = vmatprep.subr.mxu0 0.0
    %4326 = vmatpush2.msra.mxu0 0.0
    %4327 = vmatprep.subr.mxu0 0.0
    %4328 = vmatpush2.msra.mxu0 0.0
    %4329 = vmatprep.mubr.f32.mxu0 0.0
    %4330 = vmatmul.mubr.f32.gmra.mxu0 %v4049
    %v4331 = vpop.f32.mrf.mxu0
    %v4332 = vadd.f32 0.0, %v4331
    %v4333 = vpop.f32.mrf.mxu0
    %4334 = vdwg.mxu0
    %v4335 = vadd.f32 %v4262, %v4332
    %v4336 = vadd.f32 %v4335, %v3660
    %v4337 = vmax.f32 %v4336, 0.0
    %v4338 = vmax.f32 %v4124, %v4337
    %v4339 = vld [vmem:[%s6] sm:$0x1]
    %v4340 = vld [vmem:[%s5] sm:$0xff]
    %v4341 = vld [vmem:[%s5 + $0x8] sm:$0xff]
    %v4342 = vld [vmem:[%s5 + $0x10] sm:$0xff]
    %v4343 = vld [vmem:[%s5 + $0x18] sm:$0xff]
    %v4344 = vld [vmem:[%s5 + $0x20] sm:$0xff]
    %v4345 = vld [vmem:[%s5 + $0x28] sm:$0xff]
    %v4346 = vld [vmem:[%s5 + $0x30] sm:$0xff]
    %v4347 = vld [vmem:[%s5 + $0x38] sm:$0xff]
    %v4349 = vsel %vm1962, %v4338, 0
    %4351 = vmatprep.subr.mxu0 0.0
    %4352 = vmatpush1.msra.mxu0 0.0
    %4353 = vmatprep.subr.mxu0 0.0
    %4354 = vmatpush1.msra.mxu0 0.0
    %4355 = vmatprep.subr.mxu0 0.0
    %4356 = vmatpush1.msra.mxu0 0.0
    %4357 = vmatprep.subr.mxu0 0.0
    %4358 = vmatpush1.msra.mxu0 0.0
    %4359 = vmatprep.subr.mxu0 0.0
    %4360 = vmatpush1.msra.mxu0 0.0
    %4361 = vmatprep.subr.mxu0 0.0
    %4362 = vmatpush1.msra.mxu0 0.0
    %4363 = vmatprep.subr.mxu0 0.0
    %4364 = vmatpush1.msra.mxu0 0.0
    %4365 = vmatprep.subr.mxu0 0.0
    %4366 = vmatpush1.msra.mxu0 0.0
    %4367 = vmatprep.subr.mxu0 0.0
    %4368 = vmatpush1.msra.mxu0 %v4347
    %4369 = vmatprep.subr.mxu0 0.0
    %4370 = vmatpush1.msra.mxu0 %v4346
    %4371 = vmatprep.subr.mxu0 0.0
    %4372 = vmatpush1.msra.mxu0 %v4345
    %4373 = vmatprep.subr.mxu0 0.0
    %4374 = vmatpush1.msra.mxu0 %v4344
    %4375 = vmatprep.subr.mxu0 0.0
    %4376 = vmatpush1.msra.mxu0 %v4343
    %4377 = vmatprep.subr.mxu0 0.0
    %4378 = vmatpush1.msra.mxu0 %v4342
    %4379 = vmatprep.subr.mxu0 0.0
    %4380 = vmatpush1.msra.mxu0 %v4341
    %4381 = vmatprep.subr.mxu0 0.0
    %4382 = vmatpush1.msra.mxu0 %v4340
    %4383 = vmatprep.subr.mxu0 0.0
    %4384 = vmatpush2.msra.mxu0 0.0
    %4385 = vmatprep.subr.mxu0 0.0
    %4386 = vmatpush2.msra.mxu0 0.0
    %4387 = vmatprep.subr.mxu0 0.0
    %4388 = vmatpush2.msra.mxu0 0.0
    %4389 = vmatprep.subr.mxu0 0.0
    %4390 = vmatpush2.msra.mxu0 0.0
    %4391 = vmatprep.subr.mxu0 0.0
    %4392 = vmatpush2.msra.mxu0 0.0
    %4393 = vmatprep.subr.mxu0 0.0
    %4394 = vmatpush2.msra.mxu0 0.0
    %4395 = vmatprep.subr.mxu0 0.0
    %4396 = vmatpush2.msra.mxu0 0.0
    %4397 = vmatprep.subr.mxu0 0.0
    %4398 = vmatpush2.msra.mxu0 0.0
    %4399 = vmatprep.subr.mxu0 0.0
    %4400 = vmatpush2.msra.mxu0 0.0
    %4401 = vmatprep.subr.mxu0 0.0
    %4402 = vmatpush2.msra.mxu0 0.0
    %4403 = vmatprep.subr.mxu0 0.0
    %4404 = vmatpush2.msra.mxu0 0.0
    %4405 = vmatprep.subr.mxu0 0.0
    %4406 = vmatpush2.msra.mxu0 0.0
    %4407 = vmatprep.subr.mxu0 0.0
    %4408 = vmatpush2.msra.mxu0 0.0
    %4409 = vmatprep.subr.mxu0 0.0
    %4410 = vmatpush2.msra.mxu0 0.0
    %4411 = vmatprep.subr.mxu0 0.0
    %4412 = vmatpush2.msra.mxu0 0.0
    %4413 = vmatprep.subr.mxu0 0.0
    %4414 = vmatpush2.msra.mxu0 0.0
    %4415 = vmatprep.mubr.f32.mxu0 0.0
    %4416 = vmatmul.mubr.f32.gmra.mxu0 %v4349
    %v4417 = vpop.f32.mrf.mxu0
    %v4418 = vadd.f32 0.0, %v4417
    %v4419 = vpop.f32.mrf.mxu0
    %4420 = vdwg.mxu0
    %v4421 = vadd.f32 %v4339, %v4418
    %v4422 = vld [vmem:[%s5 + $0x40] sm:$0xff]
    %v4423 = vld [vmem:[%s5 + $0x48] sm:$0xff]
    %v4424 = vld [vmem:[%s5 + $0x50] sm:$0xff]
    %v4425 = vld [vmem:[%s5 + $0x58] sm:$0xff]
    %v4426 = vld [vmem:[%s5 + $0x60] sm:$0xff]
    %v4427 = vld [vmem:[%s5 + $0x68] sm:$0xff]
    %v4428 = vld [vmem:[%s5 + $0x70] sm:$0xff]
    %v4429 = vld [vmem:[%s5 + $0x78] sm:$0xff]
    %v4430 = vrot.slane %v4338, 1
    %v4431 = vsel %vm1962, %v4430, 0
    %4433 = vmatprep.subr.mxu0 0.0
    %4434 = vmatpush1.msra.mxu0 0.0
    %4435 = vmatprep.subr.mxu0 0.0
    %4436 = vmatpush1.msra.mxu0 0.0
    %4437 = vmatprep.subr.mxu0 0.0
    %4438 = vmatpush1.msra.mxu0 0.0
    %4439 = vmatprep.subr.mxu0 0.0
    %4440 = vmatpush1.msra.mxu0 0.0
    %4441 = vmatprep.subr.mxu0 0.0
    %4442 = vmatpush1.msra.mxu0 0.0
    %4443 = vmatprep.subr.mxu0 0.0
    %4444 = vmatpush1.msra.mxu0 0.0
    %4445 = vmatprep.subr.mxu0 0.0
    %4446 = vmatpush1.msra.mxu0 0.0
    %4447 = vmatprep.subr.mxu0 0.0
    %4448 = vmatpush1.msra.mxu0 0.0
    %4449 = vmatprep.subr.mxu0 0.0
    %4450 = vmatpush1.msra.mxu0 %v4429
    %4451 = vmatprep.subr.mxu0 0.0
    %4452 = vmatpush1.msra.mxu0 %v4428
    %4453 = vmatprep.subr.mxu0 0.0
    %4454 = vmatpush1.msra.mxu0 %v4427
    %4455 = vmatprep.subr.mxu0 0.0
    %4456 = vmatpush1.msra.mxu0 %v4426
    %4457 = vmatprep.subr.mxu0 0.0
    %4458 = vmatpush1.msra.mxu0 %v4425
    %4459 = vmatprep.subr.mxu0 0.0
    %4460 = vmatpush1.msra.mxu0 %v4424
    %4461 = vmatprep.subr.mxu0 0.0
    %4462 = vmatpush1.msra.mxu0 %v4423
    %4463 = vmatprep.subr.mxu0 0.0
    %4464 = vmatpush1.msra.mxu0 %v4422
    %4465 = vmatprep.subr.mxu0 0.0
    %4466 = vmatpush2.msra.mxu0 0.0
    %4467 = vmatprep.subr.mxu0 0.0
    %4468 = vmatpush2.msra.mxu0 0.0
    %4469 = vmatprep.subr.mxu0 0.0
    %4470 = vmatpush2.msra.mxu0 0.0
    %4471 = vmatprep.subr.mxu0 0.0
    %4472 = vmatpush2.msra.mxu0 0.0
    %4473 = vmatprep.subr.mxu0 0.0
    %4474 = vmatpush2.msra.mxu0 0.0
    %4475 = vmatprep.subr.mxu0 0.0
    %4476 = vmatpush2.msra.mxu0 0.0
    %4477 = vmatprep.subr.mxu0 0.0
    %4478 = vmatpush2.msra.mxu0 0.0
    %4479 = vmatprep.subr.mxu0 0.0
    %4480 = vmatpush2.msra.mxu0 0.0
    %4481 = vmatprep.subr.mxu0 0.0
    %4482 = vmatpush2.msra.mxu0 0.0
    %4483 = vmatprep.subr.mxu0 0.0
    %4484 = vmatpush2.msra.mxu0 0.0
    %4485 = vmatprep.subr.mxu0 0.0
    %4486 = vmatpush2.msra.mxu0 0.0
    %4487 = vmatprep.subr.mxu0 0.0
    %4488 = vmatpush2.msra.mxu0 0.0
    %4489 = vmatprep.subr.mxu0 0.0
    %4490 = vmatpush2.msra.mxu0 0.0
    %4491 = vmatprep.subr.mxu0 0.0
    %4492 = vmatpush2.msra.mxu0 0.0
    %4493 = vmatprep.subr.mxu0 0.0
    %4494 = vmatpush2.msra.mxu0 0.0
    %4495 = vmatprep.subr.mxu0 0.0
    %4496 = vmatpush2.msra.mxu0 0.0
    %4497 = vmatprep.mubr.f32.mxu0 0.0
    %4498 = vmatmul.mubr.f32.gmra.mxu0 %v4431
    %v4499 = vpop.f32.mrf.mxu0
    %v4500 = vadd.f32 0.0, %v4499
    %v4501 = vpop.f32.mrf.mxu0
    %4502 = vdwg.mxu0
    %v4503 = vadd.f32 %v4421, %v4500
    %v4504 = vld [vmem:[%s5 + $0x80] sm:$0xff]
    %v4505 = vld [vmem:[%s5 + $0x88] sm:$0xff]
    %v4506 = vld [vmem:[%s5 + $0x90] sm:$0xff]
    %v4507 = vld [vmem:[%s5 + $0x98] sm:$0xff]
    %v4508 = vld [vmem:[%s5 + $0xa0] sm:$0xff]
    %v4509 = vld [vmem:[%s5 + $0xa8] sm:$0xff]
    %v4510 = vld [vmem:[%s5 + $0xb0] sm:$0xff]
    %v4511 = vld [vmem:[%s5 + $0xb8] sm:$0xff]
    %v4512 = vrot.slane %v4338, 2
    %v4513 = vsel %vm1962, %v4512, 0
    %4515 = vmatprep.subr.mxu0 0.0
    %4516 = vmatpush1.msra.mxu0 0.0
    %4517 = vmatprep.subr.mxu0 0.0
    %4518 = vmatpush1.msra.mxu0 0.0
    %4519 = vmatprep.subr.mxu0 0.0
    %4520 = vmatpush1.msra.mxu0 0.0
    %4521 = vmatprep.subr.mxu0 0.0
    %4522 = vmatpush1.msra.mxu0 0.0
    %4523 = vmatprep.subr.mxu0 0.0
    %4524 = vmatpush1.msra.mxu0 0.0
    %4525 = vmatprep.subr.mxu0 0.0
    %4526 = vmatpush1.msra.mxu0 0.0
    %4527 = vmatprep.subr.mxu0 0.0
    %4528 = vmatpush1.msra.mxu0 0.0
    %4529 = vmatprep.subr.mxu0 0.0
    %4530 = vmatpush1.msra.mxu0 0.0
    %4531 = vmatprep.subr.mxu0 0.0
    %4532 = vmatpush1.msra.mxu0 %v4511
    %4533 = vmatprep.subr.mxu0 0.0
    %4534 = vmatpush1.msra.mxu0 %v4510
    %4535 = vmatprep.subr.mxu0 0.0
    %4536 = vmatpush1.msra.mxu0 %v4509
    %4537 = vmatprep.subr.mxu0 0.0
    %4538 = vmatpush1.msra.mxu0 %v4508
    %4539 = vmatprep.subr.mxu0 0.0
    %4540 = vmatpush1.msra.mxu0 %v4507
    %4541 = vmatprep.subr.mxu0 0.0
    %4542 = vmatpush1.msra.mxu0 %v4506
    %4543 = vmatprep.subr.mxu0 0.0
    %4544 = vmatpush1.msra.mxu0 %v4505
    %4545 = vmatprep.subr.mxu0 0.0
    %4546 = vmatpush1.msra.mxu0 %v4504
    %4547 = vmatprep.subr.mxu0 0.0
    %4548 = vmatpush2.msra.mxu0 0.0
    %4549 = vmatprep.subr.mxu0 0.0
    %4550 = vmatpush2.msra.mxu0 0.0
    %4551 = vmatprep.subr.mxu0 0.0
    %4552 = vmatpush2.msra.mxu0 0.0
    %4553 = vmatprep.subr.mxu0 0.0
    %4554 = vmatpush2.msra.mxu0 0.0
    %4555 = vmatprep.subr.mxu0 0.0
    %4556 = vmatpush2.msra.mxu0 0.0
    %4557 = vmatprep.subr.mxu0 0.0
    %4558 = vmatpush2.msra.mxu0 0.0
    %4559 = vmatprep.subr.mxu0 0.0
    %4560 = vmatpush2.msra.mxu0 0.0
    %4561 = vmatprep.subr.mxu0 0.0
    %4562 = vmatpush2.msra.mxu0 0.0
    %4563 = vmatprep.subr.mxu0 0.0
    %4564 = vmatpush2.msra.mxu0 0.0
    %4565 = vmatprep.subr.mxu0 0.0
    %4566 = vmatpush2.msra.mxu0 0.0
    %4567 = vmatprep.subr.mxu0 0.0
    %4568 = vmatpush2.msra.mxu0 0.0
    %4569 = vmatprep.subr.mxu0 0.0
    %4570 = vmatpush2.msra.mxu0 0.0
    %4571 = vmatprep.subr.mxu0 0.0
    %4572 = vmatpush2.msra.mxu0 0.0
    %4573 = vmatprep.subr.mxu0 0.0
    %4574 = vmatpush2.msra.mxu0 0.0
    %4575 = vmatprep.subr.mxu0 0.0
    %4576 = vmatpush2.msra.mxu0 0.0
    %4577 = vmatprep.subr.mxu0 0.0
    %4578 = vmatpush2.msra.mxu0 0.0
    %4579 = vmatprep.mubr.f32.mxu0 0.0
    %4580 = vmatmul.mubr.f32.gmra.mxu0 %v4513
    %v4581 = vpop.f32.mrf.mxu0
    %v4582 = vadd.f32 0.0, %v4581
    %v4583 = vpop.f32.mrf.mxu0
    %4584 = vdwg.mxu0
    %v4585 = vadd.f32 %v4503, %v4582
    %v4586 = vld [vmem:[%s5 + $0xc0] sm:$0xff]
    %v4587 = vld [vmem:[%s5 + $0xc8] sm:$0xff]
    %v4588 = vld [vmem:[%s5 + $0xd0] sm:$0xff]
    %v4589 = vld [vmem:[%s5 + $0xd8] sm:$0xff]
    %v4590 = vld [vmem:[%s5 + $0xe0] sm:$0xff]
    %v4591 = vld [vmem:[%s5 + $0xe8] sm:$0xff]
    %v4592 = vld [vmem:[%s5 + $0xf0] sm:$0xff]
    %v4593 = vld [vmem:[%s5 + $0xf8] sm:$0xff]
    %v4594 = vrot.slane %v4338, 3
    %v4595 = vsel %vm1962, %v4594, 0
    %4597 = vmatprep.subr.mxu0 0.0
    %4598 = vmatpush1.msra.mxu0 0.0
    %4599 = vmatprep.subr.mxu0 0.0
    %4600 = vmatpush1.msra.mxu0 0.0
    %4601 = vmatprep.subr.mxu0 0.0
    %4602 = vmatpush1.msra.mxu0 0.0
    %4603 = vmatprep.subr.mxu0 0.0
    %4604 = vmatpush1.msra.mxu0 0.0
    %4605 = vmatprep.subr.mxu0 0.0
    %4606 = vmatpush1.msra.mxu0 0.0
    %4607 = vmatprep.subr.mxu0 0.0
    %4608 = vmatpush1.msra.mxu0 0.0
    %4609 = vmatprep.subr.mxu0 0.0
    %4610 = vmatpush1.msra.mxu0 0.0
    %4611 = vmatprep.subr.mxu0 0.0
    %4612 = vmatpush1.msra.mxu0 0.0
    %4613 = vmatprep.subr.mxu0 0.0
    %4614 = vmatpush1.msra.mxu0 %v4593
    %4615 = vmatprep.subr.mxu0 0.0
    %4616 = vmatpush1.msra.mxu0 %v4592
    %4617 = vmatprep.subr.mxu0 0.0
    %4618 = vmatpush1.msra.mxu0 %v4591
    %4619 = vmatprep.subr.mxu0 0.0
    %4620 = vmatpush1.msra.mxu0 %v4590
    %4621 = vmatprep.subr.mxu0 0.0
    %4622 = vmatpush1.msra.mxu0 %v4589
    %4623 = vmatprep.subr.mxu0 0.0
    %4624 = vmatpush1.msra.mxu0 %v4588
    %4625 = vmatprep.subr.mxu0 0.0
    %4626 = vmatpush1.msra.mxu0 %v4587
    %4627 = vmatprep.subr.mxu0 0.0
    %4628 = vmatpush1.msra.mxu0 %v4586
    %4629 = vmatprep.subr.mxu0 0.0
    %4630 = vmatpush2.msra.mxu0 0.0
    %4631 = vmatprep.subr.mxu0 0.0
    %4632 = vmatpush2.msra.mxu0 0.0
    %4633 = vmatprep.subr.mxu0 0.0
    %4634 = vmatpush2.msra.mxu0 0.0
    %4635 = vmatprep.subr.mxu0 0.0
    %4636 = vmatpush2.msra.mxu0 0.0
    %4637 = vmatprep.subr.mxu0 0.0
    %4638 = vmatpush2.msra.mxu0 0.0
    %4639 = vmatprep.subr.mxu0 0.0
    %4640 = vmatpush2.msra.mxu0 0.0
    %4641 = vmatprep.subr.mxu0 0.0
    %4642 = vmatpush2.msra.mxu0 0.0
    %4643 = vmatprep.subr.mxu0 0.0
    %4644 = vmatpush2.msra.mxu0 0.0
    %4645 = vmatprep.subr.mxu0 0.0
    %4646 = vmatpush2.msra.mxu0 0.0
    %4647 = vmatprep.subr.mxu0 0.0
    %4648 = vmatpush2.msra.mxu0 0.0
    %4649 = vmatprep.subr.mxu0 0.0
    %4650 = vmatpush2.msra.mxu0 0.0
    %4651 = vmatprep.subr.mxu0 0.0
    %4652 = vmatpush2.msra.mxu0 0.0
    %4653 = vmatprep.subr.mxu0 0.0
    %4654 = vmatpush2.msra.mxu0 0.0
    %4655 = vmatprep.subr.mxu0 0.0
    %4656 = vmatpush2.msra.mxu0 0.0
    %4657 = vmatprep.subr.mxu0 0.0
    %4658 = vmatpush2.msra.mxu0 0.0
    %4659 = vmatprep.subr.mxu0 0.0
    %4660 = vmatpush2.msra.mxu0 0.0
    %4661 = vmatprep.mubr.f32.mxu0 0.0
    %4662 = vmatmul.mubr.f32.gmra.mxu0 %v4595
    %v4663 = vpop.f32.mrf.mxu0
    %v4664 = vadd.f32 0.0, %v4663
    %v4665 = vpop.f32.mrf.mxu0
    %4666 = vdwg.mxu0
    %v4667 = vadd.f32 %v4585, %v4664
    %v4668 = vmax.f32 %v4667, 0.0
    %v4669 = vld [vmem:[%s7] sm:$0xff]
    %v4670 = vld [vmem:[%s7 + $0x8] sm:$0xff]
    %v4671 = vld [vmem:[%s7 + $0x10] sm:$0xff]
    %v4672 = vld [vmem:[%s7 + $0x18] sm:$0xff]
    %v4673 = vld [vmem:[%s7 + $0x20] sm:$0xff]
    %v4674 = vld [vmem:[%s7 + $0x28] sm:$0xff]
    %v4675 = vld [vmem:[%s7 + $0x30] sm:$0xff]
    %v4676 = vld [vmem:[%s7 + $0x38] sm:$0xff]
    %v4677 = vld [vmem:[%s8] sm:$0x1]
    %v4679 = vsel %vm1962, %v4668, 0
    %4681 = vmatprep.subr.mxu0 0.0
    %4682 = vmatpush1.msra.mxu0 0.0
    %4683 = vmatprep.subr.mxu0 0.0
    %4684 = vmatpush1.msra.mxu0 0.0
    %4685 = vmatprep.subr.mxu0 0.0
    %4686 = vmatpush1.msra.mxu0 0.0
    %4687 = vmatprep.subr.mxu0 0.0
    %4688 = vmatpush1.msra.mxu0 0.0
    %4689 = vmatprep.subr.mxu0 0.0
    %4690 = vmatpush1.msra.mxu0 0.0
    %4691 = vmatprep.subr.mxu0 0.0
    %4692 = vmatpush1.msra.mxu0 0.0
    %4693 = vmatprep.subr.mxu0 0.0
    %4694 = vmatpush1.msra.mxu0 0.0
    %4695 = vmatprep.subr.mxu0 0.0
    %4696 = vmatpush1.msra.mxu0 0.0
    %4697 = vmatprep.subr.mxu0 0.0
    %4698 = vmatpush1.msra.mxu0 %v4676
    %4699 = vmatprep.subr.mxu0 0.0
    %4700 = vmatpush1.msra.mxu0 %v4675
    %4701 = vmatprep.subr.mxu0 0.0
    %4702 = vmatpush1.msra.mxu0 %v4674
    %4703 = vmatprep.subr.mxu0 0.0
    %4704 = vmatpush1.msra.mxu0 %v4673
    %4705 = vmatprep.subr.mxu0 0.0
    %4706 = vmatpush1.msra.mxu0 %v4672
    %4707 = vmatprep.subr.mxu0 0.0
    %4708 = vmatpush1.msra.mxu0 %v4671
    %4709 = vmatprep.subr.mxu0 0.0
    %4710 = vmatpush1.msra.mxu0 %v4670
    %4711 = vmatprep.subr.mxu0 0.0
    %4712 = vmatpush1.msra.mxu0 %v4669
    %4713 = vmatprep.subr.mxu0 0.0
    %4714 = vmatpush2.msra.mxu0 0.0
    %4715 = vmatprep.subr.mxu0 0.0
    %4716 = vmatpush2.msra.mxu0 0.0
    %4717 = vmatprep.subr.mxu0 0.0
    %4718 = vmatpush2.msra.mxu0 0.0
    %4719 = vmatprep.subr.mxu0 0.0
    %4720 = vmatpush2.msra.mxu0 0.0
    %4721 = vmatprep.subr.mxu0 0.0
    %4722 = vmatpush2.msra.mxu0 0.0
    %4723 = vmatprep.subr.mxu0 0.0
    %4724 = vmatpush2.msra.mxu0 0.0
    %4725 = vmatprep.subr.mxu0 0.0
    %4726 = vmatpush2.msra.mxu0 0.0
    %4727 = vmatprep.subr.mxu0 0.0
    %4728 = vmatpush2.msra.mxu0 0.0
    %4729 = vmatprep.subr.mxu0 0.0
    %4730 = vmatpush2.msra.mxu0 0.0
    %4731 = vmatprep.subr.mxu0 0.0
    %4732 = vmatpush2.msra.mxu0 0.0
    %4733 = vmatprep.subr.mxu0 0.0
    %4734 = vmatpush2.msra.mxu0 0.0
    %4735 = vmatprep.subr.mxu0 0.0
    %4736 = vmatpush2.msra.mxu0 0.0
    %4737 = vmatprep.subr.mxu0 0.0
    %4738 = vmatpush2.msra.mxu0 0.0
    %4739 = vmatprep.subr.mxu0 0.0
    %4740 = vmatpush2.msra.mxu0 0.0
    %4741 = vmatprep.subr.mxu0 0.0
    %4742 = vmatpush2.msra.mxu0 0.0
    %4743 = vmatprep.subr.mxu0 0.0
    %4744 = vmatpush2.msra.mxu0 0.0
    %4745 = vmatprep.mubr.f32.mxu0 0.0
    %4746 = vmatmul.mubr.f32.gmra.mxu0 %v4679
    %v4747 = vpop.f32.mrf.mxu0
    %v4748 = vadd.f32 %v4677, %v4747
    %v4749 = vpop.f32.mrf.mxu0
    %4750 = vdwg.mxu0
    %v4751 = vmax.f32 %v4748, 0.0
    %v4752 = vld [vmem:[%s9] sm:$0xff]
    %v4753 = vld [vmem:[%s9 + $0x8] sm:$0xff]
    %v4754 = vld [vmem:[%s9 + $0x10] sm:$0xff]
    %v4755 = vld [vmem:[%s9 + $0x18] sm:$0xff]
    %v4756 = vld [vmem:[%s10] sm:$0x1]
    %v4758 = vsel %vm2372, %v4751, 0
    %4760 = vmatprep.subr.mxu0 0.0
    %4761 = vmatpush1.msra.mxu0 0.0
    %4762 = vmatprep.subr.mxu0 0.0
    %4763 = vmatpush1.msra.mxu0 0.0
    %4764 = vmatprep.subr.mxu0 0.0
    %4765 = vmatpush1.msra.mxu0 0.0
    %4766 = vmatprep.subr.mxu0 0.0
    %4767 = vmatpush1.msra.mxu0 0.0
    %4768 = vmatprep.subr.mxu0 0.0
    %4769 = vmatpush1.msra.mxu0 0.0
    %4770 = vmatprep.subr.mxu0 0.0
    %4771 = vmatpush1.msra.mxu0 0.0
    %4772 = vmatprep.subr.mxu0 0.0
    %4773 = vmatpush1.msra.mxu0 0.0
    %4774 = vmatprep.subr.mxu0 0.0
    %4775 = vmatpush1.msra.mxu0 0.0
    %4776 = vmatprep.subr.mxu0 0.0
    %4777 = vmatpush1.msra.mxu0 0.0
    %4778 = vmatprep.subr.mxu0 0.0
    %4779 = vmatpush1.msra.mxu0 0.0
    %4780 = vmatprep.subr.mxu0 0.0
    %4781 = vmatpush1.msra.mxu0 0.0
    %4782 = vmatprep.subr.mxu0 0.0
    %4783 = vmatpush1.msra.mxu0 0.0
    %4784 = vmatprep.subr.mxu0 0.0
    %4785 = vmatpush1.msra.mxu0 %v4755
    %4786 = vmatprep.subr.mxu0 0.0
    %4787 = vmatpush1.msra.mxu0 %v4754
    %4788 = vmatprep.subr.mxu0 0.0
    %4789 = vmatpush1.msra.mxu0 %v4753
    %4790 = vmatprep.subr.mxu0 0.0
    %4791 = vmatpush1.msra.mxu0 %v4752
    %4792 = vmatprep.subr.mxu0 0.0
    %4793 = vmatpush2.msra.mxu0 0.0
    %4794 = vmatprep.subr.mxu0 0.0
    %4795 = vmatpush2.msra.mxu0 0.0
    %4796 = vmatprep.subr.mxu0 0.0
    %4797 = vmatpush2.msra.mxu0 0.0
    %4798 = vmatprep.subr.mxu0 0.0
    %4799 = vmatpush2.msra.mxu0 0.0
    %4800 = vmatprep.subr.mxu0 0.0
    %4801 = vmatpush2.msra.mxu0 0.0
    %4802 = vmatprep.subr.mxu0 0.0
    %4803 = vmatpush2.msra.mxu0 0.0
    %4804 = vmatprep.subr.mxu0 0.0
    %4805 = vmatpush2.msra.mxu0 0.0
    %4806 = vmatprep.subr.mxu0 0.0
    %4807 = vmatpush2.msra.mxu0 0.0
    %4808 = vmatprep.subr.mxu0 0.0
    %4809 = vmatpush2.msra.mxu0 0.0
    %4810 = vmatprep.subr.mxu0 0.0
    %4811 = vmatpush2.msra.mxu0 0.0
    %4812 = vmatprep.subr.mxu0 0.0
    %4813 = vmatpush2.msra.mxu0 0.0
    %4814 = vmatprep.subr.mxu0 0.0
    %4815 = vmatpush2.msra.mxu0 0.0
    %4816 = vmatprep.subr.mxu0 0.0
    %4817 = vmatpush2.msra.mxu0 0.0
    %4818 = vmatprep.subr.mxu0 0.0
    %4819 = vmatpush2.msra.mxu0 0.0
    %4820 = vmatprep.subr.mxu0 0.0
    %4821 = vmatpush2.msra.mxu0 0.0
    %4822 = vmatprep.subr.mxu0 0.0
    %4823 = vmatpush2.msra.mxu0 0.0
    %4824 = vmatprep.mubr.f32.mxu0 0.0
    %4825 = vmatmul.mubr.f32.gmra.mxu0 %v4758
    %v4826 = vpop.f32.mrf.mxu0
    %v4827 = vadd.f32 %v4756, %v4826
    %v4828 = vpop.f32.mrf.mxu0
    %4829 = vdwg.mxu0
    %v4830 = vsub.f32 0.0, %v4827
    %v4831 = vmul.f32 %v4830, 1.442695
    %v4832 = vpow.pop %v4831
    %v4833 = vadd.f32 %v4832, 1.0
    %v4834 = vrcp.pop %v4833
    %v4835 = vmul.f32 1.0, %v4834
    %v4836 = vld [vmem:[%s11] sm:$0x1]
    %v4837 = vmul.f32 %v4835, %v4836
    %4838 = vst.msk [vmem:[%s12 + $0x1] sm:$0x1] %vm2454, %v4837
    // Predicated region
    $region54: #{a_call__.1} parent=1 // pred_check
      _
    $region55: #{a_call__.1} parent=1 // pred_check_branch
      %4840 = sbr.rel (0) target = $region57
    $region56: #{a_call__.1} parent=1 // pred_region
      _
    $region57: #{a_call__.1} parent=1 // pred_fallthru
      _
    // Predicated region
    $region58: #{a_call__.1} parent=1 // pred_check
      _
    $region59: #{a_call__.1} parent=1 // pred_check_branch
      %4842 = sbr.rel (0) target = $region61
    $region60: #{a_call__.1} parent=1 // pred_region
      _
    $region61: #{a_call__.1} parent=1 // pred_fallthru
      _
    %4843 = vsyncpa [#allocation4], 1

</llo_original>
